<compile_context>
chip_gen: v7x
topology: tpu7x:2x2x1
jax: 0.10.0
libtpu: 0.0.40
codegen_flags: <defaults>
</compile_context>

<pallas_src>
import functools

import jax
import jax.numpy as jnp
from jax.experimental import pallas as pl
from jax.experimental.pallas import tpu as pltpu

BN_EPS = 1e-5
CPAD = 128                      # lane-dense channel padding for conv outputs
VMEM_LIMIT = 32 * 1024 * 1024   # explicit scoped-VMEM budget (safe on v5e/v6e/v7x)


def _pick_row_tile(total, cap):
    """Largest divisor of `total` <= cap (multiple of 8 where possible)."""
    if total <= cap:
        return total
    for d in range(cap, 0, -1):
        if total % d == 0 and d % 8 == 0:
            return d
    return total


# --------------------- MaxPool2d(kernel=2, stride=2), NHWC ---------------------
def _maxpool_kernel(x_ref, o_ref, *, c):
    # x_ref: (TR, 2, W2, 2*C) -- (row-pair, pooled-W, [w-pair x channel]) view.
    a = x_ref[:, 0, :, :]
    b = x_ref[:, 1, :, :]
    m = jnp.maximum(a, b)                                   # max over H pair
    # max over W pair = max of the two C-wide lane halves
    o_ref[...] = jnp.maximum(m[:, :, :c], m[:, :, c:]).astype(o_ref.dtype)


def max_pool_2x2(x):
    """x: (N, H, W, C) f32 -> (N, H//2, W//2, C) bf16.  Single pass over x."""
    N, H, W, C = x.shape
    H2, W2 = H // 2, W // 2
    # Free row-major reinterpretation: (N,H,W,C) -> (N*H2, 2, W2, 2*C).
    xv = x.reshape(N * H2, 2, W2, 2 * C)
    R = N * H2
    TR = _pick_row_tile(R, 256)
    out = pl.pallas_call(
        functools.partial(_maxpool_kernel, c=C),
        grid=(R // TR,),
        in_specs=[pl.BlockSpec((TR, 2, W2, 2 * C), lambda i: (i, 0, 0, 0))],
        out_specs=pl.BlockSpec((TR, W2, C), lambda i: (i, 0, 0)),
        out_shape=jax.ShapeDtypeStruct((R, W2, C), jnp.bfloat16),
        compiler_params=pltpu.CompilerParams(
            dimension_semantics=("parallel",),
            vmem_limit_bytes=VMEM_LIMIT),
    )(xv)
    return out.reshape(N, H2, W2, C)


# ---------- Conv2d(3x3, valid) + BatchNorm(training) + ReLU, two-pass ----------
def _conv_stats_kernel(x0_ref, x1_ref, x2_ref, w_ref, y_ref, sum_ref, ssq_ref,
                       *, wo, cpad):
    # x{d}_ref: (1, 1, Wi, Cx) bf16 input rows ho+d ; w_ref: (9, Cx, cpad) bf16
    # y_ref: (1, 1, wo, cpad) f32 ; sum/ssq_ref: (1, cpad) f32 accumulators.
    @pl.when((pl.program_id(0) == 0) & (pl.program_id(1) == 0))
    def _init():
        sum_ref[...] = jnp.zeros_like(sum_ref)
        ssq_ref[...] = jnp.zeros_like(ssq_ref)

    rows = (x0_ref[0, 0, :, :], x1_ref[0, 0, :, :], x2_ref[0, 0, :, :])
    acc = jnp.zeros((wo, cpad), jnp.float32)
    for dh in range(3):
        row = rows[dh]
        for dw in range(3):
            acc = acc + jnp.dot(row[dw:dw + wo, :], w_ref[dh * 3 + dw, :, :],
                                preferred_element_type=jnp.float32)
    y_ref[0, 0, :, :] = acc
    # Training-mode BatchNorm statistics (biased), accumulated across the grid.
    sum_ref[...] += jnp.sum(acc, axis=0, keepdims=True)
    ssq_ref[...] += jnp.sum(acc * acc, axis=0, keepdims=True)


def _bn_relu_kernel(y_ref, scale_ref, shift_ref, o_ref):
    o_ref[...] = jnp.maximum(
        y_ref[...] * scale_ref[...] + shift_ref[...], 0.0).astype(o_ref.dtype)


def _prep_weight(w, cin_pad, cout_pad):
    """PyTorch OIHW (Cout, Cin, 3, 3) -> per-tap (9, cin_pad, cout_pad) bf16."""
    cout, cin = w.shape[0], w.shape[1]
    wt = jnp.transpose(w, (2, 3, 1, 0)).reshape(9, cin, cout)
    wt = jnp.pad(wt, ((0, 0), (0, cin_pad - cin), (0, cout_pad - cout)))
    return wt.astype(jnp.bfloat16)


def conv_bn_relu(x, weight, gamma, beta):
    """x: (N, Hi, Wi, Cx) bf16 channels-last (Cx may already be lane-padded);
    weight: (Cout, Cin, 3, 3) PyTorch OIHW.  Returns (N, Ho, Wo, CPAD) bf16.
    Conv bias is intentionally omitted: a per-channel constant is exactly
    cancelled by the training-mode BatchNorm that follows."""
    N, Hi, Wi, Cx = x.shape
    Cout = weight.shape[0]
    Ho, Wo = Hi - 2, Wi - 2
    w_taps = _prep_weight(weight, Cx, CPAD)

    # Pass 1: tap-accumulated conv GEMM (bf16 MXU, f32 accumulate) fused with
    # global per-channel sum / sum-of-squares (revisited accumulator outputs).
    y, s, ssq = pl.pallas_call(
        functools.partial(_conv_stats_kernel, wo=Wo, cpad=CPAD),
        grid=(N, Ho),
        in_specs=[
            pl.BlockSpec((1, 1, Wi, Cx), lambda n, h: (n, h, 0, 0)),
            pl.BlockSpec((1, 1, Wi, Cx), lambda n, h: (n, h + 1, 0, 0)),
            pl.BlockSpec((1, 1, Wi, Cx), lambda n, h: (n, h + 2, 0, 0)),
            pl.BlockSpec((9, Cx, CPAD), lambda n, h: (0, 0, 0)),
        ],
        out_specs=[
            pl.BlockSpec((1, 1, Wo, CPAD), lambda n, h: (n, h, 0, 0)),
            pl.BlockSpec((1, CPAD), lambda n, h: (0, 0)),
            pl.BlockSpec((1, CPAD), lambda n, h: (0, 0)),
        ],
        out_shape=[
            jax.ShapeDtypeStruct((N, Ho, Wo, CPAD), jnp.float32),
            jax.ShapeDtypeStruct((1, CPAD), jnp.float32),
            jax.ShapeDtypeStruct((1, CPAD), jnp.float32),
        ],
        compiler_params=pltpu.CompilerParams(
            # The global-stats accumulators are revisited on every grid step, so
            # both axes must be "arbitrary".
            # TODO(synk): on v7x, split the stats reduction into its own kernel
            # so the batch axis can be "parallel" across the two TensorCores.
            dimension_semantics=("arbitrary", "arbitrary"),
            vmem_limit_bytes=VMEM_LIMIT),
    )(x, x, x, w_taps)

    # Tiny per-channel math: fold batch stats + BN affine into scale/shift.
    cnt = jnp.float32(N * Ho * Wo)
    mean = s / cnt
    var = jnp.maximum(ssq / cnt - mean * mean, 0.0)
    rstd = jax.lax.rsqrt(var + BN_EPS)
    gamma_p = jnp.pad(gamma, (0, CPAD - Cout)).reshape(1, CPAD)
    beta_p = jnp.pad(beta, (0, CPAD - Cout)).reshape(1, CPAD)
    scale = gamma_p * rstd          # zero on padded channels -> output stays 0
    shift = beta_p - mean * scale

    # Pass 2: normalize + ReLU over lane-dense (TM, 128) tiles; bf16 output
    # feeds the next conv's MXU directly.
    M = N * Ho * Wo
    TM = _pick_row_tile(M, 1024)
    act = pl.pallas_call(
        _bn_relu_kernel,
        grid=(M // TM,),
        in_specs=[
            pl.BlockSpec((TM, CPAD), lambda i: (i, 0)),
            pl.BlockSpec((1, CPAD), lambda i: (0, 0)),
            pl.BlockSpec((1, CPAD), lambda i: (0, 0)),
        ],
        out_specs=pl.BlockSpec((TM, CPAD), lambda i: (i, 0)),
        out_shape=jax.ShapeDtypeStruct((M, CPAD), jnp.bfloat16),
        compiler_params=pltpu.CompilerParams(
            dimension_semantics=("parallel",),
            vmem_limit_bytes=VMEM_LIMIT),
    )(y.reshape(M, CPAD), scale, shift)
    return act.reshape(N, Ho, Wo, CPAD)


# --------------------------------- DownSample ---------------------------------
def downsample_forward(x, params):
    cout = params["w1"].shape[0]
    x = jnp.transpose(x, (0, 2, 3, 1))                 # NCHW -> NHWC (boundary)
    x = max_pool_2x2(x)                                # bf16 NHWC
    x = conv_bn_relu(x, params["w1"], params["g1"], params["beta1"])
    x = conv_bn_relu(x, params["w2"], params["g2"], params["beta2"])
    x = x[..., :cout].astype(jnp.float32)              # drop lane padding
    return jnp.transpose(x, (0, 3, 1, 2))              # back to NCHW


def init_params(key, in_channels, out_channels):
    k1, k2, k3, k4, k5, k6 = jax.random.split(key, 6)
    return {
        "w1": 0.1 * jax.random.normal(k1, (out_channels, in_channels, 3, 3), jnp.float32),
        "b1": 0.1 * jax.random.normal(k2, (out_channels,), jnp.float32),
        "w2": 0.1 * jax.random.normal(k3, (out_channels, out_channels, 3, 3), jnp.float32),
        "b2": 0.1 * jax.random.normal(k4, (out_channels,), jnp.float32),
        # Conv biases above exist to mirror nn.Conv2d but are mathematically
        # cancelled by training-mode BatchNorm, so the kernels skip them.
        "g1": 1.0 + 0.05 * jax.random.normal(k5, (out_channels,), jnp.float32),
        "beta1": 0.05 * jax.random.normal(k6, (out_channels,), jnp.float32),
        "g2": jnp.ones((out_channels,), jnp.float32),
        "beta2": jnp.zeros((out_channels,), jnp.float32),
    }


# ------------------ pure-JAX reference (correctness check) ------------------
def reference_forward(x, params):
    def pool(x):
        N, C, H, W = x.shape
        return jnp.max(x.reshape(N, C, H // 2, 2, W // 2, 2), axis=(3, 5))

    def cbr(x, w, b, g, beta):
        y = jax.lax.conv_general_dilated(
            x, w, window_strides=(1, 1), padding="VALID",
            dimension_numbers=("NCHW", "OIHW", "NCHW"))
        y = y + b[None, :, None, None]
        mu = jnp.mean(y, axis=(0, 2, 3), keepdims=True)
        var = jnp.mean(jnp.square(y - mu), axis=(0, 2, 3), keepdims=True)
        y = (y - mu) / jnp.sqrt(var + BN_EPS)
        y = y * g[None, :, None, None] + beta[None, :, None, None]
        return jnp.maximum(y, 0.0)

    x = pool(x)
    x = cbr(x, params["w1"], params["b1"], params["g1"], params["beta1"])
    x = cbr(x, params["w2"], params["b2"], params["g2"], params["beta2"])
    return x


if __name__ == "__main__":
    key = jax.random.PRNGKey(0)
    kx, kp = jax.random.split(key)
    in_channels, out_channels = 4, 8
    x = jax.random.normal(kx, (2, in_channels, 16, 16), jnp.float32)
    params = init_params(kp, in_channels, out_channels)

    out = jax.block_until_ready(jax.jit(downsample_forward)(x, params))
    ref = jax.block_until_ready(reference_forward(x, params))

    assert out.shape == (2, out_channels, 4, 4), out.shape
    # bf16 MXU operands + bf16 inter-layer activations -> mixed-precision
    # tolerance vs the f32 reference.
    assert jnp.allclose(out, ref, rtol=3e-2, atol=3e-2), (
        float(jnp.max(jnp.abs(out - ref))))

    print("KERNEL_OK")
</pallas_src>

<mosaic_0001>
module attributes {stable_mosaic.version = 11 : i64} {
  func.func @_maxpool_kernel(%arg0: i32, %arg1: memref<16x2x8x8xf32, #tpu.memory_space<vmem>>, %arg2: memref<16x8x4xbf16, #tpu.memory_space<vmem>>) attributes {dimension_semantics = [#tpu.dimension_semantics<parallel>], iteration_bounds = array<i64: 1>, scalar_prefetch = 0 : i64, scratch_operands = 0 : i64, tpu.core_type = #tpu.core_type<tc>, window_params = [{transform_indices = @transform_0, window_bounds = array<i64: 16, 2, 8, 8>}, {transform_indices = @transform_1, window_bounds = array<i64: 16, 8, 4>}]} {
    %c0 = arith.constant 0 : index
    %c0_0 = arith.constant 0 : index
    %c0_1 = arith.constant 0 : index
    %c0_2 = arith.constant 0 : index
    %0 = vector.load %arg1[%c0, %c0_0, %c0_1, %c0_2] : memref<16x2x8x8xf32, #tpu.memory_space<vmem>>, vector<16x1x8x8xf32>
    %1 = vector.shape_cast %0 : vector<16x1x8x8xf32> to vector<16x8x8xf32>
    %c0_3 = arith.constant 0 : index
    %c1 = arith.constant 1 : index
    %c0_4 = arith.constant 0 : index
    %c0_5 = arith.constant 0 : index
    %2 = vector.load %arg1[%c0_3, %c1, %c0_4, %c0_5] : memref<16x2x8x8xf32, #tpu.memory_space<vmem>>, vector<16x1x8x8xf32>
    %3 = vector.shape_cast %2 : vector<16x1x8x8xf32> to vector<16x8x8xf32>
    %4 = arith.maximumf %1, %3 : vector<16x8x8xf32>
    %5 = vector.extract_strided_slice %4 {offsets = [0, 0, 0], sizes = [16, 8, 4], strides = [1, 1, 1]} : vector<16x8x8xf32> to vector<16x8x4xf32>
    %6 = vector.extract_strided_slice %4 {offsets = [0, 0, 4], sizes = [16, 8, 4], strides = [1, 1, 1]} : vector<16x8x8xf32> to vector<16x8x4xf32>
    %7 = arith.maximumf %5, %6 : vector<16x8x4xf32>
    %8 = arith.truncf %7 : vector<16x8x4xf32> to vector<16x8x4xbf16>
    %c0_6 = arith.constant 0 : index
    %c0_7 = arith.constant 0 : index
    %c0_8 = arith.constant 0 : index
    %9 = vector.load %arg2[%c0_6, %c0_7, %c0_8] : memref<16x8x4xbf16, #tpu.memory_space<vmem>>, vector<16x8x4xbf16>
    tpu.vector_store %arg2[%c0_6, %c0_7, %c0_8], %8 {strides = array<i32>} : memref<16x8x4xbf16, #tpu.memory_space<vmem>>, vector<16x8x4xbf16>,
    return
  }
  func.func @transform_0(%arg0: i32) -> (i32, i32, i32, i32) {
    %c0_i32 = arith.constant 0 : i32
    %c0_i32_0 = arith.constant 0 : i32
    %c0_i32_1 = arith.constant 0 : i32
    %c0_i32_2 = arith.constant 0 : i32
    return %arg0, %c0_i32, %c0_i32_0, %c0_i32_1 : i32, i32, i32, i32
  }
  func.func @transform_1(%arg0: i32) -> (i32, i32, i32) {
    %c0_i32 = arith.constant 0 : i32
    %c0_i32_0 = arith.constant 0 : i32
    %c0_i32_1 = arith.constant 0 : i32
    return %arg0, %c0_i32, %c0_i32_0 : i32, i32, i32
  }
}

module attributes {stable_mosaic.version = 11 : i64} {
  func.func @_conv_stats_kernel(%arg0: i32, %arg1: i32, %arg2: memref<1x1x8x4xbf16, #tpu.memory_space<vmem>>, %arg3: memref<1x1x8x4xbf16, #tpu.memory_space<vmem>>, %arg4: memref<1x1x8x4xbf16, #tpu.memory_space<vmem>>, %arg5: memref<9x4x128xbf16, #tpu.memory_space<vmem>>, %arg6: memref<1x1x6x128xf32, #tpu.memory_space<vmem>>, %arg7: memref<1x128xf32, #tpu.memory_space<vmem>>, %arg8: memref<1x128xf32, #tpu.memory_space<vmem>>) attributes {dimension_semantics = [#tpu.dimension_semantics<arbitrary>, #tpu.dimension_semantics<arbitrary>], iteration_bounds = array<i64: 2, 6>, scalar_prefetch = 0 : i64, scratch_operands = 0 : i64, tpu.core_type = #tpu.core_type<tc>, window_params = [{transform_indices = @transform_0, window_bounds = array<i64: 1, 1, 8, 4>}, {transform_indices = @transform_1, window_bounds = array<i64: 1, 1, 8, 4>}, {transform_indices = @transform_2, window_bounds = array<i64: 1, 1, 8, 4>}, {pipeline_mode = #tpu.pipeline_mode<synchronous>, transform_indices = @transform_3, window_bounds = array<i64: 9, 4, 128>}, {transform_indices = @transform_4, window_bounds = array<i64: 1, 1, 6, 128>}, {pipeline_mode = #tpu.pipeline_mode<synchronous>, transform_indices = @transform_5, window_bounds = array<i64: 1, 128>}, {pipeline_mode = #tpu.pipeline_mode<synchronous>, transform_indices = @transform_6, window_bounds = array<i64: 1, 128>}]} {
    %c0_i32 = arith.constant 0 : i32
    %0 = arith.cmpi eq, %arg0, %c0_i32 : i32
    %c0_i32_0 = arith.constant 0 : i32
    %1 = arith.cmpi eq, %arg1, %c0_i32_0 : i32
    %2 = arith.andi %0, %1 : i1
    %3 = arith.extui %2 : i1 to i32
    %c0_i32_1 = arith.constant 0 : i32
    %4 = arith.cmpi ne, %3, %c0_i32_1 : i32
    scf.if %4 {
      %cst_55 = arith.constant 0.000000e+00 : f32
      %71 = vector.broadcast %cst_55 : f32 to vector<1x128xf32>
      %c0_56 = arith.constant 0 : index
      %c0_57 = arith.constant 0 : index
      %72 = vector.load %arg7[%c0_56, %c0_57] : memref<1x128xf32, #tpu.memory_space<vmem>>, vector<1x128xf32>
      tpu.vector_store %arg7[%c0_56, %c0_57], %71 {strides = array<i32>} : memref<1x128xf32, #tpu.memory_space<vmem>>, vector<1x128xf32>,
      %cst_58 = arith.constant 0.000000e+00 : f32
      %73 = vector.broadcast %cst_58 : f32 to vector<1x128xf32>
      %c0_59 = arith.constant 0 : index
      %c0_60 = arith.constant 0 : index
      %74 = vector.load %arg8[%c0_59, %c0_60] : memref<1x128xf32, #tpu.memory_space<vmem>>, vector<1x128xf32>
      tpu.vector_store %arg8[%c0_59, %c0_60], %73 {strides = array<i32>} : memref<1x128xf32, #tpu.memory_space<vmem>>, vector<1x128xf32>,
    } else {
    }
    %c0 = arith.constant 0 : index
    %c0_2 = arith.constant 0 : index
    %c0_3 = arith.constant 0 : index
    %c0_4 = arith.constant 0 : index
    %5 = vector.load %arg2[%c0, %c0_2, %c0_3, %c0_4] : memref<1x1x8x4xbf16, #tpu.memory_space<vmem>>, vector<1x1x8x4xbf16>
    %6 = vector.shape_cast %5 : vector<1x1x8x4xbf16> to vector<8x4xbf16>
    %c0_5 = arith.constant 0 : index
    %c0_6 = arith.constant 0 : index
    %c0_7 = arith.constant 0 : index
    %c0_8 = arith.constant 0 : index
    %7 = vector.load %arg3[%c0_5, %c0_6, %c0_7, %c0_8] : memref<1x1x8x4xbf16, #tpu.memory_space<vmem>>, vector<1x1x8x4xbf16>
    %8 = vector.shape_cast %7 : vector<1x1x8x4xbf16> to vector<8x4xbf16>
    %c0_9 = arith.constant 0 : index
    %c0_10 = arith.constant 0 : index
    %c0_11 = arith.constant 0 : index
    %c0_12 = arith.constant 0 : index
    %9 = vector.load %arg4[%c0_9, %c0_10, %c0_11, %c0_12] : memref<1x1x8x4xbf16, #tpu.memory_space<vmem>>, vector<1x1x8x4xbf16>
    %10 = vector.shape_cast %9 : vector<1x1x8x4xbf16> to vector<8x4xbf16>
    %cst = arith.constant 0.000000e+00 : f32
    %11 = vector.broadcast %cst : f32 to vector<6x128xf32>
    %12 = vector.extract_strided_slice %6 {offsets = [0, 0], sizes = [6, 4], strides = [1, 1]} : vector<8x4xbf16> to vector<6x4xbf16>
    %c0_13 = arith.constant 0 : index
    %c0_14 = arith.constant 0 : index
    %c0_15 = arith.constant 0 : index
    %13 = vector.load %arg5[%c0_13, %c0_14, %c0_15] : memref<9x4x128xbf16, #tpu.memory_space<vmem>>, vector<1x4x128xbf16>
    %14 = vector.shape_cast %13 : vector<1x4x128xbf16> to vector<4x128xbf16>
    %cst_16 = arith.constant dense<0.000000e+00> : vector<6x128xf32>
    %15 = tpu.matmul %12, %14, %cst_16 {dimension_numbers = #tpu.dot_dimension_numbers<[1], [0], [0], [1], [0, 0, 1, 1], [], []>} : vector<6x4xbf16>, vector<4x128xbf16>, vector<6x128xf32> -> vector<6x128xf32>
    %16 = arith.addf %11, %15 : vector<6x128xf32>
    %17 = vector.extract_strided_slice %6 {offsets = [1, 0], sizes = [6, 4], strides = [1, 1]} : vector<8x4xbf16> to vector<6x4xbf16>
    %c1 = arith.constant 1 : index
    %c0_17 = arith.constant 0 : index
    %c0_18 = arith.constant 0 : index
    %18 = vector.load %arg5[%c1, %c0_17, %c0_18] : memref<9x4x128xbf16, #tpu.memory_space<vmem>>, vector<1x4x128xbf16>
    %19 = vector.shape_cast %18 : vector<1x4x128xbf16> to vector<4x128xbf16>
    %cst_19 = arith.constant dense<0.000000e+00> : vector<6x128xf32>
    %20 = tpu.matmul %17, %19, %cst_19 {dimension_numbers = #tpu.dot_dimension_numbers<[1], [0], [0], [1], [0, 0, 1, 1], [], []>} : vector<6x4xbf16>, vector<4x128xbf16>, vector<6x128xf32> -> vector<6x128xf32>
    %21 = arith.addf %16, %20 : vector<6x128xf32>
    %22 = vector.extract_strided_slice %6 {offsets = [2, 0], sizes = [6, 4], strides = [1, 1]} : vector<8x4xbf16> to vector<6x4xbf16>
    %c2 = arith.constant 2 : index
    %c0_20 = arith.constant 0 : index
    %c0_21 = arith.constant 0 : index
    %23 = vector.load %arg5[%c2, %c0_20, %c0_21] : memref<9x4x128xbf16, #tpu.memory_space<vmem>>, vector<1x4x128xbf16>
    %24 = vector.shape_cast %23 : vector<1x4x128xbf16> to vector<4x128xbf16>
    %cst_22 = arith.constant dense<0.000000e+00> : vector<6x128xf32>
    %25 = tpu.matmul %22, %24, %cst_22 {dimension_numbers = #tpu.dot_dimension_numbers<[1], [0], [0], [1], [0, 0, 1, 1], [], []>} : vector<6x4xbf16>, vector<4x128xbf16>, vector<6x128xf32> -> vector<6x128xf32>
    %26 = arith.addf %21, %25 : vector<6x128xf32>
    %27 = vector.extract_strided_slice %8 {offsets = [0, 0], sizes = [6, 4], strides = [1, 1]} : vector<8x4xbf16> to vector<6x4xbf16>
    %c3 = arith.constant 3 : index
    %c0_23 = arith.constant 0 : index
    %c0_24 = arith.constant 0 : index
    %28 = vector.load %arg5[%c3, %c0_23, %c0_24] : memref<9x4x128xbf16, #tpu.memory_space<vmem>>, vector<1x4x128xbf16>
    %29 = vector.shape_cast %28 : vector<1x4x128xbf16> to vector<4x128xbf16>
    %cst_25 = arith.constant dense<0.000000e+00> : vector<6x128xf32>
    %30 = tpu.matmul %27, %29, %cst_25 {dimension_numbers = #tpu.dot_dimension_numbers<[1], [0], [0], [1], [0, 0, 1, 1], [], []>} : vector<6x4xbf16>, vector<4x128xbf16>, vector<6x128xf32> -> vector<6x128xf32>
    %31 = arith.addf %26, %30 : vector<6x128xf32>
    %32 = vector.extract_strided_slice %8 {offsets = [1, 0], sizes = [6, 4], strides = [1, 1]} : vector<8x4xbf16> to vector<6x4xbf16>
    %c4 = arith.constant 4 : index
    %c0_26 = arith.constant 0 : index
    %c0_27 = arith.constant 0 : index
    %33 = vector.load %arg5[%c4, %c0_26, %c0_27] : memref<9x4x128xbf16, #tpu.memory_space<vmem>>, vector<1x4x128xbf16>
    %34 = vector.shape_cast %33 : vector<1x4x128xbf16> to vector<4x128xbf16>
    %cst_28 = arith.constant dense<0.000000e+00> : vector<6x128xf32>
    %35 = tpu.matmul %32, %34, %cst_28 {dimension_numbers = #tpu.dot_dimension_numbers<[1], [0], [0], [1], [0, 0, 1, 1], [], []>} : vector<6x4xbf16>, vector<4x128xbf16>, vector<6x128xf32> -> vector<6x128xf32>
    %36 = arith.addf %31, %35 : vector<6x128xf32>
    %37 = vector.extract_strided_slice %8 {offsets = [2, 0], sizes = [6, 4], strides = [1, 1]} : vector<8x4xbf16> to vector<6x4xbf16>
    %c5 = arith.constant 5 : index
    %c0_29 = arith.constant 0 : index
    %c0_30 = arith.constant 0 : index
    %38 = vector.load %arg5[%c5, %c0_29, %c0_30] : memref<9x4x128xbf16, #tpu.memory_space<vmem>>, vector<1x4x128xbf16>
    %39 = vector.shape_cast %38 : vector<1x4x128xbf16> to vector<4x128xbf16>
    %cst_31 = arith.constant dense<0.000000e+00> : vector<6x128xf32>
    %40 = tpu.matmul %37, %39, %cst_31 {dimension_numbers = #tpu.dot_dimension_numbers<[1], [0], [0], [1], [0, 0, 1, 1], [], []>} : vector<6x4xbf16>, vector<4x128xbf16>, vector<6x128xf32> -> vector<6x128xf32>
    %41 = arith.addf %36, %40 : vector<6x128xf32>
    %42 = vector.extract_strided_slice %10 {offsets = [0, 0], sizes = [6, 4], strides = [1, 1]} : vector<8x4xbf16> to vector<6x4xbf16>
    %c6 = arith.constant 6 : index
    %c0_32 = arith.constant 0 : index
    %c0_33 = arith.constant 0 : index
    %43 = vector.load %arg5[%c6, %c0_32, %c0_33] : memref<9x4x128xbf16, #tpu.memory_space<vmem>>, vector<1x4x128xbf16>
    %44 = vector.shape_cast %43 : vector<1x4x128xbf16> to vector<4x128xbf16>
    %cst_34 = arith.constant dense<0.000000e+00> : vector<6x128xf32>
    %45 = tpu.matmul %42, %44, %cst_34 {dimension_numbers = #tpu.dot_dimension_numbers<[1], [0], [0], [1], [0, 0, 1, 1], [], []>} : vector<6x4xbf16>, vector<4x128xbf16>, vector<6x128xf32> -> vector<6x128xf32>
    %46 = arith.addf %41, %45 : vector<6x128xf32>
    %47 = vector.extract_strided_slice %10 {offsets = [1, 0], sizes = [6, 4], strides = [1, 1]} : vector<8x4xbf16> to vector<6x4xbf16>
    %c7 = arith.constant 7 : index
    %c0_35 = arith.constant 0 : index
    %c0_36 = arith.constant 0 : index
    %48 = vector.load %arg5[%c7, %c0_35, %c0_36] : memref<9x4x128xbf16, #tpu.memory_space<vmem>>, vector<1x4x128xbf16>
    %49 = vector.shape_cast %48 : vector<1x4x128xbf16> to vector<4x128xbf16>
    %cst_37 = arith.constant dense<0.000000e+00> : vector<6x128xf32>
    %50 = tpu.matmul %47, %49, %cst_37 {dimension_numbers = #tpu.dot_dimension_numbers<[1], [0], [0], [1], [0, 0, 1, 1], [], []>} : vector<6x4xbf16>, vector<4x128xbf16>, vector<6x128xf32> -> vector<6x128xf32>
    %51 = arith.addf %46, %50 : vector<6x128xf32>
    %52 = vector.extract_strided_slice %10 {offsets = [2, 0], sizes = [6, 4], strides = [1, 1]} : vector<8x4xbf16> to vector<6x4xbf16>
    %c8 = arith.constant 8 : index
    %c0_38 = arith.constant 0 : index
    %c0_39 = arith.constant 0 : index
    %53 = vector.load %arg5[%c8, %c0_38, %c0_39] : memref<9x4x128xbf16, #tpu.memory_space<vmem>>, vector<1x4x128xbf16>
    %54 = vector.shape_cast %53 : vector<1x4x128xbf16> to vector<4x128xbf16>
    %cst_40 = arith.constant dense<0.000000e+00> : vector<6x128xf32>
    %55 = tpu.matmul %52, %54, %cst_40 {dimension_numbers = #tpu.dot_dimension_numbers<[1], [0], [0], [1], [0, 0, 1, 1], [], []>} : vector<6x4xbf16>, vector<4x128xbf16>, vector<6x128xf32> -> vector<6x128xf32>
    %56 = arith.addf %51, %55 : vector<6x128xf32>
    %c0_41 = arith.constant 0 : index
    %c0_42 = arith.constant 0 : index
    %c0_43 = arith.constant 0 : index
    %c0_44 = arith.constant 0 : index
    %57 = vector.load %arg6[%c0_41, %c0_42, %c0_43, %c0_44] : memref<1x1x6x128xf32, #tpu.memory_space<vmem>>, vector<1x1x6x128xf32>
    %58 = vector.shape_cast %57 : vector<1x1x6x128xf32> to vector<6x128xf32>
    %59 = vector.shape_cast %56 : vector<6x128xf32> to vector<1x1x6x128xf32>
    tpu.vector_store %arg6[%c0_41, %c0_42, %c0_43, %c0_44], %59 {strides = array<i32>} : memref<1x1x6x128xf32, #tpu.memory_space<vmem>>, vector<1x1x6x128xf32>,
    %c0_45 = arith.constant 0 : index
    %c0_46 = arith.constant 0 : index
    %60 = vector.load %arg7[%c0_45, %c0_46] : memref<1x128xf32, #tpu.memory_space<vmem>>, vector<1x128xf32>
    %cst_47 = arith.constant dense<0.000000e+00> : vector<128xf32>
    %61 = vector.multi_reduction <add>, %56, %cst_47 [0] : vector<6x128xf32> to vector<128xf32>
    %62 = vector.shape_cast %61 : vector<128xf32> to vector<1x128xf32>
    %63 = arith.addf %60, %62 : vector<1x128xf32>
    %c0_48 = arith.constant 0 : index
    %c0_49 = arith.constant 0 : index
    %64 = vector.load %arg7[%c0_48, %c0_49] : memref<1x128xf32, #tpu.memory_space<vmem>>, vector<1x128xf32>
    tpu.vector_store %arg7[%c0_48, %c0_49], %63 {strides = array<i32>} : memref<1x128xf32, #tpu.memory_space<vmem>>, vector<1x128xf32>,
    %c0_50 = arith.constant 0 : index
    %c0_51 = arith.constant 0 : index
    %65 = vector.load %arg8[%c0_50, %c0_51] : memref<1x128xf32, #tpu.memory_space<vmem>>, vector<1x128xf32>
    %66 = arith.mulf %56, %56 : vector<6x128xf32>
    %cst_52 = arith.constant dense<0.000000e+00> : vector<128xf32>
    %67 = vector.multi_reduction <add>, %66, %cst_52 [0] : vector<6x128xf32> to vector<128xf32>
    %68 = vector.shape_cast %67 : vector<128xf32> to vector<1x128xf32>
    %69 = arith.addf %65, %68 : vector<1x128xf32>
    %c0_53 = arith.constant 0 : index
    %c0_54 = arith.constant 0 : index
    %70 = vector.load %arg8[%c0_53, %c0_54] : memref<1x128xf32, #tpu.memory_space<vmem>>, vector<1x128xf32>
    tpu.vector_store %arg8[%c0_53, %c0_54], %69 {strides = array<i32>} : memref<1x128xf32, #tpu.memory_space<vmem>>, vector<1x128xf32>,
    return
  }
  func.func @transform_0(%arg0: i32, %arg1: i32) -> (i32, i32, i32, i32) {
    %c0_i32 = arith.constant 0 : i32
    %c0_i32_0 = arith.constant 0 : i32
    %c0_i32_1 = arith.constant 0 : i32
    return %arg0, %arg1, %c0_i32, %c0_i32_0 : i32, i32, i32, i32
  }
  func.func @transform_1(%arg0: i32, %arg1: i32) -> (i32, i32, i32, i32) {
    %c1_i32 = arith.constant 1 : i32
    %0 = arith.addi %arg1, %c1_i32 : i32
    %c0_i32 = arith.constant 0 : i32
    %c0_i32_0 = arith.constant 0 : i32
    %c0_i32_1 = arith.constant 0 : i32
    return %arg0, %0, %c0_i32, %c0_i32_0 : i32, i32, i32, i32
  }
  func.func @transform_2(%arg0: i32, %arg1: i32) -> (i32, i32, i32, i32) {
    %c2_i32 = arith.constant 2 : i32
    %0 = arith.addi %arg1, %c2_i32 : i32
    %c0_i32 = arith.constant 0 : i32
    %c0_i32_0 = arith.constant 0 : i32
    %c0_i32_1 = arith.constant 0 : i32
    return %arg0, %0, %c0_i32, %c0_i32_0 : i32, i32, i32, i32
  }
  func.func @transform_3(%arg0: i32, %arg1: i32) -> (i32, i32, i32) {
    %c0_i32 = arith.constant 0 : i32
    %c0_i32_0 = arith.constant 0 : i32
    %c0_i32_1 = arith.constant 0 : i32
    %c0_i32_2 = arith.constant 0 : i32
    return %c0_i32, %c0_i32_0, %c0_i32_1 : i32, i32, i32
  }
  func.func @transform_4(%arg0: i32, %arg1: i32) -> (i32, i32, i32, i32) {
    %c0_i32 = arith.constant 0 : i32
    %c0_i32_0 = arith.constant 0 : i32
    %c0_i32_1 = arith.constant 0 : i32
    return %arg0, %arg1, %c0_i32, %c0_i32_0 : i32, i32, i32, i32
  }
  func.func @transform_5(%arg0: i32, %arg1: i32) -> (i32, i32) {
    %c0_i32 = arith.constant 0 : i32
    %c0_i32_0 = arith.constant 0 : i32
    %c0_i32_1 = arith.constant 0 : i32
    return %c0_i32, %c0_i32_0 : i32, i32
  }
  func.func @transform_6(%arg0: i32, %arg1: i32) -> (i32, i32) {
    %c0_i32 = arith.constant 0 : i32
    %c0_i32_0 = arith.constant 0 : i32
    %c0_i32_1 = arith.constant 0 : i32
    return %c0_i32, %c0_i32_0 : i32, i32
  }
}

module attributes {stable_mosaic.version = 11 : i64} {
  func.func @_bn_relu_kernel(%arg0: i32, %arg1: memref<72x128xf32, #tpu.memory_space<vmem>>, %arg2: memref<1x128xf32, #tpu.memory_space<vmem>>, %arg3: memref<1x128xf32, #tpu.memory_space<vmem>>, %arg4: memref<72x128xbf16, #tpu.memory_space<vmem>>) attributes {dimension_semantics = [#tpu.dimension_semantics<parallel>], iteration_bounds = array<i64: 1>, scalar_prefetch = 0 : i64, scratch_operands = 0 : i64, tpu.core_type = #tpu.core_type<tc>, window_params = [{transform_indices = @transform_0, window_bounds = array<i64: 72, 128>}, {pipeline_mode = #tpu.pipeline_mode<synchronous>, transform_indices = @transform_1, window_bounds = array<i64: 1, 128>}, {pipeline_mode = #tpu.pipeline_mode<synchronous>, transform_indices = @transform_2, window_bounds = array<i64: 1, 128>}, {transform_indices = @transform_3, window_bounds = array<i64: 72, 128>}]} {
    %c0 = arith.constant 0 : index
    %c0_0 = arith.constant 0 : index
    %0 = vector.load %arg1[%c0, %c0_0] : memref<72x128xf32, #tpu.memory_space<vmem>>, vector<72x128xf32>
    %c0_1 = arith.constant 0 : index
    %c0_2 = arith.constant 0 : index
    %1 = vector.load %arg2[%c0_1, %c0_2] : memref<1x128xf32, #tpu.memory_space<vmem>>, vector<1x128xf32>
    %2 = vector.broadcast %1 : vector<1x128xf32> to vector<72x128xf32>
    %3 = arith.mulf %0, %2 : vector<72x128xf32>
    %c0_3 = arith.constant 0 : index
    %c0_4 = arith.constant 0 : index
    %4 = vector.load %arg3[%c0_3, %c0_4] : memref<1x128xf32, #tpu.memory_space<vmem>>, vector<1x128xf32>
    %5 = vector.broadcast %4 : vector<1x128xf32> to vector<72x128xf32>
    %6 = arith.addf %3, %5 : vector<72x128xf32>
    %cst = arith.constant 0.000000e+00 : f32
    %7 = vector.broadcast %cst : f32 to vector<72x128xf32>
    %8 = arith.maximumf %6, %7 : vector<72x128xf32>
    %9 = arith.truncf %8 : vector<72x128xf32> to vector<72x128xbf16>
    %c0_5 = arith.constant 0 : index
    %c0_6 = arith.constant 0 : index
    %10 = vector.load %arg4[%c0_5, %c0_6] : memref<72x128xbf16, #tpu.memory_space<vmem>>, vector<72x128xbf16>
    tpu.vector_store %arg4[%c0_5, %c0_6], %9 {strides = array<i32>} : memref<72x128xbf16, #tpu.memory_space<vmem>>, vector<72x128xbf16>,
    return
  }
  func.func @transform_0(%arg0: i32) -> (i32, i32) {
    %c0_i32 = arith.constant 0 : i32
    %c0_i32_0 = arith.constant 0 : i32
    return %arg0, %c0_i32 : i32, i32
  }
  func.func @transform_1(%arg0: i32) -> (i32, i32) {
    %c0_i32 = arith.constant 0 : i32
    %c0_i32_0 = arith.constant 0 : i32
    %c0_i32_1 = arith.constant 0 : i32
    return %c0_i32, %c0_i32_0 : i32, i32
  }
  func.func @transform_2(%arg0: i32) -> (i32, i32) {
    %c0_i32 = arith.constant 0 : i32
    %c0_i32_0 = arith.constant 0 : i32
    %c0_i32_1 = arith.constant 0 : i32
    return %c0_i32, %c0_i32_0 : i32, i32
  }
  func.func @transform_3(%arg0: i32) -> (i32, i32) {
    %c0_i32 = arith.constant 0 : i32
    %c0_i32_0 = arith.constant 0 : i32
    return %arg0, %c0_i32 : i32, i32
  }
}

module attributes {stable_mosaic.version = 11 : i64} {
  func.func @_conv_stats_kernel(%arg0: i32, %arg1: i32, %arg2: memref<1x1x6x128xbf16, #tpu.memory_space<vmem>>, %arg3: memref<1x1x6x128xbf16, #tpu.memory_space<vmem>>, %arg4: memref<1x1x6x128xbf16, #tpu.memory_space<vmem>>, %arg5: memref<9x128x128xbf16, #tpu.memory_space<vmem>>, %arg6: memref<1x1x4x128xf32, #tpu.memory_space<vmem>>, %arg7: memref<1x128xf32, #tpu.memory_space<vmem>>, %arg8: memref<1x128xf32, #tpu.memory_space<vmem>>) attributes {dimension_semantics = [#tpu.dimension_semantics<arbitrary>, #tpu.dimension_semantics<arbitrary>], iteration_bounds = array<i64: 2, 4>, scalar_prefetch = 0 : i64, scratch_operands = 0 : i64, tpu.core_type = #tpu.core_type<tc>, window_params = [{transform_indices = @transform_0, window_bounds = array<i64: 1, 1, 6, 128>}, {transform_indices = @transform_1, window_bounds = array<i64: 1, 1, 6, 128>}, {transform_indices = @transform_2, window_bounds = array<i64: 1, 1, 6, 128>}, {pipeline_mode = #tpu.pipeline_mode<synchronous>, transform_indices = @transform_3, window_bounds = array<i64: 9, 128, 128>}, {transform_indices = @transform_4, window_bounds = array<i64: 1, 1, 4, 128>}, {pipeline_mode = #tpu.pipeline_mode<synchronous>, transform_indices = @transform_5, window_bounds = array<i64: 1, 128>}, {pipeline_mode = #tpu.pipeline_mode<synchronous>, transform_indices = @transform_6, window_bounds = array<i64: 1, 128>}]} {
    %c0_i32 = arith.constant 0 : i32
    %0 = arith.cmpi eq, %arg0, %c0_i32 : i32
    %c0_i32_0 = arith.constant 0 : i32
    %1 = arith.cmpi eq, %arg1, %c0_i32_0 : i32
    %2 = arith.andi %0, %1 : i1
    %3 = arith.extui %2 : i1 to i32
    %c0_i32_1 = arith.constant 0 : i32
    %4 = arith.cmpi ne, %3, %c0_i32_1 : i32
    scf.if %4 {
      %cst_55 = arith.constant 0.000000e+00 : f32
      %71 = vector.broadcast %cst_55 : f32 to vector<1x128xf32>
      %c0_56 = arith.constant 0 : index
      %c0_57 = arith.constant 0 : index
      %72 = vector.load %arg7[%c0_56, %c0_57] : memref<1x128xf32, #tpu.memory_space<vmem>>, vector<1x128xf32>
      tpu.vector_store %arg7[%c0_56, %c0_57], %71 {strides = array<i32>} : memref<1x128xf32, #tpu.memory_space<vmem>>, vector<1x128xf32>,
      %cst_58 = arith.constant 0.000000e+00 : f32
      %73 = vector.broadcast %cst_58 : f32 to vector<1x128xf32>
      %c0_59 = arith.constant 0 : index
      %c0_60 = arith.constant 0 : index
      %74 = vector.load %arg8[%c0_59, %c0_60] : memref<1x128xf32, #tpu.memory_space<vmem>>, vector<1x128xf32>
      tpu.vector_store %arg8[%c0_59, %c0_60], %73 {strides = array<i32>} : memref<1x128xf32, #tpu.memory_space<vmem>>, vector<1x128xf32>,
    } else {
    }
    %c0 = arith.constant 0 : index
    %c0_2 = arith.constant 0 : index
    %c0_3 = arith.constant 0 : index
    %c0_4 = arith.constant 0 : index
    %5 = vector.load %arg2[%c0, %c0_2, %c0_3, %c0_4] : memref<1x1x6x128xbf16, #tpu.memory_space<vmem>>, vector<1x1x6x128xbf16>
    %6 = vector.shape_cast %5 : vector<1x1x6x128xbf16> to vector<6x128xbf16>
    %c0_5 = arith.constant 0 : index
    %c0_6 = arith.constant 0 : index
    %c0_7 = arith.constant 0 : index
    %c0_8 = arith.constant 0 : index
    %7 = vector.load %arg3[%c0_5, %c0_6, %c0_7, %c0_8] : memref<1x1x6x128xbf16, #tpu.memory_space<vmem>>, vector<1x1x6x128xbf16>
    %8 = vector.shape_cast %7 : vector<1x1x6x128xbf16> to vector<6x128xbf16>
    %c0_9 = arith.constant 0 : index
    %c0_10 = arith.constant 0 : index
    %c0_11 = arith.constant 0 : index
    %c0_12 = arith.constant 0 : index
    %9 = vector.load %arg4[%c0_9, %c0_10, %c0_11, %c0_12] : memref<1x1x6x128xbf16, #tpu.memory_space<vmem>>, vector<1x1x6x128xbf16>
    %10 = vector.shape_cast %9 : vector<1x1x6x128xbf16> to vector<6x128xbf16>
    %cst = arith.constant 0.000000e+00 : f32
    %11 = vector.broadcast %cst : f32 to vector<4x128xf32>
    %12 = vector.extract_strided_slice %6 {offsets = [0, 0], sizes = [4, 128], strides = [1, 1]} : vector<6x128xbf16> to vector<4x128xbf16>
    %c0_13 = arith.constant 0 : index
    %c0_14 = arith.constant 0 : index
    %c0_15 = arith.constant 0 : index
    %13 = vector.load %arg5[%c0_13, %c0_14, %c0_15] : memref<9x128x128xbf16, #tpu.memory_space<vmem>>, vector<1x128x128xbf16>
    %14 = vector.shape_cast %13 : vector<1x128x128xbf16> to vector<128x128xbf16>
    %cst_16 = arith.constant dense<0.000000e+00> : vector<4x128xf32>
    %15 = tpu.matmul %12, %14, %cst_16 {dimension_numbers = #tpu.dot_dimension_numbers<[1], [0], [0], [1], [0, 0, 1, 1], [], []>} : vector<4x128xbf16>, vector<128x128xbf16>, vector<4x128xf32> -> vector<4x128xf32>
    %16 = arith.addf %11, %15 : vector<4x128xf32>
    %17 = vector.extract_strided_slice %6 {offsets = [1, 0], sizes = [4, 128], strides = [1, 1]} : vector<6x128xbf16> to vector<4x128xbf16>
    %c1 = arith.constant 1 : index
    %c0_17 = arith.constant 0 : index
    %c0_18 = arith.constant 0 : index
    %18 = vector.load %arg5[%c1, %c0_17, %c0_18] : memref<9x128x128xbf16, #tpu.memory_space<vmem>>, vector<1x128x128xbf16>
    %19 = vector.shape_cast %18 : vector<1x128x128xbf16> to vector<128x128xbf16>
    %cst_19 = arith.constant dense<0.000000e+00> : vector<4x128xf32>
    %20 = tpu.matmul %17, %19, %cst_19 {dimension_numbers = #tpu.dot_dimension_numbers<[1], [0], [0], [1], [0, 0, 1, 1], [], []>} : vector<4x128xbf16>, vector<128x128xbf16>, vector<4x128xf32> -> vector<4x128xf32>
    %21 = arith.addf %16, %20 : vector<4x128xf32>
    %22 = vector.extract_strided_slice %6 {offsets = [2, 0], sizes = [4, 128], strides = [1, 1]} : vector<6x128xbf16> to vector<4x128xbf16>
    %c2 = arith.constant 2 : index
    %c0_20 = arith.constant 0 : index
    %c0_21 = arith.constant 0 : index
    %23 = vector.load %arg5[%c2, %c0_20, %c0_21] : memref<9x128x128xbf16, #tpu.memory_space<vmem>>, vector<1x128x128xbf16>
    %24 = vector.shape_cast %23 : vector<1x128x128xbf16> to vector<128x128xbf16>
    %cst_22 = arith.constant dense<0.000000e+00> : vector<4x128xf32>
    %25 = tpu.matmul %22, %24, %cst_22 {dimension_numbers = #tpu.dot_dimension_numbers<[1], [0], [0], [1], [0, 0, 1, 1], [], []>} : vector<4x128xbf16>, vector<128x128xbf16>, vector<4x128xf32> -> vector<4x128xf32>
    %26 = arith.addf %21, %25 : vector<4x128xf32>
    %27 = vector.extract_strided_slice %8 {offsets = [0, 0], sizes = [4, 128], strides = [1, 1]} : vector<6x128xbf16> to vector<4x128xbf16>
    %c3 = arith.constant 3 : index
    %c0_23 = arith.constant 0 : index
    %c0_24 = arith.constant 0 : index
    %28 = vector.load %arg5[%c3, %c0_23, %c0_24] : memref<9x128x128xbf16, #tpu.memory_space<vmem>>, vector<1x128x128xbf16>
    %29 = vector.shape_cast %28 : vector<1x128x128xbf16> to vector<128x128xbf16>
    %cst_25 = arith.constant dense<0.000000e+00> : vector<4x128xf32>
    %30 = tpu.matmul %27, %29, %cst_25 {dimension_numbers = #tpu.dot_dimension_numbers<[1], [0], [0], [1], [0, 0, 1, 1], [], []>} : vector<4x128xbf16>, vector<128x128xbf16>, vector<4x128xf32> -> vector<4x128xf32>
    %31 = arith.addf %26, %30 : vector<4x128xf32>
    %32 = vector.extract_strided_slice %8 {offsets = [1, 0], sizes = [4, 128], strides = [1, 1]} : vector<6x128xbf16> to vector<4x128xbf16>
    %c4 = arith.constant 4 : index
    %c0_26 = arith.constant 0 : index
    %c0_27 = arith.constant 0 : index
    %33 = vector.load %arg5[%c4, %c0_26, %c0_27] : memref<9x128x128xbf16, #tpu.memory_space<vmem>>, vector<1x128x128xbf16>
    %34 = vector.shape_cast %33 : vector<1x128x128xbf16> to vector<128x128xbf16>
    %cst_28 = arith.constant dense<0.000000e+00> : vector<4x128xf32>
    %35 = tpu.matmul %32, %34, %cst_28 {dimension_numbers = #tpu.dot_dimension_numbers<[1], [0], [0], [1], [0, 0, 1, 1], [], []>} : vector<4x128xbf16>, vector<128x128xbf16>, vector<4x128xf32> -> vector<4x128xf32>
    %36 = arith.addf %31, %35 : vector<4x128xf32>
    %37 = vector.extract_strided_slice %8 {offsets = [2, 0], sizes = [4, 128], strides = [1, 1]} : vector<6x128xbf16> to vector<4x128xbf16>
    %c5 = arith.constant 5 : index
    %c0_29 = arith.constant 0 : index
    %c0_30 = arith.constant 0 : index
    %38 = vector.load %arg5[%c5, %c0_29, %c0_30] : memref<9x128x128xbf16, #tpu.memory_space<vmem>>, vector<1x128x128xbf16>
    %39 = vector.shape_cast %38 : vector<1x128x128xbf16> to vector<128x128xbf16>
    %cst_31 = arith.constant dense<0.000000e+00> : vector<4x128xf32>
    %40 = tpu.matmul %37, %39, %cst_31 {dimension_numbers = #tpu.dot_dimension_numbers<[1], [0], [0], [1], [0, 0, 1, 1], [], []>} : vector<4x128xbf16>, vector<128x128xbf16>, vector<4x128xf32> -> vector<4x128xf32>
    %41 = arith.addf %36, %40 : vector<4x128xf32>
    %42 = vector.extract_strided_slice %10 {offsets = [0, 0], sizes = [4, 128], strides = [1, 1]} : vector<6x128xbf16> to vector<4x128xbf16>
    %c6 = arith.constant 6 : index
    %c0_32 = arith.constant 0 : index
    %c0_33 = arith.constant 0 : index
    %43 = vector.load %arg5[%c6, %c0_32, %c0_33] : memref<9x128x128xbf16, #tpu.memory_space<vmem>>, vector<1x128x128xbf16>
    %44 = vector.shape_cast %43 : vector<1x128x128xbf16> to vector<128x128xbf16>
    %cst_34 = arith.constant dense<0.000000e+00> : vector<4x128xf32>
    %45 = tpu.matmul %42, %44, %cst_34 {dimension_numbers = #tpu.dot_dimension_numbers<[1], [0], [0], [1], [0, 0, 1, 1], [], []>} : vector<4x128xbf16>, vector<128x128xbf16>, vector<4x128xf32> -> vector<4x128xf32>
    %46 = arith.addf %41, %45 : vector<4x128xf32>
    %47 = vector.extract_strided_slice %10 {offsets = [1, 0], sizes = [4, 128], strides = [1, 1]} : vector<6x128xbf16> to vector<4x128xbf16>
    %c7 = arith.constant 7 : index
    %c0_35 = arith.constant 0 : index
    %c0_36 = arith.constant 0 : index
    %48 = vector.load %arg5[%c7, %c0_35, %c0_36] : memref<9x128x128xbf16, #tpu.memory_space<vmem>>, vector<1x128x128xbf16>
    %49 = vector.shape_cast %48 : vector<1x128x128xbf16> to vector<128x128xbf16>
    %cst_37 = arith.constant dense<0.000000e+00> : vector<4x128xf32>
    %50 = tpu.matmul %47, %49, %cst_37 {dimension_numbers = #tpu.dot_dimension_numbers<[1], [0], [0], [1], [0, 0, 1, 1], [], []>} : vector<4x128xbf16>, vector<128x128xbf16>, vector<4x128xf32> -> vector<4x128xf32>
    %51 = arith.addf %46, %50 : vector<4x128xf32>
    %52 = vector.extract_strided_slice %10 {offsets = [2, 0], sizes = [4, 128], strides = [1, 1]} : vector<6x128xbf16> to vector<4x128xbf16>
    %c8 = arith.constant 8 : index
    %c0_38 = arith.constant 0 : index
    %c0_39 = arith.constant 0 : index
    %53 = vector.load %arg5[%c8, %c0_38, %c0_39] : memref<9x128x128xbf16, #tpu.memory_space<vmem>>, vector<1x128x128xbf16>
    %54 = vector.shape_cast %53 : vector<1x128x128xbf16> to vector<128x128xbf16>
    %cst_40 = arith.constant dense<0.000000e+00> : vector<4x128xf32>
    %55 = tpu.matmul %52, %54, %cst_40 {dimension_numbers = #tpu.dot_dimension_numbers<[1], [0], [0], [1], [0, 0, 1, 1], [], []>} : vector<4x128xbf16>, vector<128x128xbf16>, vector<4x128xf32> -> vector<4x128xf32>
    %56 = arith.addf %51, %55 : vector<4x128xf32>
    %c0_41 = arith.constant 0 : index
    %c0_42 = arith.constant 0 : index
    %c0_43 = arith.constant 0 : index
    %c0_44 = arith.constant 0 : index
    %57 = vector.load %arg6[%c0_41, %c0_42, %c0_43, %c0_44] : memref<1x1x4x128xf32, #tpu.memory_space<vmem>>, vector<1x1x4x128xf32>
    %58 = vector.shape_cast %57 : vector<1x1x4x128xf32> to vector<4x128xf32>
    %59 = vector.shape_cast %56 : vector<4x128xf32> to vector<1x1x4x128xf32>
    tpu.vector_store %arg6[%c0_41, %c0_42, %c0_43, %c0_44], %59 {strides = array<i32>} : memref<1x1x4x128xf32, #tpu.memory_space<vmem>>, vector<1x1x4x128xf32>,
    %c0_45 = arith.constant 0 : index
    %c0_46 = arith.constant 0 : index
    %60 = vector.load %arg7[%c0_45, %c0_46] : memref<1x128xf32, #tpu.memory_space<vmem>>, vector<1x128xf32>
    %cst_47 = arith.constant dense<0.000000e+00> : vector<128xf32>
    %61 = vector.multi_reduction <add>, %56, %cst_47 [0] : vector<4x128xf32> to vector<128xf32>
    %62 = vector.shape_cast %61 : vector<128xf32> to vector<1x128xf32>
    %63 = arith.addf %60, %62 : vector<1x128xf32>
    %c0_48 = arith.constant 0 : index
    %c0_49 = arith.constant 0 : index
    %64 = vector.load %arg7[%c0_48, %c0_49] : memref<1x128xf32, #tpu.memory_space<vmem>>, vector<1x128xf32>
    tpu.vector_store %arg7[%c0_48, %c0_49], %63 {strides = array<i32>} : memref<1x128xf32, #tpu.memory_space<vmem>>, vector<1x128xf32>,
    %c0_50 = arith.constant 0 : index
    %c0_51 = arith.constant 0 : index
    %65 = vector.load %arg8[%c0_50, %c0_51] : memref<1x128xf32, #tpu.memory_space<vmem>>, vector<1x128xf32>
    %66 = arith.mulf %56, %56 : vector<4x128xf32>
    %cst_52 = arith.constant dense<0.000000e+00> : vector<128xf32>
    %67 = vector.multi_reduction <add>, %66, %cst_52 [0] : vector<4x128xf32> to vector<128xf32>
    %68 = vector.shape_cast %67 : vector<128xf32> to vector<1x128xf32>
    %69 = arith.addf %65, %68 : vector<1x128xf32>
    %c0_53 = arith.constant 0 : index
    %c0_54 = arith.constant 0 : index
    %70 = vector.load %arg8[%c0_53, %c0_54] : memref<1x128xf32, #tpu.memory_space<vmem>>, vector<1x128xf32>
    tpu.vector_store %arg8[%c0_53, %c0_54], %69 {strides = array<i32>} : memref<1x128xf32, #tpu.memory_space<vmem>>, vector<1x128xf32>,
    return
  }
  func.func @transform_0(%arg0: i32, %arg1: i32) -> (i32, i32, i32, i32) {
    %c0_i32 = arith.constant 0 : i32
    %c0_i32_0 = arith.constant 0 : i32
    %c0_i32_1 = arith.constant 0 : i32
    return %arg0, %arg1, %c0_i32, %c0_i32_0 : i32, i32, i32, i32
  }
  func.func @transform_1(%arg0: i32, %arg1: i32) -> (i32, i32, i32, i32) {
    %c1_i32 = arith.constant 1 : i32
    %0 = arith.addi %arg1, %c1_i32 : i32
    %c0_i32 = arith.constant 0 : i32
    %c0_i32_0 = arith.constant 0 : i32
    %c0_i32_1 = arith.constant 0 : i32
    return %arg0, %0, %c0_i32, %c0_i32_0 : i32, i32, i32, i32
  }
  func.func @transform_2(%arg0: i32, %arg1: i32) -> (i32, i32, i32, i32) {
    %c2_i32 = arith.constant 2 : i32
    %0 = arith.addi %arg1, %c2_i32 : i32
    %c0_i32 = arith.constant 0 : i32
    %c0_i32_0 = arith.constant 0 : i32
    %c0_i32_1 = arith.constant 0 : i32
    return %arg0, %0, %c0_i32, %c0_i32_0 : i32, i32, i32, i32
  }
  func.func @transform_3(%arg0: i32, %arg1: i32) -> (i32, i32, i32) {
    %c0_i32 = arith.constant 0 : i32
    %c0_i32_0 = arith.constant 0 : i32
    %c0_i32_1 = arith.constant 0 : i32
    %c0_i32_2 = arith.constant 0 : i32
    return %c0_i32, %c0_i32_0, %c0_i32_1 : i32, i32, i32
  }
  func.func @transform_4(%arg0: i32, %arg1: i32) -> (i32, i32, i32, i32) {
    %c0_i32 = arith.constant 0 : i32
    %c0_i32_0 = arith.constant 0 : i32
    %c0_i32_1 = arith.constant 0 : i32
    return %arg0, %arg1, %c0_i32, %c0_i32_0 : i32, i32, i32, i32
  }
  func.func @transform_5(%arg0: i32, %arg1: i32) -> (i32, i32) {
    %c0_i32 = arith.constant 0 : i32
    %c0_i32_0 = arith.constant 0 : i32
    %c0_i32_1 = arith.constant 0 : i32
    return %c0_i32, %c0_i32_0 : i32, i32
  }
  func.func @transform_6(%arg0: i32, %arg1: i32) -> (i32, i32) {
    %c0_i32 = arith.constant 0 : i32
    %c0_i32_0 = arith.constant 0 : i32
    %c0_i32_1 = arith.constant 0 : i32
    return %c0_i32, %c0_i32_0 : i32, i32
  }
}

module attributes {stable_mosaic.version = 11 : i64} {
  func.func @_bn_relu_kernel(%arg0: i32, %arg1: memref<32x128xf32, #tpu.memory_space<vmem>>, %arg2: memref<1x128xf32, #tpu.memory_space<vmem>>, %arg3: memref<1x128xf32, #tpu.memory_space<vmem>>, %arg4: memref<32x128xbf16, #tpu.memory_space<vmem>>) attributes {dimension_semantics = [#tpu.dimension_semantics<parallel>], iteration_bounds = array<i64: 1>, scalar_prefetch = 0 : i64, scratch_operands = 0 : i64, tpu.core_type = #tpu.core_type<tc>, window_params = [{transform_indices = @transform_0, window_bounds = array<i64: 32, 128>}, {pipeline_mode = #tpu.pipeline_mode<synchronous>, transform_indices = @transform_1, window_bounds = array<i64: 1, 128>}, {pipeline_mode = #tpu.pipeline_mode<synchronous>, transform_indices = @transform_2, window_bounds = array<i64: 1, 128>}, {transform_indices = @transform_3, window_bounds = array<i64: 32, 128>}]} {
    %c0 = arith.constant 0 : index
    %c0_0 = arith.constant 0 : index
    %0 = vector.load %arg1[%c0, %c0_0] : memref<32x128xf32, #tpu.memory_space<vmem>>, vector<32x128xf32>
    %c0_1 = arith.constant 0 : index
    %c0_2 = arith.constant 0 : index
    %1 = vector.load %arg2[%c0_1, %c0_2] : memref<1x128xf32, #tpu.memory_space<vmem>>, vector<1x128xf32>
    %2 = vector.broadcast %1 : vector<1x128xf32> to vector<32x128xf32>
    %3 = arith.mulf %0, %2 : vector<32x128xf32>
    %c0_3 = arith.constant 0 : index
    %c0_4 = arith.constant 0 : index
    %4 = vector.load %arg3[%c0_3, %c0_4] : memref<1x128xf32, #tpu.memory_space<vmem>>, vector<1x128xf32>
    %5 = vector.broadcast %4 : vector<1x128xf32> to vector<32x128xf32>
    %6 = arith.addf %3, %5 : vector<32x128xf32>
    %cst = arith.constant 0.000000e+00 : f32
    %7 = vector.broadcast %cst : f32 to vector<32x128xf32>
    %8 = arith.maximumf %6, %7 : vector<32x128xf32>
    %9 = arith.truncf %8 : vector<32x128xf32> to vector<32x128xbf16>
    %c0_5 = arith.constant 0 : index
    %c0_6 = arith.constant 0 : index
    %10 = vector.load %arg4[%c0_5, %c0_6] : memref<32x128xbf16, #tpu.memory_space<vmem>>, vector<32x128xbf16>
    tpu.vector_store %arg4[%c0_5, %c0_6], %9 {strides = array<i32>} : memref<32x128xbf16, #tpu.memory_space<vmem>>, vector<32x128xbf16>,
    return
  }
  func.func @transform_0(%arg0: i32) -> (i32, i32) {
    %c0_i32 = arith.constant 0 : i32
    %c0_i32_0 = arith.constant 0 : i32
    return %arg0, %c0_i32 : i32, i32
  }
  func.func @transform_1(%arg0: i32) -> (i32, i32) {
    %c0_i32 = arith.constant 0 : i32
    %c0_i32_0 = arith.constant 0 : i32
    %c0_i32_1 = arith.constant 0 : i32
    return %c0_i32, %c0_i32_0 : i32, i32
  }
  func.func @transform_2(%arg0: i32) -> (i32, i32) {
    %c0_i32 = arith.constant 0 : i32
    %c0_i32_0 = arith.constant 0 : i32
    %c0_i32_1 = arith.constant 0 : i32
    return %c0_i32, %c0_i32_0 : i32, i32
  }
  func.func @transform_3(%arg0: i32) -> (i32, i32) {
    %c0_i32 = arith.constant 0 : i32
    %c0_i32_0 = arith.constant 0 : i32
    return %arg0, %c0_i32 : i32, i32
  }
}

</mosaic_0001>

<llo_original>
// kernel: downsample_forward.5
$region0: #{downsample_forward.5}
  #allocation0 [shape = 'u32[]', space=smem, size = 0x4, offset = 0x4, fixed_abs, tag = 'smem constant byte address 0x4 - core index']
  #allocation1 [shape = 'u32[144,128]{1,0:T(1,128)}', space=vmem, size = 0x12000, scoped, tag = 'internal scratch']
  %s0 = inlined_call_operand.vmem [shape: f32[16,2,8,8], index: 0, kind: input, shape index: {}]
  %s1 = inlined_call_operand.vmem [shape: bf16[16,8,4], index: 1, kind: output, shape index: {}]
  %s2 = sld [smem:[#allocation0]]
  $region14: #{downsample_forward.5} parent=0
    _
  %s4 = ssub.s32 1, %s2
  %s5 = scalar_select 0, %s4, %s2
  // Predicated region
  $region2: #{downsample_forward.5} parent=0 // pred_check
    _
  $region3: #{downsample_forward.5} parent=0 // pred_check_branch
    %7 = sbr.rel (0) target = $region5
  $region4: #{downsample_forward.5} parent=0 // pred_region
    _
  $region5: #{downsample_forward.5} parent=0 // pred_fallthru
    _
  %v8 = vld [vmem:[%s0] sm:$0xff]
  %v9 = vld [vmem:[%s0 + $0x10] sm:$0xff]
  %v10 = vld [vmem:[%s0 + $0x20] sm:$0xff]
  %v11 = vld [vmem:[%s0 + $0x30] sm:$0xff]
  %v12 = vld [vmem:[%s0 + $0x40] sm:$0xff]
  %v13 = vld [vmem:[%s0 + $0x50] sm:$0xff]
  %v14 = vld [vmem:[%s0 + $0x60] sm:$0xff]
  %v15 = vld [vmem:[%s0 + $0x70] sm:$0xff]
  %v16 = vld [vmem:[%s0 + $0x80] sm:$0xff]
  %v17 = vld [vmem:[%s0 + $0x90] sm:$0xff]
  %v18 = vld [vmem:[%s0 + $0xa0] sm:$0xff]
  %v19 = vld [vmem:[%s0 + $0xb0] sm:$0xff]
  %v20 = vld [vmem:[%s0 + $0xc0] sm:$0xff]
  %v21 = vld [vmem:[%s0 + $0xd0] sm:$0xff]
  %v22 = vld [vmem:[%s0 + $0xe0] sm:$0xff]
  %v23 = vld [vmem:[%s0 + $0xf0] sm:$0xff]
  %s24 = scalar_lea.vmem %s0, 8
  %v25 = vld [vmem:[%s24] sm:$0xff]
  %v26 = vld [vmem:[%s24 + $0x10] sm:$0xff]
  %v27 = vld [vmem:[%s24 + $0x20] sm:$0xff]
  %v28 = vld [vmem:[%s24 + $0x30] sm:$0xff]
  %v29 = vld [vmem:[%s24 + $0x40] sm:$0xff]
  %v30 = vld [vmem:[%s24 + $0x50] sm:$0xff]
  %v31 = vld [vmem:[%s24 + $0x60] sm:$0xff]
  %v32 = vld [vmem:[%s24 + $0x70] sm:$0xff]
  %v33 = vld [vmem:[%s24 + $0x80] sm:$0xff]
  %v34 = vld [vmem:[%s24 + $0x90] sm:$0xff]
  %v35 = vld [vmem:[%s24 + $0xa0] sm:$0xff]
  %v36 = vld [vmem:[%s24 + $0xb0] sm:$0xff]
  %v37 = vld [vmem:[%s24 + $0xc0] sm:$0xff]
  %v38 = vld [vmem:[%s24 + $0xd0] sm:$0xff]
  %v39 = vld [vmem:[%s24 + $0xe0] sm:$0xff]
  %v40 = vld [vmem:[%s24 + $0xf0] sm:$0xff]
  %v41 = vmax.f32 %v8, %v25
  %v42 = vmax.f32 %v9, %v26
  %v43 = vmax.f32 %v10, %v27
  %v44 = vmax.f32 %v11, %v28
  %v45 = vmax.f32 %v12, %v29
  %v46 = vmax.f32 %v13, %v30
  %v47 = vmax.f32 %v14, %v31
  %v48 = vmax.f32 %v15, %v32
  %v49 = vmax.f32 %v16, %v33
  %v50 = vmax.f32 %v17, %v34
  %v51 = vmax.f32 %v18, %v35
  %v52 = vmax.f32 %v19, %v36
  %v53 = vmax.f32 %v20, %v37
  %v54 = vmax.f32 %v21, %v38
  %v55 = vmax.f32 %v22, %v39
  %v56 = vmax.f32 %v23, %v40
  %73 = vrot.lane.b32.xlu0 %v41, 124
  %v74 = vpop.permute.xlu0 %73
  %75 = vrot.lane.b32.xlu0 %v42, 124
  %v76 = vpop.permute.xlu0 %75
  %77 = vrot.lane.b32.xlu0 %v43, 124
  %v78 = vpop.permute.xlu0 %77
  %79 = vrot.lane.b32.xlu0 %v44, 124
  %v80 = vpop.permute.xlu0 %79
  %81 = vrot.lane.b32.xlu0 %v45, 124
  %v82 = vpop.permute.xlu0 %81
  %83 = vrot.lane.b32.xlu0 %v46, 124
  %v84 = vpop.permute.xlu0 %83
  %85 = vrot.lane.b32.xlu0 %v47, 124
  %v86 = vpop.permute.xlu0 %85
  %87 = vrot.lane.b32.xlu0 %v48, 124
  %v88 = vpop.permute.xlu0 %87
  %89 = vrot.lane.b32.xlu0 %v49, 124
  %v90 = vpop.permute.xlu0 %89
  %91 = vrot.lane.b32.xlu0 %v50, 124
  %v92 = vpop.permute.xlu0 %91
  %93 = vrot.lane.b32.xlu0 %v51, 124
  %v94 = vpop.permute.xlu0 %93
  %95 = vrot.lane.b32.xlu0 %v52, 124
  %v96 = vpop.permute.xlu0 %95
  %97 = vrot.lane.b32.xlu0 %v53, 124
  %v98 = vpop.permute.xlu0 %97
  %99 = vrot.lane.b32.xlu0 %v54, 124
  %v100 = vpop.permute.xlu0 %99
  %101 = vrot.lane.b32.xlu0 %v55, 124
  %v102 = vpop.permute.xlu0 %101
  %103 = vrot.lane.b32.xlu0 %v56, 124
  %v104 = vpop.permute.xlu0 %103
  %v121 = vmax.f32 %v41, %v74
  %v122 = vmax.f32 %v42, %v76
  %v123 = vmax.f32 %v43, %v78
  %v124 = vmax.f32 %v44, %v80
  %v125 = vmax.f32 %v45, %v82
  %v126 = vmax.f32 %v46, %v84
  %v127 = vmax.f32 %v47, %v86
  %v128 = vmax.f32 %v48, %v88
  %v129 = vmax.f32 %v49, %v90
  %v130 = vmax.f32 %v50, %v92
  %v131 = vmax.f32 %v51, %v94
  %v132 = vmax.f32 %v52, %v96
  %v133 = vmax.f32 %v53, %v98
  %v134 = vmax.f32 %v54, %v100
  %v135 = vmax.f32 %v55, %v102
  %v136 = vmax.f32 %v56, %v104
  %v137 = vpack.c.bf16 %v121, %v121
  %v138 = vpack.c.bf16 %v122, %v122
  %v139 = vpack.c.bf16 %v123, %v123
  %v140 = vpack.c.bf16 %v124, %v124
  %v141 = vpack.c.bf16 %v125, %v125
  %v142 = vpack.c.bf16 %v126, %v126
  %v143 = vpack.c.bf16 %v127, %v127
  %v144 = vpack.c.bf16 %v128, %v128
  %v145 = vpack.c.bf16 %v129, %v129
  %v146 = vpack.c.bf16 %v130, %v130
  %v147 = vpack.c.bf16 %v131, %v131
  %v148 = vpack.c.bf16 %v132, %v132
  %v149 = vpack.c.bf16 %v133, %v133
  %v150 = vpack.c.bf16 %v134, %v134
  %v151 = vpack.c.bf16 %v135, %v135
  %v152 = vpack.c.bf16 %v136, %v136
  %vm153 = vcmask 27648
  %154 = vst.msk [vmem:[%s1] sm:$0xf] %vm153, %v137
  %155 = vst.msk [vmem:[%s1 + $0x4] sm:$0xf] %vm153, %v138
  %156 = vst.msk [vmem:[%s1 + $0x8] sm:$0xf] %vm153, %v139
  %157 = vst.msk [vmem:[%s1 + $0xc] sm:$0xf] %vm153, %v140
  %158 = vst.msk [vmem:[%s1 + $0x10] sm:$0xf] %vm153, %v141
  %159 = vst.msk [vmem:[%s1 + $0x14] sm:$0xf] %vm153, %v142
  %160 = vst.msk [vmem:[%s1 + $0x18] sm:$0xf] %vm153, %v143
  %161 = vst.msk [vmem:[%s1 + $0x1c] sm:$0xf] %vm153, %v144
  %162 = vst.msk [vmem:[%s1 + $0x20] sm:$0xf] %vm153, %v145
  %163 = vst.msk [vmem:[%s1 + $0x24] sm:$0xf] %vm153, %v146
  %164 = vst.msk [vmem:[%s1 + $0x28] sm:$0xf] %vm153, %v147
  %165 = vst.msk [vmem:[%s1 + $0x2c] sm:$0xf] %vm153, %v148
  %166 = vst.msk [vmem:[%s1 + $0x30] sm:$0xf] %vm153, %v149
  %167 = vst.msk [vmem:[%s1 + $0x34] sm:$0xf] %vm153, %v150
  %168 = vst.msk [vmem:[%s1 + $0x38] sm:$0xf] %vm153, %v151
  %169 = vst.msk [vmem:[%s1 + $0x3c] sm:$0xf] %vm153, %v152
  // Predicated region
  $region6: #{downsample_forward.5} parent=0 // pred_check
    _
  $region7: #{downsample_forward.5} parent=0 // pred_check_branch
    %171 = sbr.rel (0) target = $region9
  $region8: #{downsample_forward.5} parent=0 // pred_region
    _
  $region9: #{downsample_forward.5} parent=0 // pred_fallthru
    _
  // Predicated region
  $region10: #{downsample_forward.5} parent=0 // pred_check
    _
  $region11: #{downsample_forward.5} parent=0 // pred_check_branch
    %173 = sbr.rel (0) target = $region13
  $region12: #{downsample_forward.5} parent=0 // pred_region
    _
  $region13: #{downsample_forward.5} parent=0 // pred_fallthru
    _

// kernel: downsample_forward.7
$region0: #{downsample_forward.7}
  #allocation0 [shape = 'u32[]', space=smem, size = 0x4, offset = 0x4, fixed_abs, tag = 'smem constant byte address 0x4 - core index']
  #allocation1 [shape = 'u32[144,128]{1,0:T(1,128)}', space=vmem, size = 0x12000, scoped, tag = 'internal scratch']
  %s0 = inlined_call_operand.vmem [shape: f32[72,128], index: 0, kind: input, shape index: {}]
  %s1 = inlined_call_operand.vmem [shape: f32[1,128], index: 1, kind: input, shape index: {}]
  %s2 = inlined_call_operand.vmem [shape: f32[1,128], index: 2, kind: input, shape index: {}]
  %s3 = inlined_call_operand.vmem [shape: bf16[72,128], index: 3, kind: output, shape index: {}]
  %s4 = sld [smem:[#allocation0]]
  $region22: #{downsample_forward.7} parent=0
    _
  %s6 = ssub.s32 1, %s4
  %s7 = scalar_select 0, %s6, %s4
  // Predicated region
  $region2: #{downsample_forward.7} parent=0 // pred_check
    _
  $region3: #{downsample_forward.7} parent=0 // pred_check_branch
    %9 = sbr.rel (0) target = $region5
  $region4: #{downsample_forward.7} parent=0 // pred_region
    _
  $region5: #{downsample_forward.7} parent=0 // pred_fallthru
    _
  // Predicated region
  $region6: #{downsample_forward.7} parent=0 // pred_check
    _
  $region7: #{downsample_forward.7} parent=0 // pred_check_branch
    %11 = sbr.rel (0) target = $region9
  $region8: #{downsample_forward.7} parent=0 // pred_region
    _
  $region9: #{downsample_forward.7} parent=0 // pred_fallthru
    _
  // Predicated region
  $region10: #{downsample_forward.7} parent=0 // pred_check
    _
  $region11: #{downsample_forward.7} parent=0 // pred_check_branch
    %13 = sbr.rel (0) target = $region13
  $region12: #{downsample_forward.7} parent=0 // pred_region
    _
  $region13: #{downsample_forward.7} parent=0 // pred_fallthru
    _
  %v14 = vld [vmem:[%s0] sm:$0xff]
  %v15 = vld [vmem:[%s0 + $0x8] sm:$0xff]
  %v16 = vld [vmem:[%s0 + $0x10] sm:$0xff]
  %v17 = vld [vmem:[%s0 + $0x18] sm:$0xff]
  %v18 = vld [vmem:[%s0 + $0x20] sm:$0xff]
  %v19 = vld [vmem:[%s0 + $0x28] sm:$0xff]
  %v20 = vld [vmem:[%s0 + $0x30] sm:$0xff]
  %v21 = vld [vmem:[%s0 + $0x38] sm:$0xff]
  %v22 = vld [vmem:[%s0 + $0x40] sm:$0xff]
  %v23 = vld [vmem:[%s1] sm:$0x1]
  %v25 = vlaneseq
  %v26 = vshrl.u32 %v25, 7
  %v27 = vsub.s32 0, %v26
  %v28 = vrot.slane %v23, %v27
  %v30 = vmul.f32 %v14, %v28
  %v31 = vmul.f32 %v15, %v28
  %v32 = vmul.f32 %v16, %v28
  %v33 = vmul.f32 %v17, %v28
  %v34 = vmul.f32 %v18, %v28
  %v35 = vmul.f32 %v19, %v28
  %v36 = vmul.f32 %v20, %v28
  %v37 = vmul.f32 %v21, %v28
  %v38 = vmul.f32 %v22, %v28
  %v39 = vld [vmem:[%s2] sm:$0x1]
  %v41 = vlaneseq
  %v42 = vshrl.u32 %v41, 7
  %v43 = vsub.s32 0, %v42
  %v44 = vrot.slane %v39, %v43
  %v46 = vadd.f32 %v30, %v44
  %v47 = vadd.f32 %v31, %v44
  %v48 = vadd.f32 %v32, %v44
  %v49 = vadd.f32 %v33, %v44
  %v50 = vadd.f32 %v34, %v44
  %v51 = vadd.f32 %v35, %v44
  %v52 = vadd.f32 %v36, %v44
  %v53 = vadd.f32 %v37, %v44
  %v54 = vadd.f32 %v38, %v44
  %v55 = vmax.f32 %v46, 0.0
  %v56 = vmax.f32 %v47, 0.0
  %v57 = vmax.f32 %v48, 0.0
  %v58 = vmax.f32 %v49, 0.0
  %v59 = vmax.f32 %v50, 0.0
  %v60 = vmax.f32 %v51, 0.0
  %v61 = vmax.f32 %v52, 0.0
  %v62 = vmax.f32 %v53, 0.0
  %v63 = vmax.f32 %v54, 0.0
  %v64 = vpack.c.bf16 %v56, %v55
  %v65 = vpack.c.bf16 %v58, %v57
  %v66 = vpack.c.bf16 %v60, %v59
  %v67 = vpack.c.bf16 %v62, %v61
  %v68 = vpack.c.bf16 %v63, %v63
  %v74 = vunpack.c.l.b16 %v64
  %v75 = vunpack.c.h.b16 %v64
  %v76 = vunpack.c.l.b16 %v65
  %v77 = vunpack.c.h.b16 %v65
  %v78 = vunpack.c.l.b16 %v66
  %v79 = vunpack.c.h.b16 %v66
  %v80 = vunpack.c.l.b16 %v67
  %v81 = vunpack.c.h.b16 %v67
  %v82 = vunpack.c.l.b16 %v68
  %v83 = vpack.c.b16 %v74, %v74
  %v84 = vpack.c.b16 %v75, %v75
  %v85 = vpack.c.b16 %v76, %v76
  %v86 = vpack.c.b16 %v77, %v77
  %v87 = vpack.c.b16 %v78, %v78
  %v88 = vpack.c.b16 %v79, %v79
  %v89 = vpack.c.b16 %v80, %v80
  %v90 = vpack.c.b16 %v81, %v81
  %v91 = vpack.c.b16 %v82, %v82
  %101 = vst [vmem:[%s3] sm:$0xf] %v83
  %102 = vst [vmem:[%s3 + $0x4] sm:$0xf] %v84
  %103 = vst [vmem:[%s3 + $0x8] sm:$0xf] %v85
  %104 = vst [vmem:[%s3 + $0xc] sm:$0xf] %v86
  %105 = vst [vmem:[%s3 + $0x10] sm:$0xf] %v87
  %106 = vst [vmem:[%s3 + $0x14] sm:$0xf] %v88
  %107 = vst [vmem:[%s3 + $0x18] sm:$0xf] %v89
  %108 = vst [vmem:[%s3 + $0x1c] sm:$0xf] %v90
  %109 = vst [vmem:[%s3 + $0x20] sm:$0xf] %v91
  // Predicated region
  $region14: #{downsample_forward.7} parent=0 // pred_check
    _
  $region15: #{downsample_forward.7} parent=0 // pred_check_branch
    %111 = sbr.rel (0) target = $region17
  $region16: #{downsample_forward.7} parent=0 // pred_region
    _
  $region17: #{downsample_forward.7} parent=0 // pred_fallthru
    _
  // Predicated region
  $region18: #{downsample_forward.7} parent=0 // pred_check
    _
  $region19: #{downsample_forward.7} parent=0 // pred_check_branch
    %113 = sbr.rel (0) target = $region21
  $region20: #{downsample_forward.7} parent=0 // pred_region
    _
  $region21: #{downsample_forward.7} parent=0 // pred_fallthru
    _

// kernel: downsample_forward.6
$region0: #{downsample_forward.6}
  #allocation0 [shape = 'u32[]', space=smem, size = 0x4, offset = 0x4, fixed_abs, tag = 'smem constant byte address 0x4 - core index']
  #allocation1 [shape = 'u32[144,128]{1,0:T(1,128)}', space=vmem, size = 0x12000, scoped, tag = 'internal scratch']
  %s0 = inlined_call_operand.vmem [shape: bf16[2,8,8,4], index: 0, kind: input, shape index: {}, may-alias: {0,1,2}]
  %s1 = inlined_call_operand.vmem [shape: bf16[2,8,8,4], index: 1, kind: input, shape index: {}, may-alias: {0,1,2}]
  %s2 = inlined_call_operand.vmem [shape: bf16[2,8,8,4], index: 2, kind: input, shape index: {}, may-alias: {0,1,2}]
  %s3 = inlined_call_operand.vmem [shape: bf16[9,4,128], index: 3, kind: input, shape index: {}]
  %s4 = inlined_call_operand.vmem [shape: f32[2,6,6,128], index: 4, kind: output, shape index: {0}]
  %s5 = inlined_call_operand.vmem [shape: f32[1,128], index: 5, kind: output, shape index: {1}]
  %s6 = inlined_call_operand.vmem [shape: f32[1,128], index: 6, kind: output, shape index: {2}]
  %7 = xla_tuple %s4, %s5, %s6
  %s8 = sld [smem:[#allocation0]]
  $region69: #{downsample_forward.6} parent=0
    _
  %s10 = ssub.s32 1, %s8
  %s11 = scalar_select 0, %s10, %s8
  loop: start=0, step=1, limit=14
  $region2: #{downsample_forward.6} parent=0 // loop_pre_header
    _
  $region3: #{downsample_forward.6} parent=0 // loop_header
    %s13 = sphi 0, %s17
    %p14 = scmp.ge.s32.totalorder %s13, 14
    %s20 = sphi 0, %s32
    %s21 = sphi 0, %s28
    %s22 = sphi 0, %s20
    %s23 = sphi 0, %s21
    %s24 = sphi 0, %s22
    %s25 = sphi 0, %s23
    %s37 = sphi 0, %s39
    %s40 = sphi 0, %s37
    %s41 = sphi 0, %s40
    %s57 = sphi 0, %s41
    %s67 = sphi 0, %s69
    %s70 = sphi 0, %s67
    %s71 = sphi 0, %s70
    %s87 = sphi 0, %s71
    %s97 = sphi 0, %s99
    %s100 = sphi 0, %s97
    %s101 = sphi 0, %s100
    %s117 = sphi 0, %s101
    %s121 = sphi 0, %s121
    %s123 = sphi 0, %s121
    %s124 = sphi 0, %s123
    %s138 = sphi 0, %s124
    %s146 = sphi 0, %s148
    %s149 = sphi 0, %s146
    %s150 = sphi 0, %s149
    %s166 = sphi 0, %s150
    %s170 = sphi 0, %s170
    %s172 = sphi 0, %s170
    %s173 = sphi 0, %s172
    %s187 = sphi 0, %s173
    %s191 = sphi 0, %s191
    %s193 = sphi 0, %s191
    %s194 = sphi 0, %s193
    %s208 = sphi 0, %s194
  $region4: #{downsample_forward.6} parent=0 // loop_header_branch
    %16 = sbr.rel (%p14) target = $region8
  $region5: #{downsample_forward.6} parent=0 // loop_body
    %s18 = ssub.s32 %s13, 1
    %s19 = ssub.s32 %s13, 2
    %s26 = sadd.s32 1, %s21
    %p27 = scmp.ge.s32.totalorder %s26, 6
    %s28 = scalar_select %p27, 0, %s26
    %s29 = sadd.s32 1, %s20
    %s30 = scalar_select %p27, %s29, %s20
    %p31 = scmp.ge.s32.totalorder %s30, 2
    %s32 = scalar_select %p31, 0, %s30
    %s33 = ssub.s32 %s20, %s32
    %s34 = ssub.s32 %s21, %s28
    %s35 = sor.u32 %s33, %s34
    %p36 = scmp.eq.s32.totalorder %s35, 0
    %s38 = sadd.s32 %s37, 1
    %s39 = scalar_select %p36, %s37, %s38
    %p42 = pneg %p36
    %p43 = scmp.eq.s32.totalorder %s13, 11
    %p44 = por %p42, %p43
    %p45 = scmp.ne.s32.totalorder %s37, %s40
    %p46 = scmp.eq.s32.totalorder %s13, 0
    %p47 = por %p45, %p46
    %p48 = scmp.ne.s32.totalorder %s37, %s40
    %p49 = scmp.eq.s32.totalorder %s18, 11
    %p50 = por %p48, %p49
    %p51 = scmp.ne.s32.totalorder %s40, %s41
    %p52 = scmp.eq.s32.totalorder %s18, 0
    %p53 = por %p51, %p52
    %p54 = scmp.ne.s32.totalorder %s40, %s41
    %p55 = scmp.eq.s32.totalorder %s19, 11
    %p56 = por %p54, %p55
    %p58 = scmp.ne.s32.totalorder %s41, %s57
    %p59 = scmp.eq.s32.totalorder %s19, 0
    %p60 = por %p58, %p59
    %s61 = sadd.s32 %s21, 1
    %s62 = sadd.s32 %s28, 1
    %s63 = ssub.s32 %s20, %s32
    %s64 = ssub.s32 %s61, %s62
    %s65 = sor.u32 %s63, %s64
    %p66 = scmp.eq.s32.totalorder %s65, 0
    %s68 = sadd.s32 %s67, 1
    %s69 = scalar_select %p66, %s67, %s68
    %p72 = pneg %p66
    %p73 = scmp.eq.s32.totalorder %s13, 11
    %p74 = por %p72, %p73
    %p75 = scmp.ne.s32.totalorder %s67, %s70
    %p76 = scmp.eq.s32.totalorder %s13, 0
    %p77 = por %p75, %p76
    %p78 = scmp.ne.s32.totalorder %s67, %s70
    %p79 = scmp.eq.s32.totalorder %s18, 11
    %p80 = por %p78, %p79
    %p81 = scmp.ne.s32.totalorder %s70, %s71
    %p82 = scmp.eq.s32.totalorder %s18, 0
    %p83 = por %p81, %p82
    %p84 = scmp.ne.s32.totalorder %s70, %s71
    %p85 = scmp.eq.s32.totalorder %s19, 11
    %p86 = por %p84, %p85
    %p88 = scmp.ne.s32.totalorder %s71, %s87
    %p89 = scmp.eq.s32.totalorder %s19, 0
    %p90 = por %p88, %p89
    %s91 = sadd.s32 %s21, 2
    %s92 = sadd.s32 %s28, 2
    %s93 = ssub.s32 %s20, %s32
    %s94 = ssub.s32 %s91, %s92
    %s95 = sor.u32 %s93, %s94
    %p96 = scmp.eq.s32.totalorder %s95, 0
    %s98 = sadd.s32 %s97, 1
    %s99 = scalar_select %p96, %s97, %s98
    %p102 = pneg %p96
    %p103 = scmp.eq.s32.totalorder %s13, 11
    %p104 = por %p102, %p103
    %p105 = scmp.ne.s32.totalorder %s97, %s100
    %p106 = scmp.eq.s32.totalorder %s13, 0
    %p107 = por %p105, %p106
    %p108 = scmp.ne.s32.totalorder %s97, %s100
    %p109 = scmp.eq.s32.totalorder %s18, 11
    %p110 = por %p108, %p109
    %p111 = scmp.ne.s32.totalorder %s100, %s101
    %p112 = scmp.eq.s32.totalorder %s18, 0
    %p113 = por %p111, %p112
    %p114 = scmp.ne.s32.totalorder %s100, %s101
    %p115 = scmp.eq.s32.totalorder %s19, 11
    %p116 = por %p114, %p115
    %p118 = scmp.ne.s32.totalorder %s101, %s117
    %p119 = scmp.eq.s32.totalorder %s19, 0
    %p120 = por %p118, %p119
    %s122 = sadd.s32 %s121, 1
    %p125 = scmp.eq.s32.totalorder %s13, 11
    %p126 = scmp.ne.s32.totalorder %s121, %s123
    %p127 = scmp.eq.s32.totalorder %s13, 0
    %p128 = por %p126, %p127
    %p129 = scmp.ne.s32.totalorder %s121, %s123
    %p130 = scmp.eq.s32.totalorder %s18, 11
    %p131 = por %p129, %p130
    %p132 = scmp.ne.s32.totalorder %s123, %s124
    %p133 = scmp.eq.s32.totalorder %s18, 0
    %p134 = por %p132, %p133
    %p135 = scmp.ne.s32.totalorder %s123, %s124
    %p136 = scmp.eq.s32.totalorder %s19, 11
    %p137 = por %p135, %p136
    %p139 = scmp.ne.s32.totalorder %s124, %s138
    %p140 = scmp.eq.s32.totalorder %s19, 0
    %p141 = por %p139, %p140
    %s142 = ssub.s32 %s20, %s32
    %s143 = ssub.s32 %s21, %s28
    %s144 = sor.u32 %s142, %s143
    %p145 = scmp.eq.s32.totalorder %s144, 0
    %s147 = sadd.s32 %s146, 1
    %s148 = scalar_select %p145, %s146, %s147
    %p151 = pneg %p145
    %p152 = scmp.eq.s32.totalorder %s13, 11
    %p153 = por %p151, %p152
    %p154 = scmp.ne.s32.totalorder %s146, %s149
    %p155 = scmp.eq.s32.totalorder %s13, 0
    %p156 = por %p154, %p155
    %p157 = scmp.ne.s32.totalorder %s146, %s149
    %p158 = scmp.eq.s32.totalorder %s18, 11
    %p159 = por %p157, %p158
    %p160 = scmp.ne.s32.totalorder %s149, %s150
    %p161 = scmp.eq.s32.totalorder %s18, 0
    %p162 = por %p160, %p161
    %p163 = scmp.ne.s32.totalorder %s149, %s150
    %p164 = scmp.eq.s32.totalorder %s19, 11
    %p165 = por %p163, %p164
    %p167 = scmp.ne.s32.totalorder %s150, %s166
    %p168 = scmp.eq.s32.totalorder %s19, 0
    %p169 = por %p167, %p168
    %s171 = sadd.s32 %s170, 1
    %p174 = scmp.eq.s32.totalorder %s13, 11
    %p175 = scmp.ne.s32.totalorder %s170, %s172
    %p176 = scmp.eq.s32.totalorder %s13, 0
    %p177 = por %p175, %p176
    %p178 = scmp.ne.s32.totalorder %s170, %s172
    %p179 = scmp.eq.s32.totalorder %s18, 11
    %p180 = por %p178, %p179
    %p181 = scmp.ne.s32.totalorder %s172, %s173
    %p182 = scmp.eq.s32.totalorder %s18, 0
    %p183 = por %p181, %p182
    %p184 = scmp.ne.s32.totalorder %s172, %s173
    %p185 = scmp.eq.s32.totalorder %s19, 11
    %p186 = por %p184, %p185
    %p188 = scmp.ne.s32.totalorder %s173, %s187
    %p189 = scmp.eq.s32.totalorder %s19, 0
    %p190 = por %p188, %p189
    %s192 = sadd.s32 %s191, 1
    %p195 = scmp.eq.s32.totalorder %s13, 11
    %p196 = scmp.ne.s32.totalorder %s191, %s193
    %p197 = scmp.eq.s32.totalorder %s13, 0
    %p198 = por %p196, %p197
    %p199 = scmp.ne.s32.totalorder %s191, %s193
    %p200 = scmp.eq.s32.totalorder %s18, 11
    %p201 = por %p199, %p200
    %p202 = scmp.ne.s32.totalorder %s193, %s194
    %p203 = scmp.eq.s32.totalorder %s18, 0
    %p204 = por %p202, %p203
    %p205 = scmp.ne.s32.totalorder %s193, %s194
    %p206 = scmp.eq.s32.totalorder %s19, 11
    %p207 = por %p205, %p206
    %p209 = scmp.ne.s32.totalorder %s194, %s208
    %p210 = scmp.eq.s32.totalorder %s19, 0
    %p211 = por %p209, %p210
    %p212 = scmp.le.s32.totalorder 1, %s13
    %p213 = scmp.lt.s32.totalorder %s13, 13
    %p214 = pnand %p212, %p213
    %p215 = pneg %p214
    // Predicated region
    $region9: #{downsample_forward.6} parent=5 // pred_check
      _
    $region10: #{downsample_forward.6} parent=5 // pred_check_branch
      %217 = sbr.rel (%p214) target = $region12
    $region11: #{downsample_forward.6} parent=5 // pred_region
      %s218 = ssub.s32 %s13, 1
      // Predicated region
      $region13: #{downsample_forward.6} parent=11 // pred_check
        %p219 = pneg %p134
      $region14: #{downsample_forward.6} parent=11 // pred_check_branch
        %221 = sbr.rel (%p219) target = $region16
      $region15: #{downsample_forward.6} parent=11 // pred_region
        _
      $region16: #{downsample_forward.6} parent=11 // pred_fallthru
        _
    $region12: #{downsample_forward.6} parent=5 // pred_fallthru
      _
    %p222 = scmp.lt.s32.totalorder %s13, 12
    // Predicated region
    $region17: #{downsample_forward.6} parent=5 // pred_check
      %p223 = pneg %p222
    $region18: #{downsample_forward.6} parent=5 // pred_check_branch
      %225 = sbr.rel (%p223) target = $region20
    $region19: #{downsample_forward.6} parent=5 // pred_region
      // Predicated region
      $region21: #{downsample_forward.6} parent=19 // pred_check
        %p226 = pneg %p47
      $region22: #{downsample_forward.6} parent=19 // pred_check_branch
        %228 = sbr.rel (%p226) target = $region24
      $region23: #{downsample_forward.6} parent=19 // pred_region
        %p229 = scmp.lt.s32.totalorder %s20, 1
        %s230 = scalar_select %p229, %s20, 1
        %p231 = scmp.lt.s32.totalorder %s21, 7
        %s232 = scalar_select %p231, %s21, 7
        %s233 = smul.addr %s230, 8
        %s234 = sadd.s32 %s232, %s233
        %s235 = smul.addr %s234, 4
        %s236 = scalar_lea.vmem %s0, %s235
      $region24: #{downsample_forward.6} parent=19 // pred_fallthru
        _
      // Predicated region
      $region25: #{downsample_forward.6} parent=19 // pred_check
        %p237 = pneg %p77
      $region26: #{downsample_forward.6} parent=19 // pred_check_branch
        %239 = sbr.rel (%p237) target = $region28
      $region27: #{downsample_forward.6} parent=19 // pred_region
        %s240 = sadd.s32 %s21, 1
        %p241 = scmp.lt.s32.totalorder %s20, 1
        %s242 = scalar_select %p241, %s20, 1
        %p243 = scmp.lt.s32.totalorder %s240, 7
        %s244 = scalar_select %p243, %s240, 7
        %s245 = smul.addr %s242, 8
        %s246 = sadd.s32 %s244, %s245
        %s247 = smul.addr %s246, 4
        %s248 = scalar_lea.vmem %s1, %s247
        %s249 = sadd.s32 %s21, 1
      $region28: #{downsample_forward.6} parent=19 // pred_fallthru
        _
      // Predicated region
      $region29: #{downsample_forward.6} parent=19 // pred_check
        %p250 = pneg %p107
      $region30: #{downsample_forward.6} parent=19 // pred_check_branch
        %252 = sbr.rel (%p250) target = $region32
      $region31: #{downsample_forward.6} parent=19 // pred_region
        %s253 = sadd.s32 %s21, 2
        %p254 = scmp.lt.s32.totalorder %s20, 1
        %s255 = scalar_select %p254, %s20, 1
        %p256 = scmp.lt.s32.totalorder %s253, 7
        %s257 = scalar_select %p256, %s253, 7
        %s258 = smul.addr %s255, 8
        %s259 = sadd.s32 %s257, %s258
        %s260 = smul.addr %s259, 4
        %s261 = scalar_lea.vmem %s2, %s260
        %s262 = sadd.s32 %s21, 2
      $region32: #{downsample_forward.6} parent=19 // pred_fallthru
        _
    $region20: #{downsample_forward.6} parent=5 // pred_fallthru
      _
    %p263 = scmp.le.s32.totalorder 1, %s13
    %p264 = scmp.lt.s32.totalorder %s13, 13
    %p265 = pnand %p263, %p264
    %p266 = pneg %p265
    // Predicated region
    $region33: #{downsample_forward.6} parent=5 // pred_check
      _
    $region34: #{downsample_forward.6} parent=5 // pred_check_branch
      %268 = sbr.rel (%p265) target = $region36
    $region35: #{downsample_forward.6} parent=5 // pred_region
      %s269 = ssub.s32 %s13, 1
      %p270 = scmp.lt.s32.totalorder %s22, 1
      %s271 = scalar_select %p270, %s22, 1
      %p272 = scmp.lt.s32.totalorder %s23, 7
      %s273 = scalar_select %p272, %s23, 7
      %s274 = smul.addr %s271, 8
      %s275 = sadd.s32 %s273, %s274
      %s276 = smul.addr %s275, 4
      %s277 = scalar_lea.vmem %s0, %s276
      %p278 = pneg %p53
      %p279 = pneg %p50
      %s280 = sadd.s32 %s23, 1
      %p281 = scmp.lt.s32.totalorder %s22, 1
      %s282 = scalar_select %p281, %s22, 1
      %p283 = scmp.lt.s32.totalorder %s280, 7
      %s284 = scalar_select %p283, %s280, 7
      %s285 = smul.addr %s282, 8
      %s286 = sadd.s32 %s284, %s285
      %s287 = smul.addr %s286, 4
      %s288 = scalar_lea.vmem %s1, %s287
      %p289 = pneg %p83
      %p290 = pneg %p80
      %s291 = sadd.s32 %s23, 2
      %p292 = scmp.lt.s32.totalorder %s22, 1
      %s293 = scalar_select %p292, %s22, 1
      %p294 = scmp.lt.s32.totalorder %s291, 7
      %s295 = scalar_select %p294, %s291, 7
      %s296 = smul.addr %s293, 8
      %s297 = sadd.s32 %s295, %s296
      %s298 = smul.addr %s297, 4
      %s299 = scalar_lea.vmem %s2, %s298
      %p300 = pneg %p113
      %p301 = pneg %p110
      %p302 = pneg %p134
      %p303 = pneg %p131
      %p304 = pneg %p162
      %p305 = pneg %p159
      %p306 = scmp.lt.s32.totalorder %s22, 1
      %s307 = scalar_select %p306, %s22, 1
      %p308 = scmp.lt.s32.totalorder %s23, 5
      %s309 = scalar_select %p308, %s23, 5
      %s310 = smul.addr %s307, 6
      %s311 = sadd.s32 %s309, %s310
      %s312 = smul.addr %s311, 8
      %s313 = scalar_lea.vmem %s4, %s312
      %p314 = pneg %p183
      %p315 = pneg %p180
      %p316 = pneg %p204
      %p317 = pneg %p201
      %p318 = scmp.lt.s32.totalorder %s22, 1
      %s319 = scalar_select %p318, %s22, 1
      %p320 = scmp.lt.s32.totalorder %s23, 7
      %s321 = scalar_select %p320, %s23, 7
      %s322 = smul.addr %s319, 8
      %s323 = sadd.s32 %s321, %s322
      %s324 = smul.addr %s323, 4
      %s325 = scalar_lea.vmem %s0, %s324
      %s326 = sadd.s32 %s23, 1
      %p327 = scmp.lt.s32.totalorder %s22, 1
      %s328 = scalar_select %p327, %s22, 1
      %p329 = scmp.lt.s32.totalorder %s326, 7
      %s330 = scalar_select %p329, %s326, 7
      %s331 = smul.addr %s328, 8
      %s332 = sadd.s32 %s330, %s331
      %s333 = smul.addr %s332, 4
      %s334 = scalar_lea.vmem %s1, %s333
      %s335 = sadd.s32 %s23, 1
      %s336 = sadd.s32 %s23, 2
      %p337 = scmp.lt.s32.totalorder %s22, 1
      %s338 = scalar_select %p337, %s22, 1
      %p339 = scmp.lt.s32.totalorder %s336, 7
      %s340 = scalar_select %p339, %s336, 7
      %s341 = smul.addr %s338, 8
      %s342 = sadd.s32 %s340, %s341
      %s343 = smul.addr %s342, 4
      %s344 = scalar_lea.vmem %s2, %s343
      %s345 = sadd.s32 %s23, 2
      %p346 = scmp.lt.s32.totalorder %s22, 1
      %s347 = scalar_select %p346, %s22, 1
      %p348 = scmp.lt.s32.totalorder %s23, 5
      %s349 = scalar_select %p348, %s23, 5
      %s350 = smul.addr %s347, 6
      %s351 = sadd.s32 %s349, %s350
      %s352 = smul.addr %s351, 8
      %s353 = scalar_lea.vmem %s4, %s352
      %p355 = scmp.eq.s32.totalorder %s22, 0
      %p356 = scmp.eq.s32.totalorder %s23, 0
      %p357 = pnand %p355, %p356
      %p358 = pneg %p357
      // Predicated region
      $region37: #{downsample_forward.6} parent=35 // pred_check
        _
      $region38: #{downsample_forward.6} parent=35 // pred_check_branch
        %360 = sbr.rel (%p357) target = $region40
      $region39: #{downsample_forward.6} parent=35 // pred_region
        %361 = vst [vmem:[%s5] sm:$0x1] 0.0
        %362 = vst [vmem:[%s6] sm:$0x1] 0.0
      $region40: #{downsample_forward.6} parent=35 // pred_fallthru
        _
      %v363 = vld [vmem:[%s325] sm:$0xf]
      %v364 = vld [vmem:[%s334] sm:$0xf]
      %v365 = vld [vmem:[%s344] sm:$0xf]
      %v366 = vld [vmem:[%s3] sm:$0x3]
      %s367 = scalar_lea.vmem %s3, 2
      %v368 = vld [vmem:[%s367] sm:$0x3]
      %v370 = vunpack.c.l.b16 %v363
      %v371 = vpack.c.b16 %v370, %v370
      %v373 = vshrl.u32 %v371, 16
      %v375 = vshll.u32 %v371, 16
      %v377 = vrot.slane %v375, 1
      %v378 = vor.u32 %v373, %v377
      %vm379 = vcmask 31744
      %v381 = vsel %vm379, %v378, 0
      %vm383 = vcmask 1041408
      %v385 = vsel %vm383, %v368, 0
      %387 = vmatprep.subr.bf16.mxu0 0
      %388 = vmatpush1.bf16.msra.mxu0 %v385
      %389 = vmatprep.subr.bf16.mxu0 0
      %390 = vmatpush1.bf16.msra.mxu0 0
      %391 = vmatprep.subr.bf16.mxu0 0
      %392 = vmatpush1.bf16.msra.mxu0 0
      %393 = vmatprep.subr.bf16.mxu0 0
      %394 = vmatpush1.bf16.msra.mxu0 0
      %395 = vmatprep.subr.bf16.mxu0 0
      %396 = vmatpush1.bf16.msra.mxu0 0
      %397 = vmatprep.subr.bf16.mxu0 0
      %398 = vmatpush1.bf16.msra.mxu0 0
      %399 = vmatprep.subr.bf16.mxu0 0
      %400 = vmatpush1.bf16.msra.mxu0 0
      %401 = vmatprep.subr.bf16.mxu0 0
      %402 = vmatpush1.bf16.msra.mxu0 0
      %403 = vmatprep.subr.bf16.mxu0 0
      %404 = vmatpush1.bf16.msra.mxu0 0
      %405 = vmatprep.subr.bf16.mxu0 0
      %406 = vmatpush1.bf16.msra.mxu0 0
      %407 = vmatprep.subr.bf16.mxu0 0
      %408 = vmatpush1.bf16.msra.mxu0 0
      %409 = vmatprep.subr.bf16.mxu0 0
      %410 = vmatpush1.bf16.msra.mxu0 0
      %411 = vmatprep.subr.bf16.mxu0 0
      %412 = vmatpush1.bf16.msra.mxu0 0
      %413 = vmatprep.subr.bf16.mxu0 0
      %414 = vmatpush1.bf16.msra.mxu0 0
      %415 = vmatprep.subr.bf16.mxu0 0
      %416 = vmatpush1.bf16.msra.mxu0 0
      %417 = vmatprep.subr.bf16.mxu0 0
      %418 = vmatpush1.bf16.msra.mxu0 0
      %419 = vmatprep.mubr.bf16.mxu0 0
      %420 = vmatmul.mubr.bf16.gmra.mrb[0].mxu0 %v381
      %v421 = vpop.f32.mrb[0].mxu0
      %v422 = vadd.f32 0.0, %v421
      %v423 = vpop.f32.mrb[0].mxu0
      %v424 = vpop.f32.mrb[0].mxu0
      %v425 = vpop.f32.mrb[0].mxu0
      %426 = vdwg.mxu0
      %v428 = vsel %vm379, %v363, 0
      %v431 = vsel %vm383, %v366, 0
      %433 = vmatprep.subr.bf16.mxu0 0
      %434 = vmatpush1.bf16.msra.mxu0 %v431
      %435 = vmatprep.subr.bf16.mxu0 0
      %436 = vmatpush1.bf16.msra.mxu0 0
      %437 = vmatprep.subr.bf16.mxu0 0
      %438 = vmatpush1.bf16.msra.mxu0 0
      %439 = vmatprep.subr.bf16.mxu0 0
      %440 = vmatpush1.bf16.msra.mxu0 0
      %441 = vmatprep.subr.bf16.mxu0 0
      %442 = vmatpush1.bf16.msra.mxu0 0
      %443 = vmatprep.subr.bf16.mxu0 0
      %444 = vmatpush1.bf16.msra.mxu0 0
      %445 = vmatprep.subr.bf16.mxu0 0
      %446 = vmatpush1.bf16.msra.mxu0 0
      %447 = vmatprep.subr.bf16.mxu0 0
      %448 = vmatpush1.bf16.msra.mxu0 0
      %449 = vmatprep.subr.bf16.mxu0 0
      %450 = vmatpush1.bf16.msra.mxu0 0
      %451 = vmatprep.subr.bf16.mxu0 0
      %452 = vmatpush1.bf16.msra.mxu0 0
      %453 = vmatprep.subr.bf16.mxu0 0
      %454 = vmatpush1.bf16.msra.mxu0 0
      %455 = vmatprep.subr.bf16.mxu0 0
      %456 = vmatpush1.bf16.msra.mxu0 0
      %457 = vmatprep.subr.bf16.mxu0 0
      %458 = vmatpush1.bf16.msra.mxu0 0
      %459 = vmatprep.subr.bf16.mxu0 0
      %460 = vmatpush1.bf16.msra.mxu0 0
      %461 = vmatprep.subr.bf16.mxu0 0
      %462 = vmatpush1.bf16.msra.mxu0 0
      %463 = vmatprep.subr.bf16.mxu0 0
      %464 = vmatpush1.bf16.msra.mxu0 0
      %465 = vmatprep.mubr.bf16.mxu0 0
      %466 = vmatmul.mubr.bf16.gmra.mrb[0].mxu0 %v428
      %v467 = vpop.f32.mrb[0].mxu0
      %v468 = vadd.f32 %v422, %v467
      %v469 = vpop.f32.mrb[0].mxu0
      %v470 = vpop.f32.mrb[0].mxu0
      %v471 = vpop.f32.mrb[0].mxu0
      %472 = vdwg.mxu0
      %s473 = scalar_lea.vmem %s3, 4
      %v474 = vld [vmem:[%s473] sm:$0x3]
      %v475 = vrot.slane %v371, 1
      %v477 = vsel %vm379, %v475, 0
      %v480 = vsel %vm383, %v474, 0
      %482 = vmatprep.subr.bf16.mxu0 0
      %483 = vmatpush1.bf16.msra.mxu0 %v480
      %484 = vmatprep.subr.bf16.mxu0 0
      %485 = vmatpush1.bf16.msra.mxu0 0
      %486 = vmatprep.subr.bf16.mxu0 0
      %487 = vmatpush1.bf16.msra.mxu0 0
      %488 = vmatprep.subr.bf16.mxu0 0
      %489 = vmatpush1.bf16.msra.mxu0 0
      %490 = vmatprep.subr.bf16.mxu0 0
      %491 = vmatpush1.bf16.msra.mxu0 0
      %492 = vmatprep.subr.bf16.mxu0 0
      %493 = vmatpush1.bf16.msra.mxu0 0
      %494 = vmatprep.subr.bf16.mxu0 0
      %495 = vmatpush1.bf16.msra.mxu0 0
      %496 = vmatprep.subr.bf16.mxu0 0
      %497 = vmatpush1.bf16.msra.mxu0 0
      %498 = vmatprep.subr.bf16.mxu0 0
      %499 = vmatpush1.bf16.msra.mxu0 0
      %500 = vmatprep.subr.bf16.mxu0 0
      %501 = vmatpush1.bf16.msra.mxu0 0
      %502 = vmatprep.subr.bf16.mxu0 0
      %503 = vmatpush1.bf16.msra.mxu0 0
      %504 = vmatprep.subr.bf16.mxu0 0
      %505 = vmatpush1.bf16.msra.mxu0 0
      %506 = vmatprep.subr.bf16.mxu0 0
      %507 = vmatpush1.bf16.msra.mxu0 0
      %508 = vmatprep.subr.bf16.mxu0 0
      %509 = vmatpush1.bf16.msra.mxu0 0
      %510 = vmatprep.subr.bf16.mxu0 0
      %511 = vmatpush1.bf16.msra.mxu0 0
      %512 = vmatprep.subr.bf16.mxu0 0
      %513 = vmatpush1.bf16.msra.mxu0 0
      %514 = vmatprep.mubr.bf16.mxu0 0
      %515 = vmatmul.mubr.bf16.gmra.mrb[0].mxu0 %v477
      %v516 = vpop.f32.mrb[0].mxu0
      %v517 = vadd.f32 0.0, %v516
      %v518 = vpop.f32.mrb[0].mxu0
      %v519 = vpop.f32.mrb[0].mxu0
      %v520 = vpop.f32.mrb[0].mxu0
      %521 = vdwg.mxu0
      %v522 = vadd.f32 %v468, %v517
      %s523 = scalar_lea.vmem %s3, 6
      %v524 = vld [vmem:[%s523] sm:$0x3]
      %v526 = vsel %vm379, %v364, 0
      %v529 = vsel %vm383, %v524, 0
      %531 = vmatprep.subr.bf16.mxu0 0
      %532 = vmatpush1.bf16.msra.mxu0 %v529
      %533 = vmatprep.subr.bf16.mxu0 0
      %534 = vmatpush1.bf16.msra.mxu0 0
      %535 = vmatprep.subr.bf16.mxu0 0
      %536 = vmatpush1.bf16.msra.mxu0 0
      %537 = vmatprep.subr.bf16.mxu0 0
      %538 = vmatpush1.bf16.msra.mxu0 0
      %539 = vmatprep.subr.bf16.mxu0 0
      %540 = vmatpush1.bf16.msra.mxu0 0
      %541 = vmatprep.subr.bf16.mxu0 0
      %542 = vmatpush1.bf16.msra.mxu0 0
      %543 = vmatprep.subr.bf16.mxu0 0
      %544 = vmatpush1.bf16.msra.mxu0 0
      %545 = vmatprep.subr.bf16.mxu0 0
      %546 = vmatpush1.bf16.msra.mxu0 0
      %547 = vmatprep.subr.bf16.mxu0 0
      %548 = vmatpush1.bf16.msra.mxu0 0
      %549 = vmatprep.subr.bf16.mxu0 0
      %550 = vmatpush1.bf16.msra.mxu0 0
      %551 = vmatprep.subr.bf16.mxu0 0
      %552 = vmatpush1.bf16.msra.mxu0 0
      %553 = vmatprep.subr.bf16.mxu0 0
      %554 = vmatpush1.bf16.msra.mxu0 0
      %555 = vmatprep.subr.bf16.mxu0 0
      %556 = vmatpush1.bf16.msra.mxu0 0
      %557 = vmatprep.subr.bf16.mxu0 0
      %558 = vmatpush1.bf16.msra.mxu0 0
      %559 = vmatprep.subr.bf16.mxu0 0
      %560 = vmatpush1.bf16.msra.mxu0 0
      %561 = vmatprep.subr.bf16.mxu0 0
      %562 = vmatpush1.bf16.msra.mxu0 0
      %563 = vmatprep.mubr.bf16.mxu0 0
      %564 = vmatmul.mubr.bf16.gmra.mrb[0].mxu0 %v526
      %v565 = vpop.f32.mrb[0].mxu0
      %v566 = vadd.f32 0.0, %v565
      %v567 = vpop.f32.mrb[0].mxu0
      %v568 = vpop.f32.mrb[0].mxu0
      %v569 = vpop.f32.mrb[0].mxu0
      %570 = vdwg.mxu0
      %v571 = vadd.f32 %v522, %v566
      %s572 = scalar_lea.vmem %s3, 8
      %v573 = vld [vmem:[%s572] sm:$0x3]
      %v575 = vunpack.c.l.b16 %v364
      %v576 = vpack.c.b16 %v575, %v575
      %v578 = vshrl.u32 %v576, 16
      %v580 = vshll.u32 %v576, 16
      %v582 = vrot.slane %v580, 1
      %v583 = vor.u32 %v578, %v582
      %v585 = vsel %vm379, %v583, 0
      %v588 = vsel %vm383, %v573, 0
      %590 = vmatprep.subr.bf16.mxu0 0
      %591 = vmatpush1.bf16.msra.mxu0 %v588
      %592 = vmatprep.subr.bf16.mxu0 0
      %593 = vmatpush1.bf16.msra.mxu0 0
      %594 = vmatprep.subr.bf16.mxu0 0
      %595 = vmatpush1.bf16.msra.mxu0 0
      %596 = vmatprep.subr.bf16.mxu0 0
      %597 = vmatpush1.bf16.msra.mxu0 0
      %598 = vmatprep.subr.bf16.mxu0 0
      %599 = vmatpush1.bf16.msra.mxu0 0
      %600 = vmatprep.subr.bf16.mxu0 0
      %601 = vmatpush1.bf16.msra.mxu0 0
      %602 = vmatprep.subr.bf16.mxu0 0
      %603 = vmatpush1.bf16.msra.mxu0 0
      %604 = vmatprep.subr.bf16.mxu0 0
      %605 = vmatpush1.bf16.msra.mxu0 0
      %606 = vmatprep.subr.bf16.mxu0 0
      %607 = vmatpush1.bf16.msra.mxu0 0
      %608 = vmatprep.subr.bf16.mxu0 0
      %609 = vmatpush1.bf16.msra.mxu0 0
      %610 = vmatprep.subr.bf16.mxu0 0
      %611 = vmatpush1.bf16.msra.mxu0 0
      %612 = vmatprep.subr.bf16.mxu0 0
      %613 = vmatpush1.bf16.msra.mxu0 0
      %614 = vmatprep.subr.bf16.mxu0 0
      %615 = vmatpush1.bf16.msra.mxu0 0
      %616 = vmatprep.subr.bf16.mxu0 0
      %617 = vmatpush1.bf16.msra.mxu0 0
      %618 = vmatprep.subr.bf16.mxu0 0
      %619 = vmatpush1.bf16.msra.mxu0 0
      %620 = vmatprep.subr.bf16.mxu0 0
      %621 = vmatpush1.bf16.msra.mxu0 0
      %622 = vmatprep.mubr.bf16.mxu0 0
      %623 = vmatmul.mubr.bf16.gmra.mrb[0].mxu0 %v585
      %v624 = vpop.f32.mrb[0].mxu0
      %v625 = vadd.f32 0.0, %v624
      %v626 = vpop.f32.mrb[0].mxu0
      %v627 = vpop.f32.mrb[0].mxu0
      %v628 = vpop.f32.mrb[0].mxu0
      %629 = vdwg.mxu0
      %v630 = vadd.f32 %v571, %v625
      %s631 = scalar_lea.vmem %s3, 10
      %v632 = vld [vmem:[%s631] sm:$0x3]
      %v633 = vrot.slane %v576, 1
      %v635 = vsel %vm379, %v633, 0
      %v638 = vsel %vm383, %v632, 0
      %640 = vmatprep.subr.bf16.mxu0 0
      %641 = vmatpush1.bf16.msra.mxu0 %v638
      %642 = vmatprep.subr.bf16.mxu0 0
      %643 = vmatpush1.bf16.msra.mxu0 0
      %644 = vmatprep.subr.bf16.mxu0 0
      %645 = vmatpush1.bf16.msra.mxu0 0
      %646 = vmatprep.subr.bf16.mxu0 0
      %647 = vmatpush1.bf16.msra.mxu0 0
      %648 = vmatprep.subr.bf16.mxu0 0
      %649 = vmatpush1.bf16.msra.mxu0 0
      %650 = vmatprep.subr.bf16.mxu0 0
      %651 = vmatpush1.bf16.msra.mxu0 0
      %652 = vmatprep.subr.bf16.mxu0 0
      %653 = vmatpush1.bf16.msra.mxu0 0
      %654 = vmatprep.subr.bf16.mxu0 0
      %655 = vmatpush1.bf16.msra.mxu0 0
      %656 = vmatprep.subr.bf16.mxu0 0
      %657 = vmatpush1.bf16.msra.mxu0 0
      %658 = vmatprep.subr.bf16.mxu0 0
      %659 = vmatpush1.bf16.msra.mxu0 0
      %660 = vmatprep.subr.bf16.mxu0 0
      %661 = vmatpush1.bf16.msra.mxu0 0
      %662 = vmatprep.subr.bf16.mxu0 0
      %663 = vmatpush1.bf16.msra.mxu0 0
      %664 = vmatprep.subr.bf16.mxu0 0
      %665 = vmatpush1.bf16.msra.mxu0 0
      %666 = vmatprep.subr.bf16.mxu0 0
      %667 = vmatpush1.bf16.msra.mxu0 0
      %668 = vmatprep.subr.bf16.mxu0 0
      %669 = vmatpush1.bf16.msra.mxu0 0
      %670 = vmatprep.subr.bf16.mxu0 0
      %671 = vmatpush1.bf16.msra.mxu0 0
      %672 = vmatprep.mubr.bf16.mxu0 0
      %673 = vmatmul.mubr.bf16.gmra.mrb[0].mxu0 %v635
      %v674 = vpop.f32.mrb[0].mxu0
      %v675 = vadd.f32 0.0, %v674
      %v676 = vpop.f32.mrb[0].mxu0
      %v677 = vpop.f32.mrb[0].mxu0
      %v678 = vpop.f32.mrb[0].mxu0
      %679 = vdwg.mxu0
      %v680 = vadd.f32 %v630, %v675
      %s681 = scalar_lea.vmem %s3, 12
      %v682 = vld [vmem:[%s681] sm:$0x3]
      %v684 = vsel %vm379, %v365, 0
      %v687 = vsel %vm383, %v682, 0
      %689 = vmatprep.subr.bf16.mxu0 0
      %690 = vmatpush1.bf16.msra.mxu0 %v687
      %691 = vmatprep.subr.bf16.mxu0 0
      %692 = vmatpush1.bf16.msra.mxu0 0
      %693 = vmatprep.subr.bf16.mxu0 0
      %694 = vmatpush1.bf16.msra.mxu0 0
      %695 = vmatprep.subr.bf16.mxu0 0
      %696 = vmatpush1.bf16.msra.mxu0 0
      %697 = vmatprep.subr.bf16.mxu0 0
      %698 = vmatpush1.bf16.msra.mxu0 0
      %699 = vmatprep.subr.bf16.mxu0 0
      %700 = vmatpush1.bf16.msra.mxu0 0
      %701 = vmatprep.subr.bf16.mxu0 0
      %702 = vmatpush1.bf16.msra.mxu0 0
      %703 = vmatprep.subr.bf16.mxu0 0
      %704 = vmatpush1.bf16.msra.mxu0 0
      %705 = vmatprep.subr.bf16.mxu0 0
      %706 = vmatpush1.bf16.msra.mxu0 0
      %707 = vmatprep.subr.bf16.mxu0 0
      %708 = vmatpush1.bf16.msra.mxu0 0
      %709 = vmatprep.subr.bf16.mxu0 0
      %710 = vmatpush1.bf16.msra.mxu0 0
      %711 = vmatprep.subr.bf16.mxu0 0
      %712 = vmatpush1.bf16.msra.mxu0 0
      %713 = vmatprep.subr.bf16.mxu0 0
      %714 = vmatpush1.bf16.msra.mxu0 0
      %715 = vmatprep.subr.bf16.mxu0 0
      %716 = vmatpush1.bf16.msra.mxu0 0
      %717 = vmatprep.subr.bf16.mxu0 0
      %718 = vmatpush1.bf16.msra.mxu0 0
      %719 = vmatprep.subr.bf16.mxu0 0
      %720 = vmatpush1.bf16.msra.mxu0 0
      %721 = vmatprep.mubr.bf16.mxu0 0
      %722 = vmatmul.mubr.bf16.gmra.mrb[0].mxu0 %v684
      %v723 = vpop.f32.mrb[0].mxu0
      %v724 = vadd.f32 0.0, %v723
      %v725 = vpop.f32.mrb[0].mxu0
      %v726 = vpop.f32.mrb[0].mxu0
      %v727 = vpop.f32.mrb[0].mxu0
      %728 = vdwg.mxu0
      %v729 = vadd.f32 %v680, %v724
      %s730 = scalar_lea.vmem %s3, 14
      %v731 = vld [vmem:[%s730] sm:$0x3]
      %v733 = vunpack.c.l.b16 %v365
      %v734 = vpack.c.b16 %v733, %v733
      %v736 = vshrl.u32 %v734, 16
      %v738 = vshll.u32 %v734, 16
      %v740 = vrot.slane %v738, 1
      %v741 = vor.u32 %v736, %v740
      %v743 = vsel %vm379, %v741, 0
      %v746 = vsel %vm383, %v731, 0
      %748 = vmatprep.subr.bf16.mxu0 0
      %749 = vmatpush1.bf16.msra.mxu0 %v746
      %750 = vmatprep.subr.bf16.mxu0 0
      %751 = vmatpush1.bf16.msra.mxu0 0
      %752 = vmatprep.subr.bf16.mxu0 0
      %753 = vmatpush1.bf16.msra.mxu0 0
      %754 = vmatprep.subr.bf16.mxu0 0
      %755 = vmatpush1.bf16.msra.mxu0 0
      %756 = vmatprep.subr.bf16.mxu0 0
      %757 = vmatpush1.bf16.msra.mxu0 0
      %758 = vmatprep.subr.bf16.mxu0 0
      %759 = vmatpush1.bf16.msra.mxu0 0
      %760 = vmatprep.subr.bf16.mxu0 0
      %761 = vmatpush1.bf16.msra.mxu0 0
      %762 = vmatprep.subr.bf16.mxu0 0
      %763 = vmatpush1.bf16.msra.mxu0 0
      %764 = vmatprep.subr.bf16.mxu0 0
      %765 = vmatpush1.bf16.msra.mxu0 0
      %766 = vmatprep.subr.bf16.mxu0 0
      %767 = vmatpush1.bf16.msra.mxu0 0
      %768 = vmatprep.subr.bf16.mxu0 0
      %769 = vmatpush1.bf16.msra.mxu0 0
      %770 = vmatprep.subr.bf16.mxu0 0
      %771 = vmatpush1.bf16.msra.mxu0 0
      %772 = vmatprep.subr.bf16.mxu0 0
      %773 = vmatpush1.bf16.msra.mxu0 0
      %774 = vmatprep.subr.bf16.mxu0 0
      %775 = vmatpush1.bf16.msra.mxu0 0
      %776 = vmatprep.subr.bf16.mxu0 0
      %777 = vmatpush1.bf16.msra.mxu0 0
      %778 = vmatprep.subr.bf16.mxu0 0
      %779 = vmatpush1.bf16.msra.mxu0 0
      %780 = vmatprep.mubr.bf16.mxu0 0
      %781 = vmatmul.mubr.bf16.gmra.mrb[0].mxu0 %v743
      %v782 = vpop.f32.mrb[0].mxu0
      %v783 = vadd.f32 0.0, %v782
      %v784 = vpop.f32.mrb[0].mxu0
      %v785 = vpop.f32.mrb[0].mxu0
      %v786 = vpop.f32.mrb[0].mxu0
      %787 = vdwg.mxu0
      %v788 = vadd.f32 %v729, %v783
      %s789 = scalar_lea.vmem %s3, 16
      %v790 = vld [vmem:[%s789] sm:$0x3]
      %v791 = vrot.slane %v734, 1
      %v793 = vsel %vm379, %v791, 0
      %v796 = vsel %vm383, %v790, 0
      %798 = vmatprep.subr.bf16.mxu0 0
      %799 = vmatpush1.bf16.msra.mxu0 %v796
      %800 = vmatprep.subr.bf16.mxu0 0
      %801 = vmatpush1.bf16.msra.mxu0 0
      %802 = vmatprep.subr.bf16.mxu0 0
      %803 = vmatpush1.bf16.msra.mxu0 0
      %804 = vmatprep.subr.bf16.mxu0 0
      %805 = vmatpush1.bf16.msra.mxu0 0
      %806 = vmatprep.subr.bf16.mxu0 0
      %807 = vmatpush1.bf16.msra.mxu0 0
      %808 = vmatprep.subr.bf16.mxu0 0
      %809 = vmatpush1.bf16.msra.mxu0 0
      %810 = vmatprep.subr.bf16.mxu0 0
      %811 = vmatpush1.bf16.msra.mxu0 0
      %812 = vmatprep.subr.bf16.mxu0 0
      %813 = vmatpush1.bf16.msra.mxu0 0
      %814 = vmatprep.subr.bf16.mxu0 0
      %815 = vmatpush1.bf16.msra.mxu0 0
      %816 = vmatprep.subr.bf16.mxu0 0
      %817 = vmatpush1.bf16.msra.mxu0 0
      %818 = vmatprep.subr.bf16.mxu0 0
      %819 = vmatpush1.bf16.msra.mxu0 0
      %820 = vmatprep.subr.bf16.mxu0 0
      %821 = vmatpush1.bf16.msra.mxu0 0
      %822 = vmatprep.subr.bf16.mxu0 0
      %823 = vmatpush1.bf16.msra.mxu0 0
      %824 = vmatprep.subr.bf16.mxu0 0
      %825 = vmatpush1.bf16.msra.mxu0 0
      %826 = vmatprep.subr.bf16.mxu0 0
      %827 = vmatpush1.bf16.msra.mxu0 0
      %828 = vmatprep.subr.bf16.mxu0 0
      %829 = vmatpush1.bf16.msra.mxu0 0
      %830 = vmatprep.mubr.bf16.mxu0 0
      %831 = vmatmul.mubr.bf16.gmra.mrb[0].mxu0 %v793
      %v832 = vpop.f32.mrb[0].mxu0
      %v833 = vadd.f32 0.0, %v832
      %v834 = vpop.f32.mrb[0].mxu0
      %v835 = vpop.f32.mrb[0].mxu0
      %v836 = vpop.f32.mrb[0].mxu0
      %837 = vdwg.mxu0
      %v838 = vadd.f32 %v788, %v833
      %839 = vst [vmem:[%s353] sm:$0x3f] %v838
      %v840 = vld [vmem:[%s5] sm:$0x1]
      %vm841 = vcmask 1045504
      %v842 = vsel %vm841, %v838, 0.0
      %v843 = vrot.slane %v842, 4
      %v844 = vadd.f32 %v842, %v843
      %v845 = vrot.slane %v844, 2
      %v846 = vadd.f32 %v844, %v845
      %v847 = vrot.slane %v846, 1
      %v848 = vadd.f32 %v846, %v847
      %v849 = vadd.f32 %v840, %v848
      %850 = vst [vmem:[%s5] sm:$0x1] %v849
      %v851 = vld [vmem:[%s6] sm:$0x1]
      %v852 = vmul.f32 %v838, %v838
      %v853 = vsel %vm841, %v852, 0.0
      %v854 = vrot.slane %v853, 4
      %v855 = vadd.f32 %v853, %v854
      %v856 = vrot.slane %v855, 2
      %v857 = vadd.f32 %v855, %v856
      %v858 = vrot.slane %v857, 1
      %v859 = vadd.f32 %v857, %v858
      %v860 = vadd.f32 %v851, %v859
      %861 = vst [vmem:[%s6] sm:$0x1] %v860
      %p862 = scmp.lt.s32.totalorder %s22, 1
      %s863 = scalar_select %p862, %s22, 1
      %p864 = scmp.lt.s32.totalorder %s23, 5
      %s865 = scalar_select %p864, %s23, 5
      %s866 = smul.addr %s863, 6
      %s867 = sadd.s32 %s865, %s866
      %s868 = smul.addr %s867, 8
      %s869 = scalar_lea.vmem %s4, %s868
      // Predicated region
      $region41: #{downsample_forward.6} parent=35 // pred_check
        %p870 = pneg %p159
      $region42: #{downsample_forward.6} parent=35 // pred_check_branch
        %872 = sbr.rel (%p870) target = $region44
      $region43: #{downsample_forward.6} parent=35 // pred_region
        _
      $region44: #{downsample_forward.6} parent=35 // pred_fallthru
        _
      // Predicated region
      $region45: #{downsample_forward.6} parent=35 // pred_check
        %p873 = pneg %p180
      $region46: #{downsample_forward.6} parent=35 // pred_check_branch
        %875 = sbr.rel (%p873) target = $region48
      $region47: #{downsample_forward.6} parent=35 // pred_region
        _
      $region48: #{downsample_forward.6} parent=35 // pred_fallthru
        _
      // Predicated region
      $region49: #{downsample_forward.6} parent=35 // pred_check
        %p876 = pneg %p201
      $region50: #{downsample_forward.6} parent=35 // pred_check_branch
        %878 = sbr.rel (%p876) target = $region52
      $region51: #{downsample_forward.6} parent=35 // pred_region
        _
      $region52: #{downsample_forward.6} parent=35 // pred_fallthru
        _
      // Predicated region
      $region53: #{downsample_forward.6} parent=35 // pred_check
        %p879 = pneg %p180
      $region54: #{downsample_forward.6} parent=35 // pred_check_branch
        %881 = sbr.rel (%p879) target = $region56
      $region55: #{downsample_forward.6} parent=35 // pred_region
        _
      $region56: #{downsample_forward.6} parent=35 // pred_fallthru
        _
      // Predicated region
      $region57: #{downsample_forward.6} parent=35 // pred_check
        %p882 = pneg %p201
      $region58: #{downsample_forward.6} parent=35 // pred_check_branch
        %884 = sbr.rel (%p882) target = $region60
      $region59: #{downsample_forward.6} parent=35 // pred_region
        _
      $region60: #{downsample_forward.6} parent=35 // pred_fallthru
        _
    $region36: #{downsample_forward.6} parent=5 // pred_fallthru
      _
    %p885 = scmp.le.s32.totalorder 2, %s13
    // Predicated region
    $region61: #{downsample_forward.6} parent=5 // pred_check
      %p886 = pneg %p885
    $region62: #{downsample_forward.6} parent=5 // pred_check_branch
      %888 = sbr.rel (%p886) target = $region64
    $region63: #{downsample_forward.6} parent=5 // pred_region
      %s889 = ssub.s32 %s13, 2
      // Predicated region
      $region65: #{downsample_forward.6} parent=63 // pred_check
        %p890 = pneg %p165
      $region66: #{downsample_forward.6} parent=63 // pred_check_branch
        %892 = sbr.rel (%p890) target = $region68
      $region67: #{downsample_forward.6} parent=63 // pred_region
        %p893 = scmp.lt.s32.totalorder %s24, 1
        %s894 = scalar_select %p893, %s24, 1
        %p895 = scmp.lt.s32.totalorder %s25, 5
        %s896 = scalar_select %p895, %s25, 5
        %s897 = smul.addr %s894, 6
        %s898 = sadd.s32 %s896, %s897
        %s899 = smul.addr %s898, 8
        %s900 = scalar_lea.vmem %s4, %s899
      $region68: #{downsample_forward.6} parent=63 // pred_fallthru
        _
    $region64: #{downsample_forward.6} parent=5 // pred_fallthru
      _
  $region6: #{downsample_forward.6} parent=0 // loop_footer
    %s17 = sadd.s32 1, %s13
  $region7: #{downsample_forward.6} parent=0 // loop_footer_branch
    %12 = sbr.rel target = $region3
  $region8: #{downsample_forward.6} parent=0 // loop_exit
    _

// kernel: downsample_forward.9
$region0: #{downsample_forward.9}
  #allocation0 [shape = 'u32[]', space=smem, size = 0x4, offset = 0x4, fixed_abs, tag = 'smem constant byte address 0x4 - core index']
  #allocation1 [shape = 'u32[144,128]{1,0:T(1,128)}', space=vmem, size = 0x12000, scoped, tag = 'internal scratch']
  %s0 = inlined_call_operand.vmem [shape: f32[32,128], index: 0, kind: input, shape index: {}]
  %s1 = inlined_call_operand.vmem [shape: f32[1,128], index: 1, kind: input, shape index: {}]
  %s2 = inlined_call_operand.vmem [shape: f32[1,128], index: 2, kind: input, shape index: {}]
  %s3 = inlined_call_operand.vmem [shape: bf16[32,128], index: 3, kind: output, shape index: {}]
  %s4 = sld [smem:[#allocation0]]
  $region22: #{downsample_forward.9} parent=0
    _
  %s6 = ssub.s32 1, %s4
  %s7 = scalar_select 0, %s6, %s4
  // Predicated region
  $region2: #{downsample_forward.9} parent=0 // pred_check
    _
  $region3: #{downsample_forward.9} parent=0 // pred_check_branch
    %9 = sbr.rel (0) target = $region5
  $region4: #{downsample_forward.9} parent=0 // pred_region
    _
  $region5: #{downsample_forward.9} parent=0 // pred_fallthru
    _
  // Predicated region
  $region6: #{downsample_forward.9} parent=0 // pred_check
    _
  $region7: #{downsample_forward.9} parent=0 // pred_check_branch
    %11 = sbr.rel (0) target = $region9
  $region8: #{downsample_forward.9} parent=0 // pred_region
    _
  $region9: #{downsample_forward.9} parent=0 // pred_fallthru
    _
  // Predicated region
  $region10: #{downsample_forward.9} parent=0 // pred_check
    _
  $region11: #{downsample_forward.9} parent=0 // pred_check_branch
    %13 = sbr.rel (0) target = $region13
  $region12: #{downsample_forward.9} parent=0 // pred_region
    _
  $region13: #{downsample_forward.9} parent=0 // pred_fallthru
    _
  %v14 = vld [vmem:[%s0] sm:$0xff]
  %v15 = vld [vmem:[%s0 + $0x8] sm:$0xff]
  %v16 = vld [vmem:[%s0 + $0x10] sm:$0xff]
  %v17 = vld [vmem:[%s0 + $0x18] sm:$0xff]
  %v18 = vld [vmem:[%s1] sm:$0x1]
  %v20 = vlaneseq
  %v21 = vshrl.u32 %v20, 7
  %v22 = vsub.s32 0, %v21
  %v23 = vrot.slane %v18, %v22
  %v25 = vmul.f32 %v14, %v23
  %v26 = vmul.f32 %v15, %v23
  %v27 = vmul.f32 %v16, %v23
  %v28 = vmul.f32 %v17, %v23
  %v29 = vld [vmem:[%s2] sm:$0x1]
  %v31 = vlaneseq
  %v32 = vshrl.u32 %v31, 7
  %v33 = vsub.s32 0, %v32
  %v34 = vrot.slane %v29, %v33
  %v36 = vadd.f32 %v25, %v34
  %v37 = vadd.f32 %v26, %v34
  %v38 = vadd.f32 %v27, %v34
  %v39 = vadd.f32 %v28, %v34
  %v40 = vmax.f32 %v36, 0.0
  %v41 = vmax.f32 %v37, 0.0
  %v42 = vmax.f32 %v38, 0.0
  %v43 = vmax.f32 %v39, 0.0
  %v44 = vpack.c.bf16 %v41, %v40
  %v45 = vpack.c.bf16 %v43, %v42
  %v48 = vunpack.c.l.b16 %v44
  %v49 = vunpack.c.h.b16 %v44
  %v50 = vunpack.c.l.b16 %v45
  %v51 = vunpack.c.h.b16 %v45
  %v52 = vpack.c.b16 %v48, %v48
  %v53 = vpack.c.b16 %v49, %v49
  %v54 = vpack.c.b16 %v50, %v50
  %v55 = vpack.c.b16 %v51, %v51
  %60 = vst [vmem:[%s3] sm:$0xf] %v52
  %61 = vst [vmem:[%s3 + $0x4] sm:$0xf] %v53
  %62 = vst [vmem:[%s3 + $0x8] sm:$0xf] %v54
  %63 = vst [vmem:[%s3 + $0xc] sm:$0xf] %v55
  // Predicated region
  $region14: #{downsample_forward.9} parent=0 // pred_check
    _
  $region15: #{downsample_forward.9} parent=0 // pred_check_branch
    %65 = sbr.rel (0) target = $region17
  $region16: #{downsample_forward.9} parent=0 // pred_region
    _
  $region17: #{downsample_forward.9} parent=0 // pred_fallthru
    _
  // Predicated region
  $region18: #{downsample_forward.9} parent=0 // pred_check
    _
  $region19: #{downsample_forward.9} parent=0 // pred_check_branch
    %67 = sbr.rel (0) target = $region21
  $region20: #{downsample_forward.9} parent=0 // pred_region
    _
  $region21: #{downsample_forward.9} parent=0 // pred_fallthru
    _

// kernel: downsample_forward.8
$region0: #{downsample_forward.8}
  #allocation0 [shape = 'u32[]', space=smem, size = 0x4, offset = 0x4, fixed_abs, tag = 'smem constant byte address 0x4 - core index']
  #allocation1 [shape = 'u32[144,128]{1,0:T(1,128)}', space=vmem, size = 0x12000, scoped, tag = 'internal scratch']
  %s0 = inlined_call_operand.vmem [shape: bf16[2,6,6,128], index: 0, kind: input, shape index: {}, may-alias: {0,1,2}]
  %s1 = inlined_call_operand.vmem [shape: bf16[2,6,6,128], index: 1, kind: input, shape index: {}, may-alias: {0,1,2}]
  %s2 = inlined_call_operand.vmem [shape: bf16[2,6,6,128], index: 2, kind: input, shape index: {}, may-alias: {0,1,2}]
  %s3 = inlined_call_operand.vmem [shape: bf16[9,128,128], index: 3, kind: input, shape index: {}]
  %s4 = inlined_call_operand.vmem [shape: f32[2,4,4,128], index: 4, kind: output, shape index: {0}]
  %s5 = inlined_call_operand.vmem [shape: f32[1,128], index: 5, kind: output, shape index: {1}]
  %s6 = inlined_call_operand.vmem [shape: f32[1,128], index: 6, kind: output, shape index: {2}]
  %7 = xla_tuple %s4, %s5, %s6
  %s8 = sld [smem:[#allocation0]]
  $region69: #{downsample_forward.8} parent=0
    _
  %s10 = ssub.s32 1, %s8
  %s11 = scalar_select 0, %s10, %s8
  loop: start=0, step=1, limit=10
  $region2: #{downsample_forward.8} parent=0 // loop_pre_header
    _
  $region3: #{downsample_forward.8} parent=0 // loop_header
    %s13 = sphi 0, %s17
    %p14 = scmp.ge.s32.totalorder %s13, 10
    %s20 = sphi 0, %s32
    %s21 = sphi 0, %s28
    %s22 = sphi 0, %s20
    %s23 = sphi 0, %s21
    %s24 = sphi 0, %s22
    %s25 = sphi 0, %s23
    %s37 = sphi 0, %s39
    %s40 = sphi 0, %s37
    %s41 = sphi 0, %s40
    %s57 = sphi 0, %s41
    %s67 = sphi 0, %s69
    %s70 = sphi 0, %s67
    %s71 = sphi 0, %s70
    %s87 = sphi 0, %s71
    %s97 = sphi 0, %s99
    %s100 = sphi 0, %s97
    %s101 = sphi 0, %s100
    %s117 = sphi 0, %s101
    %s121 = sphi 0, %s121
    %s123 = sphi 0, %s121
    %s124 = sphi 0, %s123
    %s138 = sphi 0, %s124
    %s146 = sphi 0, %s148
    %s149 = sphi 0, %s146
    %s150 = sphi 0, %s149
    %s166 = sphi 0, %s150
    %s170 = sphi 0, %s170
    %s172 = sphi 0, %s170
    %s173 = sphi 0, %s172
    %s187 = sphi 0, %s173
    %s191 = sphi 0, %s191
    %s193 = sphi 0, %s191
    %s194 = sphi 0, %s193
    %s208 = sphi 0, %s194
  $region4: #{downsample_forward.8} parent=0 // loop_header_branch
    %16 = sbr.rel (%p14) target = $region8
  $region5: #{downsample_forward.8} parent=0 // loop_body
    %s18 = ssub.s32 %s13, 1
    %s19 = ssub.s32 %s13, 2
    %s26 = sadd.s32 1, %s21
    %p27 = scmp.ge.s32.totalorder %s26, 4
    %s28 = scalar_select %p27, 0, %s26
    %s29 = sadd.s32 1, %s20
    %s30 = scalar_select %p27, %s29, %s20
    %p31 = scmp.ge.s32.totalorder %s30, 2
    %s32 = scalar_select %p31, 0, %s30
    %s33 = ssub.s32 %s20, %s32
    %s34 = ssub.s32 %s21, %s28
    %s35 = sor.u32 %s33, %s34
    %p36 = scmp.eq.s32.totalorder %s35, 0
    %s38 = sadd.s32 %s37, 1
    %s39 = scalar_select %p36, %s37, %s38
    %p42 = pneg %p36
    %p43 = scmp.eq.s32.totalorder %s13, 7
    %p44 = por %p42, %p43
    %p45 = scmp.ne.s32.totalorder %s37, %s40
    %p46 = scmp.eq.s32.totalorder %s13, 0
    %p47 = por %p45, %p46
    %p48 = scmp.ne.s32.totalorder %s37, %s40
    %p49 = scmp.eq.s32.totalorder %s18, 7
    %p50 = por %p48, %p49
    %p51 = scmp.ne.s32.totalorder %s40, %s41
    %p52 = scmp.eq.s32.totalorder %s18, 0
    %p53 = por %p51, %p52
    %p54 = scmp.ne.s32.totalorder %s40, %s41
    %p55 = scmp.eq.s32.totalorder %s19, 7
    %p56 = por %p54, %p55
    %p58 = scmp.ne.s32.totalorder %s41, %s57
    %p59 = scmp.eq.s32.totalorder %s19, 0
    %p60 = por %p58, %p59
    %s61 = sadd.s32 %s21, 1
    %s62 = sadd.s32 %s28, 1
    %s63 = ssub.s32 %s20, %s32
    %s64 = ssub.s32 %s61, %s62
    %s65 = sor.u32 %s63, %s64
    %p66 = scmp.eq.s32.totalorder %s65, 0
    %s68 = sadd.s32 %s67, 1
    %s69 = scalar_select %p66, %s67, %s68
    %p72 = pneg %p66
    %p73 = scmp.eq.s32.totalorder %s13, 7
    %p74 = por %p72, %p73
    %p75 = scmp.ne.s32.totalorder %s67, %s70
    %p76 = scmp.eq.s32.totalorder %s13, 0
    %p77 = por %p75, %p76
    %p78 = scmp.ne.s32.totalorder %s67, %s70
    %p79 = scmp.eq.s32.totalorder %s18, 7
    %p80 = por %p78, %p79
    %p81 = scmp.ne.s32.totalorder %s70, %s71
    %p82 = scmp.eq.s32.totalorder %s18, 0
    %p83 = por %p81, %p82
    %p84 = scmp.ne.s32.totalorder %s70, %s71
    %p85 = scmp.eq.s32.totalorder %s19, 7
    %p86 = por %p84, %p85
    %p88 = scmp.ne.s32.totalorder %s71, %s87
    %p89 = scmp.eq.s32.totalorder %s19, 0
    %p90 = por %p88, %p89
    %s91 = sadd.s32 %s21, 2
    %s92 = sadd.s32 %s28, 2
    %s93 = ssub.s32 %s20, %s32
    %s94 = ssub.s32 %s91, %s92
    %s95 = sor.u32 %s93, %s94
    %p96 = scmp.eq.s32.totalorder %s95, 0
    %s98 = sadd.s32 %s97, 1
    %s99 = scalar_select %p96, %s97, %s98
    %p102 = pneg %p96
    %p103 = scmp.eq.s32.totalorder %s13, 7
    %p104 = por %p102, %p103
    %p105 = scmp.ne.s32.totalorder %s97, %s100
    %p106 = scmp.eq.s32.totalorder %s13, 0
    %p107 = por %p105, %p106
    %p108 = scmp.ne.s32.totalorder %s97, %s100
    %p109 = scmp.eq.s32.totalorder %s18, 7
    %p110 = por %p108, %p109
    %p111 = scmp.ne.s32.totalorder %s100, %s101
    %p112 = scmp.eq.s32.totalorder %s18, 0
    %p113 = por %p111, %p112
    %p114 = scmp.ne.s32.totalorder %s100, %s101
    %p115 = scmp.eq.s32.totalorder %s19, 7
    %p116 = por %p114, %p115
    %p118 = scmp.ne.s32.totalorder %s101, %s117
    %p119 = scmp.eq.s32.totalorder %s19, 0
    %p120 = por %p118, %p119
    %s122 = sadd.s32 %s121, 1
    %p125 = scmp.eq.s32.totalorder %s13, 7
    %p126 = scmp.ne.s32.totalorder %s121, %s123
    %p127 = scmp.eq.s32.totalorder %s13, 0
    %p128 = por %p126, %p127
    %p129 = scmp.ne.s32.totalorder %s121, %s123
    %p130 = scmp.eq.s32.totalorder %s18, 7
    %p131 = por %p129, %p130
    %p132 = scmp.ne.s32.totalorder %s123, %s124
    %p133 = scmp.eq.s32.totalorder %s18, 0
    %p134 = por %p132, %p133
    %p135 = scmp.ne.s32.totalorder %s123, %s124
    %p136 = scmp.eq.s32.totalorder %s19, 7
    %p137 = por %p135, %p136
    %p139 = scmp.ne.s32.totalorder %s124, %s138
    %p140 = scmp.eq.s32.totalorder %s19, 0
    %p141 = por %p139, %p140
    %s142 = ssub.s32 %s20, %s32
    %s143 = ssub.s32 %s21, %s28
    %s144 = sor.u32 %s142, %s143
    %p145 = scmp.eq.s32.totalorder %s144, 0
    %s147 = sadd.s32 %s146, 1
    %s148 = scalar_select %p145, %s146, %s147
    %p151 = pneg %p145
    %p152 = scmp.eq.s32.totalorder %s13, 7
    %p153 = por %p151, %p152
    %p154 = scmp.ne.s32.totalorder %s146, %s149
    %p155 = scmp.eq.s32.totalorder %s13, 0
    %p156 = por %p154, %p155
    %p157 = scmp.ne.s32.totalorder %s146, %s149
    %p158 = scmp.eq.s32.totalorder %s18, 7
    %p159 = por %p157, %p158
    %p160 = scmp.ne.s32.totalorder %s149, %s150
    %p161 = scmp.eq.s32.totalorder %s18, 0
    %p162 = por %p160, %p161
    %p163 = scmp.ne.s32.totalorder %s149, %s150
    %p164 = scmp.eq.s32.totalorder %s19, 7
    %p165 = por %p163, %p164
    %p167 = scmp.ne.s32.totalorder %s150, %s166
    %p168 = scmp.eq.s32.totalorder %s19, 0
    %p169 = por %p167, %p168
    %s171 = sadd.s32 %s170, 1
    %p174 = scmp.eq.s32.totalorder %s13, 7
    %p175 = scmp.ne.s32.totalorder %s170, %s172
    %p176 = scmp.eq.s32.totalorder %s13, 0
    %p177 = por %p175, %p176
    %p178 = scmp.ne.s32.totalorder %s170, %s172
    %p179 = scmp.eq.s32.totalorder %s18, 7
    %p180 = por %p178, %p179
    %p181 = scmp.ne.s32.totalorder %s172, %s173
    %p182 = scmp.eq.s32.totalorder %s18, 0
    %p183 = por %p181, %p182
    %p184 = scmp.ne.s32.totalorder %s172, %s173
    %p185 = scmp.eq.s32.totalorder %s19, 7
    %p186 = por %p184, %p185
    %p188 = scmp.ne.s32.totalorder %s173, %s187
    %p189 = scmp.eq.s32.totalorder %s19, 0
    %p190 = por %p188, %p189
    %s192 = sadd.s32 %s191, 1
    %p195 = scmp.eq.s32.totalorder %s13, 7
    %p196 = scmp.ne.s32.totalorder %s191, %s193
    %p197 = scmp.eq.s32.totalorder %s13, 0
    %p198 = por %p196, %p197
    %p199 = scmp.ne.s32.totalorder %s191, %s193
    %p200 = scmp.eq.s32.totalorder %s18, 7
    %p201 = por %p199, %p200
    %p202 = scmp.ne.s32.totalorder %s193, %s194
    %p203 = scmp.eq.s32.totalorder %s18, 0
    %p204 = por %p202, %p203
    %p205 = scmp.ne.s32.totalorder %s193, %s194
    %p206 = scmp.eq.s32.totalorder %s19, 7
    %p207 = por %p205, %p206
    %p209 = scmp.ne.s32.totalorder %s194, %s208
    %p210 = scmp.eq.s32.totalorder %s19, 0
    %p211 = por %p209, %p210
    %p212 = scmp.le.s32.totalorder 1, %s13
    %p213 = scmp.lt.s32.totalorder %s13, 9
    %p214 = pnand %p212, %p213
    %p215 = pneg %p214
    // Predicated region
    $region9: #{downsample_forward.8} parent=5 // pred_check
      _
    $region10: #{downsample_forward.8} parent=5 // pred_check_branch
      %217 = sbr.rel (%p214) target = $region12
    $region11: #{downsample_forward.8} parent=5 // pred_region
      %s218 = ssub.s32 %s13, 1
      // Predicated region
      $region13: #{downsample_forward.8} parent=11 // pred_check
        %p219 = pneg %p134
      $region14: #{downsample_forward.8} parent=11 // pred_check_branch
        %221 = sbr.rel (%p219) target = $region16
      $region15: #{downsample_forward.8} parent=11 // pred_region
        _
      $region16: #{downsample_forward.8} parent=11 // pred_fallthru
        _
    $region12: #{downsample_forward.8} parent=5 // pred_fallthru
      _
    %p222 = scmp.lt.s32.totalorder %s13, 8
    // Predicated region
    $region17: #{downsample_forward.8} parent=5 // pred_check
      %p223 = pneg %p222
    $region18: #{downsample_forward.8} parent=5 // pred_check_branch
      %225 = sbr.rel (%p223) target = $region20
    $region19: #{downsample_forward.8} parent=5 // pred_region
      // Predicated region
      $region21: #{downsample_forward.8} parent=19 // pred_check
        %p226 = pneg %p47
      $region22: #{downsample_forward.8} parent=19 // pred_check_branch
        %228 = sbr.rel (%p226) target = $region24
      $region23: #{downsample_forward.8} parent=19 // pred_region
        %p229 = scmp.lt.s32.totalorder %s20, 1
        %s230 = scalar_select %p229, %s20, 1
        %p231 = scmp.lt.s32.totalorder %s21, 5
        %s232 = scalar_select %p231, %s21, 5
        %s233 = smul.addr %s230, 6
        %s234 = sadd.s32 %s232, %s233
        %s235 = smul.addr %s234, 4
        %s236 = scalar_lea.vmem %s0, %s235
      $region24: #{downsample_forward.8} parent=19 // pred_fallthru
        _
      // Predicated region
      $region25: #{downsample_forward.8} parent=19 // pred_check
        %p237 = pneg %p77
      $region26: #{downsample_forward.8} parent=19 // pred_check_branch
        %239 = sbr.rel (%p237) target = $region28
      $region27: #{downsample_forward.8} parent=19 // pred_region
        %s240 = sadd.s32 %s21, 1
        %p241 = scmp.lt.s32.totalorder %s20, 1
        %s242 = scalar_select %p241, %s20, 1
        %p243 = scmp.lt.s32.totalorder %s240, 5
        %s244 = scalar_select %p243, %s240, 5
        %s245 = smul.addr %s242, 6
        %s246 = sadd.s32 %s244, %s245
        %s247 = smul.addr %s246, 4
        %s248 = scalar_lea.vmem %s1, %s247
        %s249 = sadd.s32 %s21, 1
      $region28: #{downsample_forward.8} parent=19 // pred_fallthru
        _
      // Predicated region
      $region29: #{downsample_forward.8} parent=19 // pred_check
        %p250 = pneg %p107
      $region30: #{downsample_forward.8} parent=19 // pred_check_branch
        %252 = sbr.rel (%p250) target = $region32
      $region31: #{downsample_forward.8} parent=19 // pred_region
        %s253 = sadd.s32 %s21, 2
        %p254 = scmp.lt.s32.totalorder %s20, 1
        %s255 = scalar_select %p254, %s20, 1
        %p256 = scmp.lt.s32.totalorder %s253, 5
        %s257 = scalar_select %p256, %s253, 5
        %s258 = smul.addr %s255, 6
        %s259 = sadd.s32 %s257, %s258
        %s260 = smul.addr %s259, 4
        %s261 = scalar_lea.vmem %s2, %s260
        %s262 = sadd.s32 %s21, 2
      $region32: #{downsample_forward.8} parent=19 // pred_fallthru
        _
    $region20: #{downsample_forward.8} parent=5 // pred_fallthru
      _
    %p263 = scmp.le.s32.totalorder 1, %s13
    %p264 = scmp.lt.s32.totalorder %s13, 9
    %p265 = pnand %p263, %p264
    %p266 = pneg %p265
    // Predicated region
    $region33: #{downsample_forward.8} parent=5 // pred_check
      _
    $region34: #{downsample_forward.8} parent=5 // pred_check_branch
      %268 = sbr.rel (%p265) target = $region36
    $region35: #{downsample_forward.8} parent=5 // pred_region
      %s269 = ssub.s32 %s13, 1
      %p270 = scmp.lt.s32.totalorder %s22, 1
      %s271 = scalar_select %p270, %s22, 1
      %p272 = scmp.lt.s32.totalorder %s23, 5
      %s273 = scalar_select %p272, %s23, 5
      %s274 = smul.addr %s271, 6
      %s275 = sadd.s32 %s273, %s274
      %s276 = smul.addr %s275, 4
      %s277 = scalar_lea.vmem %s0, %s276
      %p278 = pneg %p53
      %p279 = pneg %p50
      %s280 = sadd.s32 %s23, 1
      %p281 = scmp.lt.s32.totalorder %s22, 1
      %s282 = scalar_select %p281, %s22, 1
      %p283 = scmp.lt.s32.totalorder %s280, 5
      %s284 = scalar_select %p283, %s280, 5
      %s285 = smul.addr %s282, 6
      %s286 = sadd.s32 %s284, %s285
      %s287 = smul.addr %s286, 4
      %s288 = scalar_lea.vmem %s1, %s287
      %p289 = pneg %p83
      %p290 = pneg %p80
      %s291 = sadd.s32 %s23, 2
      %p292 = scmp.lt.s32.totalorder %s22, 1
      %s293 = scalar_select %p292, %s22, 1
      %p294 = scmp.lt.s32.totalorder %s291, 5
      %s295 = scalar_select %p294, %s291, 5
      %s296 = smul.addr %s293, 6
      %s297 = sadd.s32 %s295, %s296
      %s298 = smul.addr %s297, 4
      %s299 = scalar_lea.vmem %s2, %s298
      %p300 = pneg %p113
      %p301 = pneg %p110
      %p302 = pneg %p134
      %p303 = pneg %p131
      %p304 = pneg %p162
      %p305 = pneg %p159
      %p306 = scmp.lt.s32.totalorder %s22, 1
      %s307 = scalar_select %p306, %s22, 1
      %p308 = scmp.lt.s32.totalorder %s23, 3
      %s309 = scalar_select %p308, %s23, 3
      %s310 = smul.addr %s307, 4
      %s311 = sadd.s32 %s309, %s310
      %s312 = smul.addr %s311, 4
      %s313 = scalar_lea.vmem %s4, %s312
      %p314 = pneg %p183
      %p315 = pneg %p180
      %p316 = pneg %p204
      %p317 = pneg %p201
      %p318 = scmp.lt.s32.totalorder %s22, 1
      %s319 = scalar_select %p318, %s22, 1
      %p320 = scmp.lt.s32.totalorder %s23, 5
      %s321 = scalar_select %p320, %s23, 5
      %s322 = smul.addr %s319, 6
      %s323 = sadd.s32 %s321, %s322
      %s324 = smul.addr %s323, 4
      %s325 = scalar_lea.vmem %s0, %s324
      %s326 = sadd.s32 %s23, 1
      %p327 = scmp.lt.s32.totalorder %s22, 1
      %s328 = scalar_select %p327, %s22, 1
      %p329 = scmp.lt.s32.totalorder %s326, 5
      %s330 = scalar_select %p329, %s326, 5
      %s331 = smul.addr %s328, 6
      %s332 = sadd.s32 %s330, %s331
      %s333 = smul.addr %s332, 4
      %s334 = scalar_lea.vmem %s1, %s333
      %s335 = sadd.s32 %s23, 1
      %s336 = sadd.s32 %s23, 2
      %p337 = scmp.lt.s32.totalorder %s22, 1
      %s338 = scalar_select %p337, %s22, 1
      %p339 = scmp.lt.s32.totalorder %s336, 5
      %s340 = scalar_select %p339, %s336, 5
      %s341 = smul.addr %s338, 6
      %s342 = sadd.s32 %s340, %s341
      %s343 = smul.addr %s342, 4
      %s344 = scalar_lea.vmem %s2, %s343
      %s345 = sadd.s32 %s23, 2
      %p346 = scmp.lt.s32.totalorder %s22, 1
      %s347 = scalar_select %p346, %s22, 1
      %p348 = scmp.lt.s32.totalorder %s23, 3
      %s349 = scalar_select %p348, %s23, 3
      %s350 = smul.addr %s347, 4
      %s351 = sadd.s32 %s349, %s350
      %s352 = smul.addr %s351, 4
      %s353 = scalar_lea.vmem %s4, %s352
      %p355 = scmp.eq.s32.totalorder %s22, 0
      %p356 = scmp.eq.s32.totalorder %s23, 0
      %p357 = pnand %p355, %p356
      %p358 = pneg %p357
      // Predicated region
      $region37: #{downsample_forward.8} parent=35 // pred_check
        _
      $region38: #{downsample_forward.8} parent=35 // pred_check_branch
        %360 = sbr.rel (%p357) target = $region40
      $region39: #{downsample_forward.8} parent=35 // pred_region
        %361 = vst [vmem:[%s5] sm:$0x1] 0.0
        %362 = vst [vmem:[%s6] sm:$0x1] 0.0
      $region40: #{downsample_forward.8} parent=35 // pred_fallthru
        _
      %v363 = vld [vmem:[%s325] sm:$0x7]
      %v364 = vld [vmem:[%s334] sm:$0x7]
      %v365 = vld [vmem:[%s344] sm:$0x7]
      %v366 = vld [vmem:[%s3] sm:$0xf]
      %v367 = vld [vmem:[%s3 + $0x4] sm:$0xf]
      %v368 = vld [vmem:[%s3 + $0x8] sm:$0xf]
      %v369 = vld [vmem:[%s3 + $0xc] sm:$0xf]
      %v370 = vld [vmem:[%s3 + $0x10] sm:$0xf]
      %v371 = vld [vmem:[%s3 + $0x14] sm:$0xf]
      %v372 = vld [vmem:[%s3 + $0x18] sm:$0xf]
      %v373 = vld [vmem:[%s3 + $0x1c] sm:$0xf]
      %v374 = vld [vmem:[%s3 + $0x20] sm:$0xf]
      %v375 = vld [vmem:[%s3 + $0x24] sm:$0xf]
      %v376 = vld [vmem:[%s3 + $0x28] sm:$0xf]
      %v377 = vld [vmem:[%s3 + $0x2c] sm:$0xf]
      %v378 = vld [vmem:[%s3 + $0x30] sm:$0xf]
      %v379 = vld [vmem:[%s3 + $0x34] sm:$0xf]
      %v380 = vld [vmem:[%s3 + $0x38] sm:$0xf]
      %v381 = vld [vmem:[%s3 + $0x3c] sm:$0xf]
      %s382 = scalar_lea.vmem %s3, 64
      %v383 = vld [vmem:[%s382] sm:$0xf]
      %v384 = vld [vmem:[%s382 + $0x4] sm:$0xf]
      %v385 = vld [vmem:[%s382 + $0x8] sm:$0xf]
      %v386 = vld [vmem:[%s382 + $0xc] sm:$0xf]
      %v387 = vld [vmem:[%s382 + $0x10] sm:$0xf]
      %v388 = vld [vmem:[%s382 + $0x14] sm:$0xf]
      %v389 = vld [vmem:[%s382 + $0x18] sm:$0xf]
      %v390 = vld [vmem:[%s382 + $0x1c] sm:$0xf]
      %v391 = vld [vmem:[%s382 + $0x20] sm:$0xf]
      %v392 = vld [vmem:[%s382 + $0x24] sm:$0xf]
      %v393 = vld [vmem:[%s382 + $0x28] sm:$0xf]
      %v394 = vld [vmem:[%s382 + $0x2c] sm:$0xf]
      %v395 = vld [vmem:[%s382 + $0x30] sm:$0xf]
      %v396 = vld [vmem:[%s382 + $0x34] sm:$0xf]
      %v397 = vld [vmem:[%s382 + $0x38] sm:$0xf]
      %v398 = vld [vmem:[%s382 + $0x3c] sm:$0xf]
      %v400 = vunpack.c.l.b16 %v363
      %v401 = vpack.c.b16 %v400, %v400
      %v403 = vshrl.u32 %v401, 16
      %v405 = vshll.u32 %v401, 16
      %v407 = vrot.slane %v405, 1
      %v408 = vor.u32 %v403, %v407
      %v426 = vunpack.c.l.b16 %v383
      %v427 = vunpack.c.l.b16 %v384
      %v428 = vunpack.c.l.b16 %v385
      %v429 = vunpack.c.l.b16 %v386
      %v430 = vunpack.c.l.b16 %v387
      %v431 = vunpack.c.l.b16 %v388
      %v432 = vunpack.c.l.b16 %v389
      %v433 = vunpack.c.l.b16 %v390
      %v434 = vunpack.c.l.b16 %v391
      %v435 = vunpack.c.l.b16 %v392
      %v436 = vunpack.c.l.b16 %v393
      %v437 = vunpack.c.l.b16 %v394
      %v438 = vunpack.c.l.b16 %v395
      %v439 = vunpack.c.l.b16 %v396
      %v440 = vunpack.c.l.b16 %v397
      %v441 = vunpack.c.l.b16 %v398
      %v442 = vpack.c.b16 %v427, %v426
      %v443 = vpack.c.b16 %v429, %v428
      %v444 = vpack.c.b16 %v431, %v430
      %v445 = vpack.c.b16 %v433, %v432
      %v446 = vpack.c.b16 %v435, %v434
      %v447 = vpack.c.b16 %v437, %v436
      %v448 = vpack.c.b16 %v439, %v438
      %v449 = vpack.c.b16 %v441, %v440
      %458 = vmatprep.subr.bf16.mxu0 0
      %459 = vmatpush1.bf16.msra.mxu0 %v442
      %460 = vmatprep.subr.bf16.mxu0 0
      %461 = vmatpush1.bf16.msra.mxu0 %v443
      %462 = vmatprep.subr.bf16.mxu0 0
      %463 = vmatpush1.bf16.msra.mxu0 %v444
      %464 = vmatprep.subr.bf16.mxu0 0
      %465 = vmatpush1.bf16.msra.mxu0 %v445
      %466 = vmatprep.subr.bf16.mxu0 0
      %467 = vmatpush1.bf16.msra.mxu0 %v446
      %468 = vmatprep.subr.bf16.mxu0 0
      %469 = vmatpush1.bf16.msra.mxu0 %v447
      %470 = vmatprep.subr.bf16.mxu0 0
      %471 = vmatpush1.bf16.msra.mxu0 %v448
      %472 = vmatprep.subr.bf16.mxu0 0
      %473 = vmatpush1.bf16.msra.mxu0 %v449
      %474 = vmatprep.subr.bf16.mxu0 0
      %475 = vmatpush1.bf16.msra.mxu0 0
      %476 = vmatprep.subr.bf16.mxu0 0
      %477 = vmatpush1.bf16.msra.mxu0 0
      %478 = vmatprep.subr.bf16.mxu0 0
      %479 = vmatpush1.bf16.msra.mxu0 0
      %480 = vmatprep.subr.bf16.mxu0 0
      %481 = vmatpush1.bf16.msra.mxu0 0
      %482 = vmatprep.subr.bf16.mxu0 0
      %483 = vmatpush1.bf16.msra.mxu0 0
      %484 = vmatprep.subr.bf16.mxu0 0
      %485 = vmatpush1.bf16.msra.mxu0 0
      %486 = vmatprep.subr.bf16.mxu0 0
      %487 = vmatpush1.bf16.msra.mxu0 0
      %488 = vmatprep.subr.bf16.mxu0 0
      %489 = vmatpush1.bf16.msra.mxu0 0
      %490 = vmatprep.mubr.bf16.mxu0 0
      %491 = vmatmul.mubr.bf16.gmra.mrb[0].mxu0 %v408
      %v492 = vpop.f32.mrb[0].mxu0
      %v493 = vadd.f32 0.0, %v492
      %v494 = vpop.f32.mrb[0].mxu0
      %v495 = vpop.f32.mrb[0].mxu0
      %v496 = vpop.f32.mrb[0].mxu0
      %497 = vdwg.mxu0
      %v514 = vunpack.c.l.b16 %v366
      %v515 = vunpack.c.l.b16 %v367
      %v516 = vunpack.c.l.b16 %v368
      %v517 = vunpack.c.l.b16 %v369
      %v518 = vunpack.c.l.b16 %v370
      %v519 = vunpack.c.l.b16 %v371
      %v520 = vunpack.c.l.b16 %v372
      %v521 = vunpack.c.l.b16 %v373
      %v522 = vunpack.c.l.b16 %v374
      %v523 = vunpack.c.l.b16 %v375
      %v524 = vunpack.c.l.b16 %v376
      %v525 = vunpack.c.l.b16 %v377
      %v526 = vunpack.c.l.b16 %v378
      %v527 = vunpack.c.l.b16 %v379
      %v528 = vunpack.c.l.b16 %v380
      %v529 = vunpack.c.l.b16 %v381
      %v530 = vpack.c.b16 %v515, %v514
      %v531 = vpack.c.b16 %v517, %v516
      %v532 = vpack.c.b16 %v519, %v518
      %v533 = vpack.c.b16 %v521, %v520
      %v534 = vpack.c.b16 %v523, %v522
      %v535 = vpack.c.b16 %v525, %v524
      %v536 = vpack.c.b16 %v527, %v526
      %v537 = vpack.c.b16 %v529, %v528
      %546 = vmatprep.subr.bf16.mxu0 0
      %547 = vmatpush1.bf16.msra.mxu0 %v530
      %548 = vmatprep.subr.bf16.mxu0 0
      %549 = vmatpush1.bf16.msra.mxu0 %v531
      %550 = vmatprep.subr.bf16.mxu0 0
      %551 = vmatpush1.bf16.msra.mxu0 %v532
      %552 = vmatprep.subr.bf16.mxu0 0
      %553 = vmatpush1.bf16.msra.mxu0 %v533
      %554 = vmatprep.subr.bf16.mxu0 0
      %555 = vmatpush1.bf16.msra.mxu0 %v534
      %556 = vmatprep.subr.bf16.mxu0 0
      %557 = vmatpush1.bf16.msra.mxu0 %v535
      %558 = vmatprep.subr.bf16.mxu0 0
      %559 = vmatpush1.bf16.msra.mxu0 %v536
      %560 = vmatprep.subr.bf16.mxu0 0
      %561 = vmatpush1.bf16.msra.mxu0 %v537
      %562 = vmatprep.subr.bf16.mxu0 0
      %563 = vmatpush1.bf16.msra.mxu0 0
      %564 = vmatprep.subr.bf16.mxu0 0
      %565 = vmatpush1.bf16.msra.mxu0 0
      %566 = vmatprep.subr.bf16.mxu0 0
      %567 = vmatpush1.bf16.msra.mxu0 0
      %568 = vmatprep.subr.bf16.mxu0 0
      %569 = vmatpush1.bf16.msra.mxu0 0
      %570 = vmatprep.subr.bf16.mxu0 0
      %571 = vmatpush1.bf16.msra.mxu0 0
      %572 = vmatprep.subr.bf16.mxu0 0
      %573 = vmatpush1.bf16.msra.mxu0 0
      %574 = vmatprep.subr.bf16.mxu0 0
      %575 = vmatpush1.bf16.msra.mxu0 0
      %576 = vmatprep.subr.bf16.mxu0 0
      %577 = vmatpush1.bf16.msra.mxu0 0
      %578 = vmatprep.mubr.bf16.mxu0 0
      %579 = vmatmul.mubr.bf16.gmra.mrb[0].mxu0 %v363
      %v580 = vpop.f32.mrb[0].mxu0
      %v581 = vadd.f32 %v493, %v580
      %v582 = vpop.f32.mrb[0].mxu0
      %v583 = vpop.f32.mrb[0].mxu0
      %v584 = vpop.f32.mrb[0].mxu0
      %585 = vdwg.mxu0
      %s586 = scalar_lea.vmem %s3, 128
      %v587 = vld [vmem:[%s586] sm:$0xf]
      %v588 = vld [vmem:[%s586 + $0x4] sm:$0xf]
      %v589 = vld [vmem:[%s586 + $0x8] sm:$0xf]
      %v590 = vld [vmem:[%s586 + $0xc] sm:$0xf]
      %v591 = vld [vmem:[%s586 + $0x10] sm:$0xf]
      %v592 = vld [vmem:[%s586 + $0x14] sm:$0xf]
      %v593 = vld [vmem:[%s586 + $0x18] sm:$0xf]
      %v594 = vld [vmem:[%s586 + $0x1c] sm:$0xf]
      %v595 = vld [vmem:[%s586 + $0x20] sm:$0xf]
      %v596 = vld [vmem:[%s586 + $0x24] sm:$0xf]
      %v597 = vld [vmem:[%s586 + $0x28] sm:$0xf]
      %v598 = vld [vmem:[%s586 + $0x2c] sm:$0xf]
      %v599 = vld [vmem:[%s586 + $0x30] sm:$0xf]
      %v600 = vld [vmem:[%s586 + $0x34] sm:$0xf]
      %v601 = vld [vmem:[%s586 + $0x38] sm:$0xf]
      %v602 = vld [vmem:[%s586 + $0x3c] sm:$0xf]
      %v603 = vrot.slane %v401, 1
      %v621 = vunpack.c.l.b16 %v587
      %v622 = vunpack.c.l.b16 %v588
      %v623 = vunpack.c.l.b16 %v589
      %v624 = vunpack.c.l.b16 %v590
      %v625 = vunpack.c.l.b16 %v591
      %v626 = vunpack.c.l.b16 %v592
      %v627 = vunpack.c.l.b16 %v593
      %v628 = vunpack.c.l.b16 %v594
      %v629 = vunpack.c.l.b16 %v595
      %v630 = vunpack.c.l.b16 %v596
      %v631 = vunpack.c.l.b16 %v597
      %v632 = vunpack.c.l.b16 %v598
      %v633 = vunpack.c.l.b16 %v599
      %v634 = vunpack.c.l.b16 %v600
      %v635 = vunpack.c.l.b16 %v601
      %v636 = vunpack.c.l.b16 %v602
      %v637 = vpack.c.b16 %v622, %v621
      %v638 = vpack.c.b16 %v624, %v623
      %v639 = vpack.c.b16 %v626, %v625
      %v640 = vpack.c.b16 %v628, %v627
      %v641 = vpack.c.b16 %v630, %v629
      %v642 = vpack.c.b16 %v632, %v631
      %v643 = vpack.c.b16 %v634, %v633
      %v644 = vpack.c.b16 %v636, %v635
      %653 = vmatprep.subr.bf16.mxu0 0
      %654 = vmatpush1.bf16.msra.mxu0 %v637
      %655 = vmatprep.subr.bf16.mxu0 0
      %656 = vmatpush1.bf16.msra.mxu0 %v638
      %657 = vmatprep.subr.bf16.mxu0 0
      %658 = vmatpush1.bf16.msra.mxu0 %v639
      %659 = vmatprep.subr.bf16.mxu0 0
      %660 = vmatpush1.bf16.msra.mxu0 %v640
      %661 = vmatprep.subr.bf16.mxu0 0
      %662 = vmatpush1.bf16.msra.mxu0 %v641
      %663 = vmatprep.subr.bf16.mxu0 0
      %664 = vmatpush1.bf16.msra.mxu0 %v642
      %665 = vmatprep.subr.bf16.mxu0 0
      %666 = vmatpush1.bf16.msra.mxu0 %v643
      %667 = vmatprep.subr.bf16.mxu0 0
      %668 = vmatpush1.bf16.msra.mxu0 %v644
      %669 = vmatprep.subr.bf16.mxu0 0
      %670 = vmatpush1.bf16.msra.mxu0 0
      %671 = vmatprep.subr.bf16.mxu0 0
      %672 = vmatpush1.bf16.msra.mxu0 0
      %673 = vmatprep.subr.bf16.mxu0 0
      %674 = vmatpush1.bf16.msra.mxu0 0
      %675 = vmatprep.subr.bf16.mxu0 0
      %676 = vmatpush1.bf16.msra.mxu0 0
      %677 = vmatprep.subr.bf16.mxu0 0
      %678 = vmatpush1.bf16.msra.mxu0 0
      %679 = vmatprep.subr.bf16.mxu0 0
      %680 = vmatpush1.bf16.msra.mxu0 0
      %681 = vmatprep.subr.bf16.mxu0 0
      %682 = vmatpush1.bf16.msra.mxu0 0
      %683 = vmatprep.subr.bf16.mxu0 0
      %684 = vmatpush1.bf16.msra.mxu0 0
      %685 = vmatprep.mubr.bf16.mxu0 0
      %686 = vmatmul.mubr.bf16.gmra.mrb[0].mxu0 %v603
      %v687 = vpop.f32.mrb[0].mxu0
      %v688 = vadd.f32 0.0, %v687
      %v689 = vpop.f32.mrb[0].mxu0
      %v690 = vpop.f32.mrb[0].mxu0
      %v691 = vpop.f32.mrb[0].mxu0
      %692 = vdwg.mxu0
      %v693 = vadd.f32 %v581, %v688
      %s694 = scalar_lea.vmem %s3, 192
      %v695 = vld [vmem:[%s694] sm:$0xf]
      %v696 = vld [vmem:[%s694 + $0x4] sm:$0xf]
      %v697 = vld [vmem:[%s694 + $0x8] sm:$0xf]
      %v698 = vld [vmem:[%s694 + $0xc] sm:$0xf]
      %v699 = vld [vmem:[%s694 + $0x10] sm:$0xf]
      %v700 = vld [vmem:[%s694 + $0x14] sm:$0xf]
      %v701 = vld [vmem:[%s694 + $0x18] sm:$0xf]
      %v702 = vld [vmem:[%s694 + $0x1c] sm:$0xf]
      %v703 = vld [vmem:[%s694 + $0x20] sm:$0xf]
      %v704 = vld [vmem:[%s694 + $0x24] sm:$0xf]
      %v705 = vld [vmem:[%s694 + $0x28] sm:$0xf]
      %v706 = vld [vmem:[%s694 + $0x2c] sm:$0xf]
      %v707 = vld [vmem:[%s694 + $0x30] sm:$0xf]
      %v708 = vld [vmem:[%s694 + $0x34] sm:$0xf]
      %v709 = vld [vmem:[%s694 + $0x38] sm:$0xf]
      %v710 = vld [vmem:[%s694 + $0x3c] sm:$0xf]
      %v727 = vunpack.c.l.b16 %v695
      %v728 = vunpack.c.l.b16 %v696
      %v729 = vunpack.c.l.b16 %v697
      %v730 = vunpack.c.l.b16 %v698
      %v731 = vunpack.c.l.b16 %v699
      %v732 = vunpack.c.l.b16 %v700
      %v733 = vunpack.c.l.b16 %v701
      %v734 = vunpack.c.l.b16 %v702
      %v735 = vunpack.c.l.b16 %v703
      %v736 = vunpack.c.l.b16 %v704
      %v737 = vunpack.c.l.b16 %v705
      %v738 = vunpack.c.l.b16 %v706
      %v739 = vunpack.c.l.b16 %v707
      %v740 = vunpack.c.l.b16 %v708
      %v741 = vunpack.c.l.b16 %v709
      %v742 = vunpack.c.l.b16 %v710
      %v743 = vpack.c.b16 %v728, %v727
      %v744 = vpack.c.b16 %v730, %v729
      %v745 = vpack.c.b16 %v732, %v731
      %v746 = vpack.c.b16 %v734, %v733
      %v747 = vpack.c.b16 %v736, %v735
      %v748 = vpack.c.b16 %v738, %v737
      %v749 = vpack.c.b16 %v740, %v739
      %v750 = vpack.c.b16 %v742, %v741
      %759 = vmatprep.subr.bf16.mxu0 0
      %760 = vmatpush1.bf16.msra.mxu0 %v743
      %761 = vmatprep.subr.bf16.mxu0 0
      %762 = vmatpush1.bf16.msra.mxu0 %v744
      %763 = vmatprep.subr.bf16.mxu0 0
      %764 = vmatpush1.bf16.msra.mxu0 %v745
      %765 = vmatprep.subr.bf16.mxu0 0
      %766 = vmatpush1.bf16.msra.mxu0 %v746
      %767 = vmatprep.subr.bf16.mxu0 0
      %768 = vmatpush1.bf16.msra.mxu0 %v747
      %769 = vmatprep.subr.bf16.mxu0 0
      %770 = vmatpush1.bf16.msra.mxu0 %v748
      %771 = vmatprep.subr.bf16.mxu0 0
      %772 = vmatpush1.bf16.msra.mxu0 %v749
      %773 = vmatprep.subr.bf16.mxu0 0
      %774 = vmatpush1.bf16.msra.mxu0 %v750
      %775 = vmatprep.subr.bf16.mxu0 0
      %776 = vmatpush1.bf16.msra.mxu0 0
      %777 = vmatprep.subr.bf16.mxu0 0
      %778 = vmatpush1.bf16.msra.mxu0 0
      %779 = vmatprep.subr.bf16.mxu0 0
      %780 = vmatpush1.bf16.msra.mxu0 0
      %781 = vmatprep.subr.bf16.mxu0 0
      %782 = vmatpush1.bf16.msra.mxu0 0
      %783 = vmatprep.subr.bf16.mxu0 0
      %784 = vmatpush1.bf16.msra.mxu0 0
      %785 = vmatprep.subr.bf16.mxu0 0
      %786 = vmatpush1.bf16.msra.mxu0 0
      %787 = vmatprep.subr.bf16.mxu0 0
      %788 = vmatpush1.bf16.msra.mxu0 0
      %789 = vmatprep.subr.bf16.mxu0 0
      %790 = vmatpush1.bf16.msra.mxu0 0
      %791 = vmatprep.mubr.bf16.mxu0 0
      %792 = vmatmul.mubr.bf16.gmra.mrb[0].mxu0 %v364
      %v793 = vpop.f32.mrb[0].mxu0
      %v794 = vadd.f32 0.0, %v793
      %v795 = vpop.f32.mrb[0].mxu0
      %v796 = vpop.f32.mrb[0].mxu0
      %v797 = vpop.f32.mrb[0].mxu0
      %798 = vdwg.mxu0
      %v799 = vadd.f32 %v693, %v794
      %s800 = scalar_lea.vmem %s3, 256
      %v801 = vld [vmem:[%s800] sm:$0xf]
      %v802 = vld [vmem:[%s800 + $0x4] sm:$0xf]
      %v803 = vld [vmem:[%s800 + $0x8] sm:$0xf]
      %v804 = vld [vmem:[%s800 + $0xc] sm:$0xf]
      %v805 = vld [vmem:[%s800 + $0x10] sm:$0xf]
      %v806 = vld [vmem:[%s800 + $0x14] sm:$0xf]
      %v807 = vld [vmem:[%s800 + $0x18] sm:$0xf]
      %v808 = vld [vmem:[%s800 + $0x1c] sm:$0xf]
      %v809 = vld [vmem:[%s800 + $0x20] sm:$0xf]
      %v810 = vld [vmem:[%s800 + $0x24] sm:$0xf]
      %v811 = vld [vmem:[%s800 + $0x28] sm:$0xf]
      %v812 = vld [vmem:[%s800 + $0x2c] sm:$0xf]
      %v813 = vld [vmem:[%s800 + $0x30] sm:$0xf]
      %v814 = vld [vmem:[%s800 + $0x34] sm:$0xf]
      %v815 = vld [vmem:[%s800 + $0x38] sm:$0xf]
      %v816 = vld [vmem:[%s800 + $0x3c] sm:$0xf]
      %v818 = vunpack.c.l.b16 %v364
      %v819 = vpack.c.b16 %v818, %v818
      %v821 = vshrl.u32 %v819, 16
      %v823 = vshll.u32 %v819, 16
      %v825 = vrot.slane %v823, 1
      %v826 = vor.u32 %v821, %v825
      %v844 = vunpack.c.l.b16 %v801
      %v845 = vunpack.c.l.b16 %v802
      %v846 = vunpack.c.l.b16 %v803
      %v847 = vunpack.c.l.b16 %v804
      %v848 = vunpack.c.l.b16 %v805
      %v849 = vunpack.c.l.b16 %v806
      %v850 = vunpack.c.l.b16 %v807
      %v851 = vunpack.c.l.b16 %v808
      %v852 = vunpack.c.l.b16 %v809
      %v853 = vunpack.c.l.b16 %v810
      %v854 = vunpack.c.l.b16 %v811
      %v855 = vunpack.c.l.b16 %v812
      %v856 = vunpack.c.l.b16 %v813
      %v857 = vunpack.c.l.b16 %v814
      %v858 = vunpack.c.l.b16 %v815
      %v859 = vunpack.c.l.b16 %v816
      %v860 = vpack.c.b16 %v845, %v844
      %v861 = vpack.c.b16 %v847, %v846
      %v862 = vpack.c.b16 %v849, %v848
      %v863 = vpack.c.b16 %v851, %v850
      %v864 = vpack.c.b16 %v853, %v852
      %v865 = vpack.c.b16 %v855, %v854
      %v866 = vpack.c.b16 %v857, %v856
      %v867 = vpack.c.b16 %v859, %v858
      %876 = vmatprep.subr.bf16.mxu0 0
      %877 = vmatpush1.bf16.msra.mxu0 %v860
      %878 = vmatprep.subr.bf16.mxu0 0
      %879 = vmatpush1.bf16.msra.mxu0 %v861
      %880 = vmatprep.subr.bf16.mxu0 0
      %881 = vmatpush1.bf16.msra.mxu0 %v862
      %882 = vmatprep.subr.bf16.mxu0 0
      %883 = vmatpush1.bf16.msra.mxu0 %v863
      %884 = vmatprep.subr.bf16.mxu0 0
      %885 = vmatpush1.bf16.msra.mxu0 %v864
      %886 = vmatprep.subr.bf16.mxu0 0
      %887 = vmatpush1.bf16.msra.mxu0 %v865
      %888 = vmatprep.subr.bf16.mxu0 0
      %889 = vmatpush1.bf16.msra.mxu0 %v866
      %890 = vmatprep.subr.bf16.mxu0 0
      %891 = vmatpush1.bf16.msra.mxu0 %v867
      %892 = vmatprep.subr.bf16.mxu0 0
      %893 = vmatpush1.bf16.msra.mxu0 0
      %894 = vmatprep.subr.bf16.mxu0 0
      %895 = vmatpush1.bf16.msra.mxu0 0
      %896 = vmatprep.subr.bf16.mxu0 0
      %897 = vmatpush1.bf16.msra.mxu0 0
      %898 = vmatprep.subr.bf16.mxu0 0
      %899 = vmatpush1.bf16.msra.mxu0 0
      %900 = vmatprep.subr.bf16.mxu0 0
      %901 = vmatpush1.bf16.msra.mxu0 0
      %902 = vmatprep.subr.bf16.mxu0 0
      %903 = vmatpush1.bf16.msra.mxu0 0
      %904 = vmatprep.subr.bf16.mxu0 0
      %905 = vmatpush1.bf16.msra.mxu0 0
      %906 = vmatprep.subr.bf16.mxu0 0
      %907 = vmatpush1.bf16.msra.mxu0 0
      %908 = vmatprep.mubr.bf16.mxu0 0
      %909 = vmatmul.mubr.bf16.gmra.mrb[0].mxu0 %v826
      %v910 = vpop.f32.mrb[0].mxu0
      %v911 = vadd.f32 0.0, %v910
      %v912 = vpop.f32.mrb[0].mxu0
      %v913 = vpop.f32.mrb[0].mxu0
      %v914 = vpop.f32.mrb[0].mxu0
      %915 = vdwg.mxu0
      %v916 = vadd.f32 %v799, %v911
      %s917 = scalar_lea.vmem %s3, 320
      %v918 = vld [vmem:[%s917] sm:$0xf]
      %v919 = vld [vmem:[%s917 + $0x4] sm:$0xf]
      %v920 = vld [vmem:[%s917 + $0x8] sm:$0xf]
      %v921 = vld [vmem:[%s917 + $0xc] sm:$0xf]
      %v922 = vld [vmem:[%s917 + $0x10] sm:$0xf]
      %v923 = vld [vmem:[%s917 + $0x14] sm:$0xf]
      %v924 = vld [vmem:[%s917 + $0x18] sm:$0xf]
      %v925 = vld [vmem:[%s917 + $0x1c] sm:$0xf]
      %v926 = vld [vmem:[%s917 + $0x20] sm:$0xf]
      %v927 = vld [vmem:[%s917 + $0x24] sm:$0xf]
      %v928 = vld [vmem:[%s917 + $0x28] sm:$0xf]
      %v929 = vld [vmem:[%s917 + $0x2c] sm:$0xf]
      %v930 = vld [vmem:[%s917 + $0x30] sm:$0xf]
      %v931 = vld [vmem:[%s917 + $0x34] sm:$0xf]
      %v932 = vld [vmem:[%s917 + $0x38] sm:$0xf]
      %v933 = vld [vmem:[%s917 + $0x3c] sm:$0xf]
      %v934 = vrot.slane %v819, 1
      %v952 = vunpack.c.l.b16 %v918
      %v953 = vunpack.c.l.b16 %v919
      %v954 = vunpack.c.l.b16 %v920
      %v955 = vunpack.c.l.b16 %v921
      %v956 = vunpack.c.l.b16 %v922
      %v957 = vunpack.c.l.b16 %v923
      %v958 = vunpack.c.l.b16 %v924
      %v959 = vunpack.c.l.b16 %v925
      %v960 = vunpack.c.l.b16 %v926
      %v961 = vunpack.c.l.b16 %v927
      %v962 = vunpack.c.l.b16 %v928
      %v963 = vunpack.c.l.b16 %v929
      %v964 = vunpack.c.l.b16 %v930
      %v965 = vunpack.c.l.b16 %v931
      %v966 = vunpack.c.l.b16 %v932
      %v967 = vunpack.c.l.b16 %v933
      %v968 = vpack.c.b16 %v953, %v952
      %v969 = vpack.c.b16 %v955, %v954
      %v970 = vpack.c.b16 %v957, %v956
      %v971 = vpack.c.b16 %v959, %v958
      %v972 = vpack.c.b16 %v961, %v960
      %v973 = vpack.c.b16 %v963, %v962
      %v974 = vpack.c.b16 %v965, %v964
      %v975 = vpack.c.b16 %v967, %v966
      %984 = vmatprep.subr.bf16.mxu0 0
      %985 = vmatpush1.bf16.msra.mxu0 %v968
      %986 = vmatprep.subr.bf16.mxu0 0
      %987 = vmatpush1.bf16.msra.mxu0 %v969
      %988 = vmatprep.subr.bf16.mxu0 0
      %989 = vmatpush1.bf16.msra.mxu0 %v970
      %990 = vmatprep.subr.bf16.mxu0 0
      %991 = vmatpush1.bf16.msra.mxu0 %v971
      %992 = vmatprep.subr.bf16.mxu0 0
      %993 = vmatpush1.bf16.msra.mxu0 %v972
      %994 = vmatprep.subr.bf16.mxu0 0
      %995 = vmatpush1.bf16.msra.mxu0 %v973
      %996 = vmatprep.subr.bf16.mxu0 0
      %997 = vmatpush1.bf16.msra.mxu0 %v974
      %998 = vmatprep.subr.bf16.mxu0 0
      %999 = vmatpush1.bf16.msra.mxu0 %v975
      %1000 = vmatprep.subr.bf16.mxu0 0
      %1001 = vmatpush1.bf16.msra.mxu0 0
      %1002 = vmatprep.subr.bf16.mxu0 0
      %1003 = vmatpush1.bf16.msra.mxu0 0
      %1004 = vmatprep.subr.bf16.mxu0 0
      %1005 = vmatpush1.bf16.msra.mxu0 0
      %1006 = vmatprep.subr.bf16.mxu0 0
      %1007 = vmatpush1.bf16.msra.mxu0 0
      %1008 = vmatprep.subr.bf16.mxu0 0
      %1009 = vmatpush1.bf16.msra.mxu0 0
      %1010 = vmatprep.subr.bf16.mxu0 0
      %1011 = vmatpush1.bf16.msra.mxu0 0
      %1012 = vmatprep.subr.bf16.mxu0 0
      %1013 = vmatpush1.bf16.msra.mxu0 0
      %1014 = vmatprep.subr.bf16.mxu0 0
      %1015 = vmatpush1.bf16.msra.mxu0 0
      %1016 = vmatprep.mubr.bf16.mxu0 0
      %1017 = vmatmul.mubr.bf16.gmra.mrb[0].mxu0 %v934
      %v1018 = vpop.f32.mrb[0].mxu0
      %v1019 = vadd.f32 0.0, %v1018
      %v1020 = vpop.f32.mrb[0].mxu0
      %v1021 = vpop.f32.mrb[0].mxu0
      %v1022 = vpop.f32.mrb[0].mxu0
      %1023 = vdwg.mxu0
      %v1024 = vadd.f32 %v916, %v1019
      %s1025 = scalar_lea.vmem %s3, 384
      %v1026 = vld [vmem:[%s1025] sm:$0xf]
      %v1027 = vld [vmem:[%s1025 + $0x4] sm:$0xf]
      %v1028 = vld [vmem:[%s1025 + $0x8] sm:$0xf]
      %v1029 = vld [vmem:[%s1025 + $0xc] sm:$0xf]
      %v1030 = vld [vmem:[%s1025 + $0x10] sm:$0xf]
      %v1031 = vld [vmem:[%s1025 + $0x14] sm:$0xf]
      %v1032 = vld [vmem:[%s1025 + $0x18] sm:$0xf]
      %v1033 = vld [vmem:[%s1025 + $0x1c] sm:$0xf]
      %v1034 = vld [vmem:[%s1025 + $0x20] sm:$0xf]
      %v1035 = vld [vmem:[%s1025 + $0x24] sm:$0xf]
      %v1036 = vld [vmem:[%s1025 + $0x28] sm:$0xf]
      %v1037 = vld [vmem:[%s1025 + $0x2c] sm:$0xf]
      %v1038 = vld [vmem:[%s1025 + $0x30] sm:$0xf]
      %v1039 = vld [vmem:[%s1025 + $0x34] sm:$0xf]
      %v1040 = vld [vmem:[%s1025 + $0x38] sm:$0xf]
      %v1041 = vld [vmem:[%s1025 + $0x3c] sm:$0xf]
      %v1058 = vunpack.c.l.b16 %v1026
      %v1059 = vunpack.c.l.b16 %v1027
      %v1060 = vunpack.c.l.b16 %v1028
      %v1061 = vunpack.c.l.b16 %v1029
      %v1062 = vunpack.c.l.b16 %v1030
      %v1063 = vunpack.c.l.b16 %v1031
      %v1064 = vunpack.c.l.b16 %v1032
      %v1065 = vunpack.c.l.b16 %v1033
      %v1066 = vunpack.c.l.b16 %v1034
      %v1067 = vunpack.c.l.b16 %v1035
      %v1068 = vunpack.c.l.b16 %v1036
      %v1069 = vunpack.c.l.b16 %v1037
      %v1070 = vunpack.c.l.b16 %v1038
      %v1071 = vunpack.c.l.b16 %v1039
      %v1072 = vunpack.c.l.b16 %v1040
      %v1073 = vunpack.c.l.b16 %v1041
      %v1074 = vpack.c.b16 %v1059, %v1058
      %v1075 = vpack.c.b16 %v1061, %v1060
      %v1076 = vpack.c.b16 %v1063, %v1062
      %v1077 = vpack.c.b16 %v1065, %v1064
      %v1078 = vpack.c.b16 %v1067, %v1066
      %v1079 = vpack.c.b16 %v1069, %v1068
      %v1080 = vpack.c.b16 %v1071, %v1070
      %v1081 = vpack.c.b16 %v1073, %v1072
      %1090 = vmatprep.subr.bf16.mxu0 0
      %1091 = vmatpush1.bf16.msra.mxu0 %v1074
      %1092 = vmatprep.subr.bf16.mxu0 0
      %1093 = vmatpush1.bf16.msra.mxu0 %v1075
      %1094 = vmatprep.subr.bf16.mxu0 0
      %1095 = vmatpush1.bf16.msra.mxu0 %v1076
      %1096 = vmatprep.subr.bf16.mxu0 0
      %1097 = vmatpush1.bf16.msra.mxu0 %v1077
      %1098 = vmatprep.subr.bf16.mxu0 0
      %1099 = vmatpush1.bf16.msra.mxu0 %v1078
      %1100 = vmatprep.subr.bf16.mxu0 0
      %1101 = vmatpush1.bf16.msra.mxu0 %v1079
      %1102 = vmatprep.subr.bf16.mxu0 0
      %1103 = vmatpush1.bf16.msra.mxu0 %v1080
      %1104 = vmatprep.subr.bf16.mxu0 0
      %1105 = vmatpush1.bf16.msra.mxu0 %v1081
      %1106 = vmatprep.subr.bf16.mxu0 0
      %1107 = vmatpush1.bf16.msra.mxu0 0
      %1108 = vmatprep.subr.bf16.mxu0 0
      %1109 = vmatpush1.bf16.msra.mxu0 0
      %1110 = vmatprep.subr.bf16.mxu0 0
      %1111 = vmatpush1.bf16.msra.mxu0 0
      %1112 = vmatprep.subr.bf16.mxu0 0
      %1113 = vmatpush1.bf16.msra.mxu0 0
      %1114 = vmatprep.subr.bf16.mxu0 0
      %1115 = vmatpush1.bf16.msra.mxu0 0
      %1116 = vmatprep.subr.bf16.mxu0 0
      %1117 = vmatpush1.bf16.msra.mxu0 0
      %1118 = vmatprep.subr.bf16.mxu0 0
      %1119 = vmatpush1.bf16.msra.mxu0 0
      %1120 = vmatprep.subr.bf16.mxu0 0
      %1121 = vmatpush1.bf16.msra.mxu0 0
      %1122 = vmatprep.mubr.bf16.mxu0 0
      %1123 = vmatmul.mubr.bf16.gmra.mrb[0].mxu0 %v365
      %v1124 = vpop.f32.mrb[0].mxu0
      %v1125 = vadd.f32 0.0, %v1124
      %v1126 = vpop.f32.mrb[0].mxu0
      %v1127 = vpop.f32.mrb[0].mxu0
      %v1128 = vpop.f32.mrb[0].mxu0
      %1129 = vdwg.mxu0
      %v1130 = vadd.f32 %v1024, %v1125
      %s1131 = scalar_lea.vmem %s3, 448
      %v1132 = vld [vmem:[%s1131] sm:$0xf]
      %v1133 = vld [vmem:[%s1131 + $0x4] sm:$0xf]
      %v1134 = vld [vmem:[%s1131 + $0x8] sm:$0xf]
      %v1135 = vld [vmem:[%s1131 + $0xc] sm:$0xf]
      %v1136 = vld [vmem:[%s1131 + $0x10] sm:$0xf]
      %v1137 = vld [vmem:[%s1131 + $0x14] sm:$0xf]
      %v1138 = vld [vmem:[%s1131 + $0x18] sm:$0xf]
      %v1139 = vld [vmem:[%s1131 + $0x1c] sm:$0xf]
      %v1140 = vld [vmem:[%s1131 + $0x20] sm:$0xf]
      %v1141 = vld [vmem:[%s1131 + $0x24] sm:$0xf]
      %v1142 = vld [vmem:[%s1131 + $0x28] sm:$0xf]
      %v1143 = vld [vmem:[%s1131 + $0x2c] sm:$0xf]
      %v1144 = vld [vmem:[%s1131 + $0x30] sm:$0xf]
      %v1145 = vld [vmem:[%s1131 + $0x34] sm:$0xf]
      %v1146 = vld [vmem:[%s1131 + $0x38] sm:$0xf]
      %v1147 = vld [vmem:[%s1131 + $0x3c] sm:$0xf]
      %v1149 = vunpack.c.l.b16 %v365
      %v1150 = vpack.c.b16 %v1149, %v1149
      %v1152 = vshrl.u32 %v1150, 16
      %v1154 = vshll.u32 %v1150, 16
      %v1156 = vrot.slane %v1154, 1
      %v1157 = vor.u32 %v1152, %v1156
      %v1175 = vunpack.c.l.b16 %v1132
      %v1176 = vunpack.c.l.b16 %v1133
      %v1177 = vunpack.c.l.b16 %v1134
      %v1178 = vunpack.c.l.b16 %v1135
      %v1179 = vunpack.c.l.b16 %v1136
      %v1180 = vunpack.c.l.b16 %v1137
      %v1181 = vunpack.c.l.b16 %v1138
      %v1182 = vunpack.c.l.b16 %v1139
      %v1183 = vunpack.c.l.b16 %v1140
      %v1184 = vunpack.c.l.b16 %v1141
      %v1185 = vunpack.c.l.b16 %v1142
      %v1186 = vunpack.c.l.b16 %v1143
      %v1187 = vunpack.c.l.b16 %v1144
      %v1188 = vunpack.c.l.b16 %v1145
      %v1189 = vunpack.c.l.b16 %v1146
      %v1190 = vunpack.c.l.b16 %v1147
      %v1191 = vpack.c.b16 %v1176, %v1175
      %v1192 = vpack.c.b16 %v1178, %v1177
      %v1193 = vpack.c.b16 %v1180, %v1179
      %v1194 = vpack.c.b16 %v1182, %v1181
      %v1195 = vpack.c.b16 %v1184, %v1183
      %v1196 = vpack.c.b16 %v1186, %v1185
      %v1197 = vpack.c.b16 %v1188, %v1187
      %v1198 = vpack.c.b16 %v1190, %v1189
      %1207 = vmatprep.subr.bf16.mxu0 0
      %1208 = vmatpush1.bf16.msra.mxu0 %v1191
      %1209 = vmatprep.subr.bf16.mxu0 0
      %1210 = vmatpush1.bf16.msra.mxu0 %v1192
      %1211 = vmatprep.subr.bf16.mxu0 0
      %1212 = vmatpush1.bf16.msra.mxu0 %v1193
      %1213 = vmatprep.subr.bf16.mxu0 0
      %1214 = vmatpush1.bf16.msra.mxu0 %v1194
      %1215 = vmatprep.subr.bf16.mxu0 0
      %1216 = vmatpush1.bf16.msra.mxu0 %v1195
      %1217 = vmatprep.subr.bf16.mxu0 0
      %1218 = vmatpush1.bf16.msra.mxu0 %v1196
      %1219 = vmatprep.subr.bf16.mxu0 0
      %1220 = vmatpush1.bf16.msra.mxu0 %v1197
      %1221 = vmatprep.subr.bf16.mxu0 0
      %1222 = vmatpush1.bf16.msra.mxu0 %v1198
      %1223 = vmatprep.subr.bf16.mxu0 0
      %1224 = vmatpush1.bf16.msra.mxu0 0
      %1225 = vmatprep.subr.bf16.mxu0 0
      %1226 = vmatpush1.bf16.msra.mxu0 0
      %1227 = vmatprep.subr.bf16.mxu0 0
      %1228 = vmatpush1.bf16.msra.mxu0 0
      %1229 = vmatprep.subr.bf16.mxu0 0
      %1230 = vmatpush1.bf16.msra.mxu0 0
      %1231 = vmatprep.subr.bf16.mxu0 0
      %1232 = vmatpush1.bf16.msra.mxu0 0
      %1233 = vmatprep.subr.bf16.mxu0 0
      %1234 = vmatpush1.bf16.msra.mxu0 0
      %1235 = vmatprep.subr.bf16.mxu0 0
      %1236 = vmatpush1.bf16.msra.mxu0 0
      %1237 = vmatprep.subr.bf16.mxu0 0
      %1238 = vmatpush1.bf16.msra.mxu0 0
      %1239 = vmatprep.mubr.bf16.mxu0 0
      %1240 = vmatmul.mubr.bf16.gmra.mrb[0].mxu0 %v1157
      %v1241 = vpop.f32.mrb[0].mxu0
      %v1242 = vadd.f32 0.0, %v1241
      %v1243 = vpop.f32.mrb[0].mxu0
      %v1244 = vpop.f32.mrb[0].mxu0
      %v1245 = vpop.f32.mrb[0].mxu0
      %1246 = vdwg.mxu0
      %v1247 = vadd.f32 %v1130, %v1242
      %s1248 = scalar_lea.vmem %s3, 512
      %v1249 = vld [vmem:[%s1248] sm:$0xf]
      %v1250 = vld [vmem:[%s1248 + $0x4] sm:$0xf]
      %v1251 = vld [vmem:[%s1248 + $0x8] sm:$0xf]
      %v1252 = vld [vmem:[%s1248 + $0xc] sm:$0xf]
      %v1253 = vld [vmem:[%s1248 + $0x10] sm:$0xf]
      %v1254 = vld [vmem:[%s1248 + $0x14] sm:$0xf]
      %v1255 = vld [vmem:[%s1248 + $0x18] sm:$0xf]
      %v1256 = vld [vmem:[%s1248 + $0x1c] sm:$0xf]
      %v1257 = vld [vmem:[%s1248 + $0x20] sm:$0xf]
      %v1258 = vld [vmem:[%s1248 + $0x24] sm:$0xf]
      %v1259 = vld [vmem:[%s1248 + $0x28] sm:$0xf]
      %v1260 = vld [vmem:[%s1248 + $0x2c] sm:$0xf]
      %v1261 = vld [vmem:[%s1248 + $0x30] sm:$0xf]
      %v1262 = vld [vmem:[%s1248 + $0x34] sm:$0xf]
      %v1263 = vld [vmem:[%s1248 + $0x38] sm:$0xf]
      %v1264 = vld [vmem:[%s1248 + $0x3c] sm:$0xf]
      %v1265 = vrot.slane %v1150, 1
      %v1283 = vunpack.c.l.b16 %v1249
      %v1284 = vunpack.c.l.b16 %v1250
      %v1285 = vunpack.c.l.b16 %v1251
      %v1286 = vunpack.c.l.b16 %v1252
      %v1287 = vunpack.c.l.b16 %v1253
      %v1288 = vunpack.c.l.b16 %v1254
      %v1289 = vunpack.c.l.b16 %v1255
      %v1290 = vunpack.c.l.b16 %v1256
      %v1291 = vunpack.c.l.b16 %v1257
      %v1292 = vunpack.c.l.b16 %v1258
      %v1293 = vunpack.c.l.b16 %v1259
      %v1294 = vunpack.c.l.b16 %v1260
      %v1295 = vunpack.c.l.b16 %v1261
      %v1296 = vunpack.c.l.b16 %v1262
      %v1297 = vunpack.c.l.b16 %v1263
      %v1298 = vunpack.c.l.b16 %v1264
      %v1299 = vpack.c.b16 %v1284, %v1283
      %v1300 = vpack.c.b16 %v1286, %v1285
      %v1301 = vpack.c.b16 %v1288, %v1287
      %v1302 = vpack.c.b16 %v1290, %v1289
      %v1303 = vpack.c.b16 %v1292, %v1291
      %v1304 = vpack.c.b16 %v1294, %v1293
      %v1305 = vpack.c.b16 %v1296, %v1295
      %v1306 = vpack.c.b16 %v1298, %v1297
      %1315 = vmatprep.subr.bf16.mxu0 0
      %1316 = vmatpush1.bf16.msra.mxu0 %v1299
      %1317 = vmatprep.subr.bf16.mxu0 0
      %1318 = vmatpush1.bf16.msra.mxu0 %v1300
      %1319 = vmatprep.subr.bf16.mxu0 0
      %1320 = vmatpush1.bf16.msra.mxu0 %v1301
      %1321 = vmatprep.subr.bf16.mxu0 0
      %1322 = vmatpush1.bf16.msra.mxu0 %v1302
      %1323 = vmatprep.subr.bf16.mxu0 0
      %1324 = vmatpush1.bf16.msra.mxu0 %v1303
      %1325 = vmatprep.subr.bf16.mxu0 0
      %1326 = vmatpush1.bf16.msra.mxu0 %v1304
      %1327 = vmatprep.subr.bf16.mxu0 0
      %1328 = vmatpush1.bf16.msra.mxu0 %v1305
      %1329 = vmatprep.subr.bf16.mxu0 0
      %1330 = vmatpush1.bf16.msra.mxu0 %v1306
      %1331 = vmatprep.subr.bf16.mxu0 0
      %1332 = vmatpush1.bf16.msra.mxu0 0
      %1333 = vmatprep.subr.bf16.mxu0 0
      %1334 = vmatpush1.bf16.msra.mxu0 0
      %1335 = vmatprep.subr.bf16.mxu0 0
      %1336 = vmatpush1.bf16.msra.mxu0 0
      %1337 = vmatprep.subr.bf16.mxu0 0
      %1338 = vmatpush1.bf16.msra.mxu0 0
      %1339 = vmatprep.subr.bf16.mxu0 0
      %1340 = vmatpush1.bf16.msra.mxu0 0
      %1341 = vmatprep.subr.bf16.mxu0 0
      %1342 = vmatpush1.bf16.msra.mxu0 0
      %1343 = vmatprep.subr.bf16.mxu0 0
      %1344 = vmatpush1.bf16.msra.mxu0 0
      %1345 = vmatprep.subr.bf16.mxu0 0
      %1346 = vmatpush1.bf16.msra.mxu0 0
      %1347 = vmatprep.mubr.bf16.mxu0 0
      %1348 = vmatmul.mubr.bf16.gmra.mrb[0].mxu0 %v1265
      %v1349 = vpop.f32.mrb[0].mxu0
      %v1350 = vadd.f32 0.0, %v1349
      %v1351 = vpop.f32.mrb[0].mxu0
      %v1352 = vpop.f32.mrb[0].mxu0
      %v1353 = vpop.f32.mrb[0].mxu0
      %1354 = vdwg.mxu0
      %v1355 = vadd.f32 %v1247, %v1350
      %1356 = vst [vmem:[%s353] sm:$0xf] %v1355
      %v1357 = vld [vmem:[%s5] sm:$0x1]
      %vm1358 = vcmask 1043456
      %v1359 = vsel %vm1358, %v1355, 0.0
      %v1360 = vrot.slane %v1359, 4
      %v1361 = vadd.f32 %v1359, %v1360
      %v1362 = vrot.slane %v1361, 2
      %v1363 = vadd.f32 %v1361, %v1362
      %v1364 = vrot.slane %v1363, 1
      %v1365 = vadd.f32 %v1363, %v1364
      %v1366 = vadd.f32 %v1357, %v1365
      %1367 = vst [vmem:[%s5] sm:$0x1] %v1366
      %v1368 = vld [vmem:[%s6] sm:$0x1]
      %v1369 = vmul.f32 %v1355, %v1355
      %v1370 = vsel %vm1358, %v1369, 0.0
      %v1371 = vrot.slane %v1370, 4
      %v1372 = vadd.f32 %v1370, %v1371
      %v1373 = vrot.slane %v1372, 2
      %v1374 = vadd.f32 %v1372, %v1373
      %v1375 = vrot.slane %v1374, 1
      %v1376 = vadd.f32 %v1374, %v1375
      %v1377 = vadd.f32 %v1368, %v1376
      %1378 = vst [vmem:[%s6] sm:$0x1] %v1377
      %p1379 = scmp.lt.s32.totalorder %s22, 1
      %s1380 = scalar_select %p1379, %s22, 1
      %p1381 = scmp.lt.s32.totalorder %s23, 3
      %s1382 = scalar_select %p1381, %s23, 3
      %s1383 = smul.addr %s1380, 4
      %s1384 = sadd.s32 %s1382, %s1383
      %s1385 = smul.addr %s1384, 4
      %s1386 = scalar_lea.vmem %s4, %s1385
      // Predicated region
      $region41: #{downsample_forward.8} parent=35 // pred_check
        %p1387 = pneg %p159
      $region42: #{downsample_forward.8} parent=35 // pred_check_branch
        %1389 = sbr.rel (%p1387) target = $region44
      $region43: #{downsample_forward.8} parent=35 // pred_region
        _
      $region44: #{downsample_forward.8} parent=35 // pred_fallthru
        _
      // Predicated region
      $region45: #{downsample_forward.8} parent=35 // pred_check
        %p1390 = pneg %p180
      $region46: #{downsample_forward.8} parent=35 // pred_check_branch
        %1392 = sbr.rel (%p1390) target = $region48
      $region47: #{downsample_forward.8} parent=35 // pred_region
        _
      $region48: #{downsample_forward.8} parent=35 // pred_fallthru
        _
      // Predicated region
      $region49: #{downsample_forward.8} parent=35 // pred_check
        %p1393 = pneg %p201
      $region50: #{downsample_forward.8} parent=35 // pred_check_branch
        %1395 = sbr.rel (%p1393) target = $region52
      $region51: #{downsample_forward.8} parent=35 // pred_region
        _
      $region52: #{downsample_forward.8} parent=35 // pred_fallthru
        _
      // Predicated region
      $region53: #{downsample_forward.8} parent=35 // pred_check
        %p1396 = pneg %p180
      $region54: #{downsample_forward.8} parent=35 // pred_check_branch
        %1398 = sbr.rel (%p1396) target = $region56
      $region55: #{downsample_forward.8} parent=35 // pred_region
        _
      $region56: #{downsample_forward.8} parent=35 // pred_fallthru
        _
      // Predicated region
      $region57: #{downsample_forward.8} parent=35 // pred_check
        %p1399 = pneg %p201
      $region58: #{downsample_forward.8} parent=35 // pred_check_branch
        %1401 = sbr.rel (%p1399) target = $region60
      $region59: #{downsample_forward.8} parent=35 // pred_region
        _
      $region60: #{downsample_forward.8} parent=35 // pred_fallthru
        _
    $region36: #{downsample_forward.8} parent=5 // pred_fallthru
      _
    %p1402 = scmp.le.s32.totalorder 2, %s13
    // Predicated region
    $region61: #{downsample_forward.8} parent=5 // pred_check
      %p1403 = pneg %p1402
    $region62: #{downsample_forward.8} parent=5 // pred_check_branch
      %1405 = sbr.rel (%p1403) target = $region64
    $region63: #{downsample_forward.8} parent=5 // pred_region
      %s1406 = ssub.s32 %s13, 2
      // Predicated region
      $region65: #{downsample_forward.8} parent=63 // pred_check
        %p1407 = pneg %p165
      $region66: #{downsample_forward.8} parent=63 // pred_check_branch
        %1409 = sbr.rel (%p1407) target = $region68
      $region67: #{downsample_forward.8} parent=63 // pred_region
        %p1410 = scmp.lt.s32.totalorder %s24, 1
        %s1411 = scalar_select %p1410, %s24, 1
        %p1412 = scmp.lt.s32.totalorder %s25, 3
        %s1413 = scalar_select %p1412, %s25, 3
        %s1414 = smul.addr %s1411, 4
        %s1415 = sadd.s32 %s1413, %s1414
        %s1416 = smul.addr %s1415, 4
        %s1417 = scalar_lea.vmem %s4, %s1416
      $region68: #{downsample_forward.8} parent=63 // pred_fallthru
        _
    $region64: #{downsample_forward.8} parent=5 // pred_fallthru
      _
  $region6: #{downsample_forward.8} parent=0 // loop_footer
    %s17 = sadd.s32 1, %s13
  $region7: #{downsample_forward.8} parent=0 // loop_footer_branch
    %12 = sbr.rel target = $region3
  $region8: #{downsample_forward.8} parent=0 // loop_exit
    _

</llo_original>
